<compile_context>
chip_gen: v7x
topology: tpu7x:2x2x1
jax: 0.10.0
libtpu: 0.0.40
codegen_flags: <defaults>
</compile_context>

<pallas_src>
import functools

import jax
import jax.numpy as jnp
from jax.experimental import pallas as pl
from jax.experimental.pallas import tpu as pltpu

EPS = 1e-5
MATMUL_DTYPE = jnp.bfloat16          # MXU operand dtype; accumulation stays f32


# ----------------------------- Pallas kernels ------------------------------ #

def _conv1_bn2_relu_kernel(x_ref, s1_ref, b1_ref, w1_ref, s2_ref, b2_ref, o_ref):
    """relu(bn2( relu(bn1(x)) @ W1 )) for one (tm, Cin) x (Cin, tn) tile."""
    a = jnp.maximum(x_ref[...] * s1_ref[...] + b1_ref[...], 0.0)        # f32 VPU
    h = jnp.dot(a.astype(w1_ref.dtype), w1_ref[...],
                preferred_element_type=jnp.float32)                     # bf16 MXU, f32 acc
    h = jnp.maximum(h * s2_ref[...] + b2_ref[...], 0.0)                 # fused bn2 + relu
    o_ref[...] = h.astype(o_ref.dtype)


def _conv2_bn3_relu_kernel(x_ref, w2_ref, s3_ref, b3_ref, o_ref, *, th, wo, stride):
    """3x3/stride conv for one (th output rows, tn cout) block + bn3 + relu.

    stride == 1: x_ref is the zero-padded image (Hp, Wp, C).
    stride  > 1: x_ref is the phase-split padded image (s, s, Hq, Wq, C) where
                 x_ref[ph, pw, r, q, :] == padded[r*s + ph, q*s + pw, :], so
                 every tap is a contiguous slice (no strided loads).
    Grid is (N, cout_tiles, row_tiles); program_id(2) selects the output row
    tile, so the f32 accumulator is only (th*wo, tn) and stays in vregs.
    """
    s = stride
    c = x_ref.shape[-1]
    r0 = pl.program_id(2) * th               # first output row of this block

    def patch(ky, kx):
        if s == 1:
            return x_ref[pl.ds(r0 + ky, th), pl.ds(kx, wo), :]
        return x_ref[ky % s, kx % s, pl.ds(r0 + ky // s, th), pl.ds(kx // s, wo), :]

    # TODO(synk): when C is a multiple of 128, concatenate the 9 taps along K
    # and issue a single K=9*C matmul to fully fill the 256-deep MXU (v6e/v7x).
    acc = None
    for t in range(9):                        # static unroll over taps
        ky, kx = divmod(t, 3)
        p = patch(ky, kx).reshape(th * wo, c).astype(w2_ref.dtype)
        d = jnp.dot(p, w2_ref[t], preferred_element_type=jnp.float32)
        acc = d if acc is None else acc + d

    h = jnp.maximum(acc * s3_ref[...] + b3_ref[...], 0.0)               # fused bn3 + relu
    o_ref[...] = h.astype(o_ref.dtype)


def _conv3_proj_add_kernel(a_ref, w3_ref, id_ref, wsc_ref, o_ref):
    """out = a3 @ W3 + id @ Wsc (projection shortcut; id cast to bf16 in-kernel)."""
    main = jnp.dot(a_ref[...], w3_ref[...], preferred_element_type=jnp.float32)
    sc = jnp.dot(id_ref[...].astype(wsc_ref.dtype), wsc_ref[...],
                 preferred_element_type=jnp.float32)
    o_ref[...] = (main + sc).astype(o_ref.dtype)


def _conv3_ident_add_kernel(a_ref, w3_ref, id_ref, o_ref):
    """out = a3 @ W3 + id  (identity shortcut: direct f32 VPU add, no eye() matmul)."""
    main = jnp.dot(a_ref[...], w3_ref[...], preferred_element_type=jnp.float32)
    o_ref[...] = (main + id_ref[...].astype(jnp.float32)).astype(o_ref.dtype)


# ------------------------------ tiling helpers ------------------------------ #

@functools.lru_cache(maxsize=1)
def _vmem_limit_bytes():
    """Per-generation VMEM budget: generous on v5e/v6e (128 MiB physical),
    conservative (48 MiB) on v7x / unknown chips (v7x has 64 MiB per core)."""
    try:
        kind = jax.devices()[0].device_kind.lower()
    except Exception:
        kind = ""
    if "v5" in kind or "v6" in kind:
        return 96 * 1024 * 1024
    return 48 * 1024 * 1024


def _compiler_params(*sem):
    return pltpu.CompilerParams(dimension_semantics=sem,
                                vmem_limit_bytes=_vmem_limit_bytes())


def _row_tiling(m, cap=512):
    """Row tile for the flattened 1x1-conv stages.

    Picks the largest tile <= cap that evenly divides m (no pad copy, no dead
    MXU rows); falls back to padding only when no divisor exists.
    """
    if m <= cap:
        mp = -(-m // 8) * 8
        return mp, mp
    for step in (16, 8):
        for tm in range(cap - cap % step, step - 1, -step):
            if m % tm == 0:
                return tm, m
    return cap, -(-m // cap) * cap


def _col_tiling(c, prefer=(256, 128)):
    """Column tile for weights / outputs: 256/128 when divisible, else full."""
    for tc in prefer:
        if c % tc == 0:
            return tc
    return c


def _spatial_row_tiling(ho, wo, max_rows=256):
    """Largest divisor th of ho with th*wo <= max_rows (keeps the Stage B
    accumulator small and gives the grid many parallel blocks)."""
    th = 1
    for cand in range(1, ho + 1):
        if ho % cand == 0 and cand * wo <= max_rows:
            th = cand
    return th


def _pad_rows(x2d, mp):
    m = x2d.shape[0]
    return x2d if m == mp else jnp.pad(x2d, ((0, mp - m), (0, 0)))


# --------------------------- pallas_call wrappers --------------------------- #

def conv1_bn2_relu(x2d, s1, b1, w1, s2, b2, out_dtype):
    m, cin = x2d.shape
    cout = w1.shape[1]
    tm, mp = _row_tiling(m)
    tn = _col_tiling(cout)
    xp = _pad_rows(x2d, mp)
    out = pl.pallas_call(
        _conv1_bn2_relu_kernel,
        out_shape=jax.ShapeDtypeStruct((mp, cout), out_dtype),
        grid=(mp // tm, cout // tn),
        in_specs=[
            pl.BlockSpec((tm, cin), lambda i, j: (i, 0)),
            pl.BlockSpec((1, cin), lambda i, j: (0, 0)),
            pl.BlockSpec((1, cin), lambda i, j: (0, 0)),
            pl.BlockSpec((cin, tn), lambda i, j: (0, j)),
            pl.BlockSpec((1, tn), lambda i, j: (0, j)),
            pl.BlockSpec((1, tn), lambda i, j: (0, j)),
        ],
        out_specs=pl.BlockSpec((tm, tn), lambda i, j: (i, j)),
        compiler_params=_compiler_params("parallel", "parallel"),
    )(xp, s1, b1, w1, s2, b2)
    return out[:m] if mp != m else out


def conv2_bn3_relu(a2_nhwc, w2_taps, s3, b3, stride, out_dtype):
    n, h, w, c = a2_nhwc.shape
    cout = w2_taps.shape[-1]
    s = stride
    ho = (h - 1) // s + 1
    wo = (w - 1) // s + 1

    if s == 1:
        hp, wp = h + 2, w + 2
        xin = jnp.pad(a2_nhwc, ((0, 0), (1, 1), (1, 1), (0, 0)))
        in_spec_x = pl.BlockSpec((None, hp, wp, c), lambda b, j, i: (b, 0, 0, 0))
    else:
        # Phase split (position, phase) of the padded image so every tap is a
        # contiguous slice.  The pad is needed for the halo anyway; the
        # transpose is one extra pass over (now bf16) a2, stride>1 blocks only.
        # TODO(synk): write a2 directly in this layout from Stage A's out_specs.
        hq, wq = ho + 1, wo + 1
        hp, wp = s * hq, s * wq
        xpad = jnp.pad(a2_nhwc, ((0, 0), (1, hp - 1 - h), (1, wp - 1 - w), (0, 0)))
        xin = xpad.reshape(n, hq, s, wq, s, c).transpose(0, 2, 4, 1, 3, 5)
        # xin[b, ph, pw, r, q, :] == xpad[b, r*s + ph, q*s + pw, :]
        in_spec_x = pl.BlockSpec((None, s, s, hq, wq, c),
                                 lambda b, j, i: (b, 0, 0, 0, 0, 0))

    th = _spatial_row_tiling(ho, wo)
    tn = _col_tiling(cout, prefer=(128, 256))   # 128 keeps the f32 acc in vregs
    kern = functools.partial(_conv2_bn3_relu_kernel, th=th, wo=wo, stride=s)
    # Grid order (image, cout tile, row tile): the image block index map is
    # constant over (j, i) and the weight block over i, so their DMAs are only
    # issued once per image / once per cout tile.
    out = pl.pallas_call(
        kern,
        out_shape=jax.ShapeDtypeStruct((n, ho * wo, cout), out_dtype),
        grid=(n, cout // tn, ho // th),
        in_specs=[
            in_spec_x,
            pl.BlockSpec((9, c, tn), lambda b, j, i: (0, 0, j)),
            pl.BlockSpec((1, tn), lambda b, j, i: (0, j)),
            pl.BlockSpec((1, tn), lambda b, j, i: (0, j)),
        ],
        out_specs=pl.BlockSpec((None, th * wo, tn), lambda b, j, i: (b, i, j)),
        compiler_params=_compiler_params("parallel", "parallel", "parallel"),
    )(xin, w2_taps, s3, b3)
    return out.reshape(n * ho * wo, cout), ho, wo


def conv3_add_shortcut(a3_2d, w3, id2d, wsc):
    m, cmid = a3_2d.shape
    cout = w3.shape[1]
    tm, mp = _row_tiling(m)
    tn = _col_tiling(cout)
    a3p = _pad_rows(a3_2d, mp)
    idp = _pad_rows(id2d, mp)
    grid = (mp // tm, cout // tn)
    if wsc is not None:
        cin = id2d.shape[1]
        out = pl.pallas_call(
            _conv3_proj_add_kernel,
            out_shape=jax.ShapeDtypeStruct((mp, cout), jnp.float32),
            grid=grid,
            in_specs=[
                pl.BlockSpec((tm, cmid), lambda i, j: (i, 0)),
                pl.BlockSpec((cmid, tn), lambda i, j: (0, j)),
                pl.BlockSpec((tm, cin), lambda i, j: (i, 0)),
                pl.BlockSpec((cin, tn), lambda i, j: (0, j)),
            ],
            out_specs=pl.BlockSpec((tm, tn), lambda i, j: (i, j)),
            compiler_params=_compiler_params("parallel", "parallel"),
        )(a3p, w3, idp, wsc)
    else:
        out = pl.pallas_call(
            _conv3_ident_add_kernel,
            out_shape=jax.ShapeDtypeStruct((mp, cout), jnp.float32),
            grid=grid,
            in_specs=[
                pl.BlockSpec((tm, cmid), lambda i, j: (i, 0)),
                pl.BlockSpec((cmid, tn), lambda i, j: (0, j)),
                pl.BlockSpec((tm, tn), lambda i, j: (i, j)),
            ],
            out_specs=pl.BlockSpec((tm, tn), lambda i, j: (i, j)),
            compiler_params=_compiler_params("parallel", "parallel"),
        )(a3p, w3, idp)
    return out[:m] if mp != m else out


# ------------------------------- forward pass ------------------------------- #

def _bn_affine(p):
    s = p["gamma"] / jnp.sqrt(p["var"] + EPS)
    b = p["beta"] - p["mean"] * s
    return s.reshape(1, -1).astype(jnp.float32), b.reshape(1, -1).astype(jnp.float32)


@functools.partial(jax.jit, static_argnums=(2,))
def preact_bottleneck_forward(x_nchw, params, stride):
    # TODO(synk): for stacks of blocks keep activations NHWC end-to-end and only
    # transpose NCHW<->NHWC at the network boundary.
    x = jnp.transpose(x_nchw, (0, 2, 3, 1)).astype(jnp.float32)        # NHWC
    n, h, w, cin = x.shape
    cmid = params["w1"].shape[0]
    cexp = params["w3"].shape[0]

    s1, b1 = _bn_affine(params["bn1"])
    s2, b2 = _bn_affine(params["bn2"])
    s3, b3 = _bn_affine(params["bn3"])

    w1 = params["w1"][:, :, 0, 0].T.astype(MATMUL_DTYPE)               # (Cin, Cmid)
    w2 = jnp.transpose(params["w2"], (2, 3, 1, 0)).reshape(9, cmid, cmid)
    w2 = w2.astype(MATMUL_DTYPE)                                       # (tap, Cmid, Cmid)
    w3 = params["w3"][:, :, 0, 0].T.astype(MATMUL_DTYPE)               # (Cmid, Cexp)

    # Stage A: conv1 (1x1) with bn1 pre-activation and bn2+relu fused epilogue.
    # a2 (largest intermediate) stored as bf16 to halve its HBM traffic.
    a2 = conv1_bn2_relu(x.reshape(n * h * w, cin), s1, b1, w1, s2, b2, MATMUL_DTYPE)
    a2 = a2.reshape(n, h, w, cmid)

    # Stage B: 3x3 stride-s conv in kernel (no HBM im2col), bn3+relu fused.
    a3, ho, wo = conv2_bn3_relu(a2, w2, s3, b3, stride, MATMUL_DTYPE)

    # Stage C: conv3 (1x1) + shortcut + residual add in one kernel.
    if stride != 1 or cin != cexp:
        wsc = params["wsc"][:, :, 0, 0].T.astype(MATMUL_DTYPE)         # (Cin, Cexp)
        idn = x[:, ::stride, ::stride, :].reshape(n * ho * wo, cin)    # f32; cast in-kernel
        out = conv3_add_shortcut(a3, w3, idn, wsc)
    else:
        idn = x.reshape(n * h * w, cin)                                # exact f32 residual
        out = conv3_add_shortcut(a3, w3, idn, None)

    out = out.reshape(n, ho, wo, cexp)
    return jnp.transpose(out, (0, 3, 1, 2))                            # back to NCHW


# ------------------------------ pure-JAX reference -------------------------- #

def _ref_forward(x_nchw, params, stride):
    def bn(x, p):
        s = p["gamma"] / jnp.sqrt(p["var"] + EPS)
        b = p["beta"] - p["mean"] * s
        return x * s[None, :, None, None] + b[None, :, None, None]

    def conv(x, w, st, pad):
        return jax.lax.conv_general_dilated(
            x, w, (st, st), pad, dimension_numbers=("NCHW", "OIHW", "NCHW"))

    relu = lambda t: jnp.maximum(t, 0.0)
    x = x_nchw
    out = conv(relu(bn(x, params["bn1"])), params["w1"], 1, "VALID")
    out = conv(relu(bn(out, params["bn2"])), params["w2"], stride, [(1, 1), (1, 1)])
    out = conv(relu(bn(out, params["bn3"])), params["w3"], 1, "VALID")
    cexp = params["w3"].shape[0]
    if stride != 1 or x.shape[1] != cexp:
        sc = conv(x, params["wsc"], stride, "VALID")
    else:
        sc = x
    return out + sc


# ------------------------------------ main ----------------------------------- #

def _make_params(key, cin, cmid, stride):
    cexp = 4 * cmid
    ks = jax.random.split(key, 7)

    def bn_params(k, c):
        k1, k2, k3, k4 = jax.random.split(k, 4)
        return dict(gamma=1.0 + 0.1 * jax.random.normal(k1, (c,), jnp.float32),
                    beta=0.1 * jax.random.normal(k2, (c,), jnp.float32),
                    mean=0.1 * jax.random.normal(k3, (c,), jnp.float32),
                    var=0.5 + jax.random.uniform(k4, (c,), jnp.float32))

    params = dict(
        bn1=bn_params(ks[0], cin),
        bn2=bn_params(ks[1], cmid),
        bn3=bn_params(ks[2], cmid),
        w1=0.2 * jax.random.normal(ks[3], (cmid, cin, 1, 1), jnp.float32),
        w2=0.2 * jax.random.normal(ks[4], (cmid, cmid, 3, 3), jnp.float32),
        w3=0.2 * jax.random.normal(ks[5], (cexp, cmid, 1, 1), jnp.float32),
    )
    if stride != 1 or cin != cexp:
        params["wsc"] = 0.2 * jax.random.normal(ks[6], (cexp, cin, 1, 1), jnp.float32)
    return params


if __name__ == "__main__":
    root = jax.random.PRNGKey(0)
    configs = [
        # (N, Cin, H, W, Cmid, stride)
        (2, 4, 16, 16, 4, 2),    # projection shortcut (stride 2, Cin != 4*Cmid)
        (2, 16, 16, 16, 4, 1),   # identity shortcut  (stride 1, Cin == 4*Cmid)
    ]
    for idx, (n_, cin_, h_, w_, cmid_, stride_) in enumerate(configs):
        kx, kp = jax.random.split(jax.random.fold_in(root, idx))
        x = jax.random.normal(kx, (n_, cin_, h_, w_), jnp.float32)
        params = _make_params(kp, cin_, cmid_, stride_)

        out = jax.block_until_ready(preact_bottleneck_forward(x, params, stride_))
        ref = _ref_forward(x, params, stride_)

        cexp_ = 4 * cmid_
        ho_ = (h_ - 1) // stride_ + 1
        wo_ = (w_ - 1) // stride_ + 1
        assert out.shape == (n_, cexp_, ho_, wo_), out.shape
        err = float(jnp.max(jnp.abs(out - ref)))
        assert err < 5e-2, f"config {idx}: max abs err {err}"

    print("KERNEL_OK")
</pallas_src>

<mosaic_0001>
module attributes {stable_mosaic.version = 11 : i64} {
  func.func @_conv1_bn2_relu_kernel(%arg0: i32, %arg1: i32, %arg2: memref<512x4xf32, #tpu.memory_space<vmem>>, %arg3: memref<1x4xf32, #tpu.memory_space<vmem>>, %arg4: memref<1x4xf32, #tpu.memory_space<vmem>>, %arg5: memref<4x4xbf16, #tpu.memory_space<vmem>>, %arg6: memref<1x4xf32, #tpu.memory_space<vmem>>, %arg7: memref<1x4xf32, #tpu.memory_space<vmem>>, %arg8: memref<512x4xbf16, #tpu.memory_space<vmem>>) attributes {dimension_semantics = [#tpu.dimension_semantics<parallel>, #tpu.dimension_semantics<parallel>], iteration_bounds = array<i64: 1, 1>, scalar_prefetch = 0 : i64, scratch_operands = 0 : i64, tpu.core_type = #tpu.core_type<tc>, window_params = [{transform_indices = @transform_0, window_bounds = array<i64: 512, 4>}, {pipeline_mode = #tpu.pipeline_mode<synchronous>, transform_indices = @transform_1, window_bounds = array<i64: 1, 4>}, {pipeline_mode = #tpu.pipeline_mode<synchronous>, transform_indices = @transform_2, window_bounds = array<i64: 1, 4>}, {transform_indices = @transform_3, window_bounds = array<i64: 4, 4>}, {transform_indices = @transform_4, window_bounds = array<i64: 1, 4>}, {transform_indices = @transform_5, window_bounds = array<i64: 1, 4>}, {transform_indices = @transform_6, window_bounds = array<i64: 512, 4>}]} {
    %c0 = arith.constant 0 : index
    %c0_0 = arith.constant 0 : index
    %0 = vector.load %arg2[%c0, %c0_0] : memref<512x4xf32, #tpu.memory_space<vmem>>, vector<512x4xf32>
    %c0_1 = arith.constant 0 : index
    %c0_2 = arith.constant 0 : index
    %1 = vector.load %arg3[%c0_1, %c0_2] : memref<1x4xf32, #tpu.memory_space<vmem>>, vector<1x4xf32>
    %2 = vector.broadcast %1 : vector<1x4xf32> to vector<512x4xf32>
    %3 = arith.mulf %0, %2 : vector<512x4xf32>
    %c0_3 = arith.constant 0 : index
    %c0_4 = arith.constant 0 : index
    %4 = vector.load %arg4[%c0_3, %c0_4] : memref<1x4xf32, #tpu.memory_space<vmem>>, vector<1x4xf32>
    %5 = vector.broadcast %4 : vector<1x4xf32> to vector<512x4xf32>
    %6 = arith.addf %3, %5 : vector<512x4xf32>
    %cst = arith.constant 0.000000e+00 : f32
    %7 = vector.broadcast %cst : f32 to vector<512x4xf32>
    %8 = arith.maximumf %6, %7 : vector<512x4xf32>
    %9 = arith.truncf %8 : vector<512x4xf32> to vector<512x4xbf16>
    %c0_5 = arith.constant 0 : index
    %c0_6 = arith.constant 0 : index
    %10 = vector.load %arg5[%c0_5, %c0_6] : memref<4x4xbf16, #tpu.memory_space<vmem>>, vector<4x4xbf16>
    %cst_7 = arith.constant dense<0.000000e+00> : vector<512x4xf32>
    %11 = tpu.matmul %9, %10, %cst_7 {dimension_numbers = #tpu.dot_dimension_numbers<[1], [0], [0], [1], [0, 0, 1, 1], [], []>} : vector<512x4xbf16>, vector<4x4xbf16>, vector<512x4xf32> -> vector<512x4xf32>
    %c0_8 = arith.constant 0 : index
    %c0_9 = arith.constant 0 : index
    %12 = vector.load %arg6[%c0_8, %c0_9] : memref<1x4xf32, #tpu.memory_space<vmem>>, vector<1x4xf32>
    %13 = vector.broadcast %12 : vector<1x4xf32> to vector<512x4xf32>
    %14 = arith.mulf %11, %13 : vector<512x4xf32>
    %c0_10 = arith.constant 0 : index
    %c0_11 = arith.constant 0 : index
    %15 = vector.load %arg7[%c0_10, %c0_11] : memref<1x4xf32, #tpu.memory_space<vmem>>, vector<1x4xf32>
    %16 = vector.broadcast %15 : vector<1x4xf32> to vector<512x4xf32>
    %17 = arith.addf %14, %16 : vector<512x4xf32>
    %cst_12 = arith.constant 0.000000e+00 : f32
    %18 = vector.broadcast %cst_12 : f32 to vector<512x4xf32>
    %19 = arith.maximumf %17, %18 : vector<512x4xf32>
    %20 = arith.truncf %19 : vector<512x4xf32> to vector<512x4xbf16>
    %c0_13 = arith.constant 0 : index
    %c0_14 = arith.constant 0 : index
    %21 = vector.load %arg8[%c0_13, %c0_14] : memref<512x4xbf16, #tpu.memory_space<vmem>>, vector<512x4xbf16>
    tpu.vector_store %arg8[%c0_13, %c0_14], %20 {strides = array<i32>} : memref<512x4xbf16, #tpu.memory_space<vmem>>, vector<512x4xbf16>,
    return
  }
  func.func @transform_0(%arg0: i32, %arg1: i32) -> (i32, i32) {
    %c0_i32 = arith.constant 0 : i32
    %c0_i32_0 = arith.constant 0 : i32
    return %arg0, %c0_i32 : i32, i32
  }
  func.func @transform_1(%arg0: i32, %arg1: i32) -> (i32, i32) {
    %c0_i32 = arith.constant 0 : i32
    %c0_i32_0 = arith.constant 0 : i32
    %c0_i32_1 = arith.constant 0 : i32
    return %c0_i32, %c0_i32_0 : i32, i32
  }
  func.func @transform_2(%arg0: i32, %arg1: i32) -> (i32, i32) {
    %c0_i32 = arith.constant 0 : i32
    %c0_i32_0 = arith.constant 0 : i32
    %c0_i32_1 = arith.constant 0 : i32
    return %c0_i32, %c0_i32_0 : i32, i32
  }
  func.func @transform_3(%arg0: i32, %arg1: i32) -> (i32, i32) {
    %c0_i32 = arith.constant 0 : i32
    %c0_i32_0 = arith.constant 0 : i32
    return %c0_i32, %arg1 : i32, i32
  }
  func.func @transform_4(%arg0: i32, %arg1: i32) -> (i32, i32) {
    %c0_i32 = arith.constant 0 : i32
    %c0_i32_0 = arith.constant 0 : i32
    return %c0_i32, %arg1 : i32, i32
  }
  func.func @transform_5(%arg0: i32, %arg1: i32) -> (i32, i32) {
    %c0_i32 = arith.constant 0 : i32
    %c0_i32_0 = arith.constant 0 : i32
    return %c0_i32, %arg1 : i32, i32
  }
  func.func @transform_6(%arg0: i32, %arg1: i32) -> (i32, i32) {
    %c0_i32 = arith.constant 0 : i32
    return %arg0, %arg1 : i32, i32
  }
}

module attributes {stable_mosaic.version = 11 : i64} {
  func.func @_conv2_bn3_relu_kernel(%arg0: i32, %arg1: i32, %arg2: i32, %arg3: memref<1x2x2x9x9x4xbf16, #tpu.memory_space<vmem>>, %arg4: memref<9x4x4xbf16, #tpu.memory_space<vmem>>, %arg5: memref<1x4xf32, #tpu.memory_space<vmem>>, %arg6: memref<1x4xf32, #tpu.memory_space<vmem>>, %arg7: memref<1x64x4xbf16, #tpu.memory_space<vmem>>) attributes {dimension_semantics = [#tpu.dimension_semantics<parallel>, #tpu.dimension_semantics<parallel>, #tpu.dimension_semantics<parallel>], iteration_bounds = array<i64: 2, 1, 1>, scalar_prefetch = 0 : i64, scratch_operands = 0 : i64, tpu.core_type = #tpu.core_type<tc>, window_params = [{transform_indices = @transform_0, window_bounds = array<i64: 1, 2, 2, 9, 9, 4>}, {transform_indices = @transform_1, window_bounds = array<i64: 9, 4, 4>}, {transform_indices = @transform_2, window_bounds = array<i64: 1, 4>}, {transform_indices = @transform_3, window_bounds = array<i64: 1, 4>}, {transform_indices = @transform_4, window_bounds = array<i64: 1, 64, 4>}]} {
    %c8_i32 = arith.constant 8 : i32
    %0 = arith.muli %arg2, %c8_i32 : i32
    %c0_i32 = arith.constant 0 : i32
    %1 = arith.addi %0, %c0_i32 : i32
    %c0 = arith.constant 0 : index
    %c0_0 = arith.constant 0 : index
    %c0_1 = arith.constant 0 : index
    %2 = arith.index_cast %1 : i32 to index
    %c0_2 = arith.constant 0 : index
    %c0_3 = arith.constant 0 : index
    %3 = vector.load %arg3[%c0, %c0_0, %c0_1, %2, %c0_2, %c0_3] : memref<1x2x2x9x9x4xbf16, #tpu.memory_space<vmem>>, vector<1x1x1x8x8x4xbf16>
    %4 = vector.shape_cast %3 : vector<1x1x1x8x8x4xbf16> to vector<8x8x4xbf16>
    %5 = vector.shape_cast %4 : vector<8x8x4xbf16> to vector<64x4xbf16>
    %c0_4 = arith.constant 0 : index
    %c0_5 = arith.constant 0 : index
    %c0_6 = arith.constant 0 : index
    %6 = vector.load %arg4[%c0_4, %c0_5, %c0_6] : memref<9x4x4xbf16, #tpu.memory_space<vmem>>, vector<1x4x4xbf16>
    %7 = vector.shape_cast %6 : vector<1x4x4xbf16> to vector<4x4xbf16>
    %cst = arith.constant dense<0.000000e+00> : vector<64x4xf32>
    %8 = tpu.matmul %5, %7, %cst {dimension_numbers = #tpu.dot_dimension_numbers<[1], [0], [0], [1], [0, 0, 1, 1], [], []>} : vector<64x4xbf16>, vector<4x4xbf16>, vector<64x4xf32> -> vector<64x4xf32>
    %c0_i32_7 = arith.constant 0 : i32
    %9 = arith.addi %0, %c0_i32_7 : i32
    %c0_8 = arith.constant 0 : index
    %c0_9 = arith.constant 0 : index
    %c1 = arith.constant 1 : index
    %10 = arith.index_cast %9 : i32 to index
    %c0_10 = arith.constant 0 : index
    %c0_11 = arith.constant 0 : index
    %11 = vector.load %arg3[%c0_8, %c0_9, %c1, %10, %c0_10, %c0_11] : memref<1x2x2x9x9x4xbf16, #tpu.memory_space<vmem>>, vector<1x1x1x8x8x4xbf16>
    %12 = vector.shape_cast %11 : vector<1x1x1x8x8x4xbf16> to vector<8x8x4xbf16>
    %13 = vector.shape_cast %12 : vector<8x8x4xbf16> to vector<64x4xbf16>
    %c1_12 = arith.constant 1 : index
    %c0_13 = arith.constant 0 : index
    %c0_14 = arith.constant 0 : index
    %14 = vector.load %arg4[%c1_12, %c0_13, %c0_14] : memref<9x4x4xbf16, #tpu.memory_space<vmem>>, vector<1x4x4xbf16>
    %15 = vector.shape_cast %14 : vector<1x4x4xbf16> to vector<4x4xbf16>
    %cst_15 = arith.constant dense<0.000000e+00> : vector<64x4xf32>
    %16 = tpu.matmul %13, %15, %cst_15 {dimension_numbers = #tpu.dot_dimension_numbers<[1], [0], [0], [1], [0, 0, 1, 1], [], []>} : vector<64x4xbf16>, vector<4x4xbf16>, vector<64x4xf32> -> vector<64x4xf32>
    %17 = arith.addf %8, %16 : vector<64x4xf32>
    %c0_i32_16 = arith.constant 0 : i32
    %18 = arith.addi %0, %c0_i32_16 : i32
    %c0_17 = arith.constant 0 : index
    %c0_18 = arith.constant 0 : index
    %c0_19 = arith.constant 0 : index
    %19 = arith.index_cast %18 : i32 to index
    %c1_20 = arith.constant 1 : index
    %c0_21 = arith.constant 0 : index
    %20 = vector.load %arg3[%c0_17, %c0_18, %c0_19, %19, %c1_20, %c0_21] : memref<1x2x2x9x9x4xbf16, #tpu.memory_space<vmem>>, vector<1x1x1x8x8x4xbf16>
    %21 = vector.shape_cast %20 : vector<1x1x1x8x8x4xbf16> to vector<8x8x4xbf16>
    %22 = vector.shape_cast %21 : vector<8x8x4xbf16> to vector<64x4xbf16>
    %c2 = arith.constant 2 : index
    %c0_22 = arith.constant 0 : index
    %c0_23 = arith.constant 0 : index
    %23 = vector.load %arg4[%c2, %c0_22, %c0_23] : memref<9x4x4xbf16, #tpu.memory_space<vmem>>, vector<1x4x4xbf16>
    %24 = vector.shape_cast %23 : vector<1x4x4xbf16> to vector<4x4xbf16>
    %cst_24 = arith.constant dense<0.000000e+00> : vector<64x4xf32>
    %25 = tpu.matmul %22, %24, %cst_24 {dimension_numbers = #tpu.dot_dimension_numbers<[1], [0], [0], [1], [0, 0, 1, 1], [], []>} : vector<64x4xbf16>, vector<4x4xbf16>, vector<64x4xf32> -> vector<64x4xf32>
    %26 = arith.addf %17, %25 : vector<64x4xf32>
    %c0_i32_25 = arith.constant 0 : i32
    %27 = arith.addi %0, %c0_i32_25 : i32
    %c0_26 = arith.constant 0 : index
    %c1_27 = arith.constant 1 : index
    %c0_28 = arith.constant 0 : index
    %28 = arith.index_cast %27 : i32 to index
    %c0_29 = arith.constant 0 : index
    %c0_30 = arith.constant 0 : index
    %29 = vector.load %arg3[%c0_26, %c1_27, %c0_28, %28, %c0_29, %c0_30] : memref<1x2x2x9x9x4xbf16, #tpu.memory_space<vmem>>, vector<1x1x1x8x8x4xbf16>
    %30 = vector.shape_cast %29 : vector<1x1x1x8x8x4xbf16> to vector<8x8x4xbf16>
    %31 = vector.shape_cast %30 : vector<8x8x4xbf16> to vector<64x4xbf16>
    %c3 = arith.constant 3 : index
    %c0_31 = arith.constant 0 : index
    %c0_32 = arith.constant 0 : index
    %32 = vector.load %arg4[%c3, %c0_31, %c0_32] : memref<9x4x4xbf16, #tpu.memory_space<vmem>>, vector<1x4x4xbf16>
    %33 = vector.shape_cast %32 : vector<1x4x4xbf16> to vector<4x4xbf16>
    %cst_33 = arith.constant dense<0.000000e+00> : vector<64x4xf32>
    %34 = tpu.matmul %31, %33, %cst_33 {dimension_numbers = #tpu.dot_dimension_numbers<[1], [0], [0], [1], [0, 0, 1, 1], [], []>} : vector<64x4xbf16>, vector<4x4xbf16>, vector<64x4xf32> -> vector<64x4xf32>
    %35 = arith.addf %26, %34 : vector<64x4xf32>
    %c0_i32_34 = arith.constant 0 : i32
    %36 = arith.addi %0, %c0_i32_34 : i32
    %c0_35 = arith.constant 0 : index
    %c1_36 = arith.constant 1 : index
    %c1_37 = arith.constant 1 : index
    %37 = arith.index_cast %36 : i32 to index
    %c0_38 = arith.constant 0 : index
    %c0_39 = arith.constant 0 : index
    %38 = vector.load %arg3[%c0_35, %c1_36, %c1_37, %37, %c0_38, %c0_39] : memref<1x2x2x9x9x4xbf16, #tpu.memory_space<vmem>>, vector<1x1x1x8x8x4xbf16>
    %39 = vector.shape_cast %38 : vector<1x1x1x8x8x4xbf16> to vector<8x8x4xbf16>
    %40 = vector.shape_cast %39 : vector<8x8x4xbf16> to vector<64x4xbf16>
    %c4 = arith.constant 4 : index
    %c0_40 = arith.constant 0 : index
    %c0_41 = arith.constant 0 : index
    %41 = vector.load %arg4[%c4, %c0_40, %c0_41] : memref<9x4x4xbf16, #tpu.memory_space<vmem>>, vector<1x4x4xbf16>
    %42 = vector.shape_cast %41 : vector<1x4x4xbf16> to vector<4x4xbf16>
    %cst_42 = arith.constant dense<0.000000e+00> : vector<64x4xf32>
    %43 = tpu.matmul %40, %42, %cst_42 {dimension_numbers = #tpu.dot_dimension_numbers<[1], [0], [0], [1], [0, 0, 1, 1], [], []>} : vector<64x4xbf16>, vector<4x4xbf16>, vector<64x4xf32> -> vector<64x4xf32>
    %44 = arith.addf %35, %43 : vector<64x4xf32>
    %c0_i32_43 = arith.constant 0 : i32
    %45 = arith.addi %0, %c0_i32_43 : i32
    %c0_44 = arith.constant 0 : index
    %c1_45 = arith.constant 1 : index
    %c0_46 = arith.constant 0 : index
    %46 = arith.index_cast %45 : i32 to index
    %c1_47 = arith.constant 1 : index
    %c0_48 = arith.constant 0 : index
    %47 = vector.load %arg3[%c0_44, %c1_45, %c0_46, %46, %c1_47, %c0_48] : memref<1x2x2x9x9x4xbf16, #tpu.memory_space<vmem>>, vector<1x1x1x8x8x4xbf16>
    %48 = vector.shape_cast %47 : vector<1x1x1x8x8x4xbf16> to vector<8x8x4xbf16>
    %49 = vector.shape_cast %48 : vector<8x8x4xbf16> to vector<64x4xbf16>
    %c5 = arith.constant 5 : index
    %c0_49 = arith.constant 0 : index
    %c0_50 = arith.constant 0 : index
    %50 = vector.load %arg4[%c5, %c0_49, %c0_50] : memref<9x4x4xbf16, #tpu.memory_space<vmem>>, vector<1x4x4xbf16>
    %51 = vector.shape_cast %50 : vector<1x4x4xbf16> to vector<4x4xbf16>
    %cst_51 = arith.constant dense<0.000000e+00> : vector<64x4xf32>
    %52 = tpu.matmul %49, %51, %cst_51 {dimension_numbers = #tpu.dot_dimension_numbers<[1], [0], [0], [1], [0, 0, 1, 1], [], []>} : vector<64x4xbf16>, vector<4x4xbf16>, vector<64x4xf32> -> vector<64x4xf32>
    %53 = arith.addf %44, %52 : vector<64x4xf32>
    %c1_i32 = arith.constant 1 : i32
    %54 = arith.addi %0, %c1_i32 : i32
    %c0_52 = arith.constant 0 : index
    %c0_53 = arith.constant 0 : index
    %c0_54 = arith.constant 0 : index
    %55 = arith.index_cast %54 : i32 to index
    %c0_55 = arith.constant 0 : index
    %c0_56 = arith.constant 0 : index
    %56 = vector.load %arg3[%c0_52, %c0_53, %c0_54, %55, %c0_55, %c0_56] : memref<1x2x2x9x9x4xbf16, #tpu.memory_space<vmem>>, vector<1x1x1x8x8x4xbf16>
    %57 = vector.shape_cast %56 : vector<1x1x1x8x8x4xbf16> to vector<8x8x4xbf16>
    %58 = vector.shape_cast %57 : vector<8x8x4xbf16> to vector<64x4xbf16>
    %c6 = arith.constant 6 : index
    %c0_57 = arith.constant 0 : index
    %c0_58 = arith.constant 0 : index
    %59 = vector.load %arg4[%c6, %c0_57, %c0_58] : memref<9x4x4xbf16, #tpu.memory_space<vmem>>, vector<1x4x4xbf16>
    %60 = vector.shape_cast %59 : vector<1x4x4xbf16> to vector<4x4xbf16>
    %cst_59 = arith.constant dense<0.000000e+00> : vector<64x4xf32>
    %61 = tpu.matmul %58, %60, %cst_59 {dimension_numbers = #tpu.dot_dimension_numbers<[1], [0], [0], [1], [0, 0, 1, 1], [], []>} : vector<64x4xbf16>, vector<4x4xbf16>, vector<64x4xf32> -> vector<64x4xf32>
    %62 = arith.addf %53, %61 : vector<64x4xf32>
    %c1_i32_60 = arith.constant 1 : i32
    %63 = arith.addi %0, %c1_i32_60 : i32
    %c0_61 = arith.constant 0 : index
    %c0_62 = arith.constant 0 : index
    %c1_63 = arith.constant 1 : index
    %64 = arith.index_cast %63 : i32 to index
    %c0_64 = arith.constant 0 : index
    %c0_65 = arith.constant 0 : index
    %65 = vector.load %arg3[%c0_61, %c0_62, %c1_63, %64, %c0_64, %c0_65] : memref<1x2x2x9x9x4xbf16, #tpu.memory_space<vmem>>, vector<1x1x1x8x8x4xbf16>
    %66 = vector.shape_cast %65 : vector<1x1x1x8x8x4xbf16> to vector<8x8x4xbf16>
    %67 = vector.shape_cast %66 : vector<8x8x4xbf16> to vector<64x4xbf16>
    %c7 = arith.constant 7 : index
    %c0_66 = arith.constant 0 : index
    %c0_67 = arith.constant 0 : index
    %68 = vector.load %arg4[%c7, %c0_66, %c0_67] : memref<9x4x4xbf16, #tpu.memory_space<vmem>>, vector<1x4x4xbf16>
    %69 = vector.shape_cast %68 : vector<1x4x4xbf16> to vector<4x4xbf16>
    %cst_68 = arith.constant dense<0.000000e+00> : vector<64x4xf32>
    %70 = tpu.matmul %67, %69, %cst_68 {dimension_numbers = #tpu.dot_dimension_numbers<[1], [0], [0], [1], [0, 0, 1, 1], [], []>} : vector<64x4xbf16>, vector<4x4xbf16>, vector<64x4xf32> -> vector<64x4xf32>
    %71 = arith.addf %62, %70 : vector<64x4xf32>
    %c1_i32_69 = arith.constant 1 : i32
    %72 = arith.addi %0, %c1_i32_69 : i32
    %c0_70 = arith.constant 0 : index
    %c0_71 = arith.constant 0 : index
    %c0_72 = arith.constant 0 : index
    %73 = arith.index_cast %72 : i32 to index
    %c1_73 = arith.constant 1 : index
    %c0_74 = arith.constant 0 : index
    %74 = vector.load %arg3[%c0_70, %c0_71, %c0_72, %73, %c1_73, %c0_74] : memref<1x2x2x9x9x4xbf16, #tpu.memory_space<vmem>>, vector<1x1x1x8x8x4xbf16>
    %75 = vector.shape_cast %74 : vector<1x1x1x8x8x4xbf16> to vector<8x8x4xbf16>
    %76 = vector.shape_cast %75 : vector<8x8x4xbf16> to vector<64x4xbf16>
    %c8 = arith.constant 8 : index
    %c0_75 = arith.constant 0 : index
    %c0_76 = arith.constant 0 : index
    %77 = vector.load %arg4[%c8, %c0_75, %c0_76] : memref<9x4x4xbf16, #tpu.memory_space<vmem>>, vector<1x4x4xbf16>
    %78 = vector.shape_cast %77 : vector<1x4x4xbf16> to vector<4x4xbf16>
    %cst_77 = arith.constant dense<0.000000e+00> : vector<64x4xf32>
    %79 = tpu.matmul %76, %78, %cst_77 {dimension_numbers = #tpu.dot_dimension_numbers<[1], [0], [0], [1], [0, 0, 1, 1], [], []>} : vector<64x4xbf16>, vector<4x4xbf16>, vector<64x4xf32> -> vector<64x4xf32>
    %80 = arith.addf %71, %79 : vector<64x4xf32>
    %c0_78 = arith.constant 0 : index
    %c0_79 = arith.constant 0 : index
    %81 = vector.load %arg5[%c0_78, %c0_79] : memref<1x4xf32, #tpu.memory_space<vmem>>, vector<1x4xf32>
    %82 = vector.broadcast %81 : vector<1x4xf32> to vector<64x4xf32>
    %83 = arith.mulf %80, %82 : vector<64x4xf32>
    %c0_80 = arith.constant 0 : index
    %c0_81 = arith.constant 0 : index
    %84 = vector.load %arg6[%c0_80, %c0_81] : memref<1x4xf32, #tpu.memory_space<vmem>>, vector<1x4xf32>
    %85 = vector.broadcast %84 : vector<1x4xf32> to vector<64x4xf32>
    %86 = arith.addf %83, %85 : vector<64x4xf32>
    %cst_82 = arith.constant 0.000000e+00 : f32
    %87 = vector.broadcast %cst_82 : f32 to vector<64x4xf32>
    %88 = arith.maximumf %86, %87 : vector<64x4xf32>
    %89 = arith.truncf %88 : vector<64x4xf32> to vector<64x4xbf16>
    %c0_83 = arith.constant 0 : index
    %c0_84 = arith.constant 0 : index
    %c0_85 = arith.constant 0 : index
    %90 = vector.load %arg7[%c0_83, %c0_84, %c0_85] : memref<1x64x4xbf16, #tpu.memory_space<vmem>>, vector<1x64x4xbf16>
    %91 = vector.shape_cast %90 : vector<1x64x4xbf16> to vector<64x4xbf16>
    %92 = vector.shape_cast %89 : vector<64x4xbf16> to vector<1x64x4xbf16>
    tpu.vector_store %arg7[%c0_83, %c0_84, %c0_85], %92 {strides = array<i32>} : memref<1x64x4xbf16, #tpu.memory_space<vmem>>, vector<1x64x4xbf16>,
    return
  }
  func.func @transform_0(%arg0: i32, %arg1: i32, %arg2: i32) -> (i32, i32, i32, i32, i32, i32) {
    %c0_i32 = arith.constant 0 : i32
    %c0_i32_0 = arith.constant 0 : i32
    %c0_i32_1 = arith.constant 0 : i32
    %c0_i32_2 = arith.constant 0 : i32
    %c0_i32_3 = arith.constant 0 : i32
    %c0_i32_4 = arith.constant 0 : i32
    return %arg0, %c0_i32, %c0_i32_0, %c0_i32_1, %c0_i32_2, %c0_i32_3 : i32, i32, i32, i32, i32, i32
  }
  func.func @transform_1(%arg0: i32, %arg1: i32, %arg2: i32) -> (i32, i32, i32) {
    %c0_i32 = arith.constant 0 : i32
    %c0_i32_0 = arith.constant 0 : i32
    %c0_i32_1 = arith.constant 0 : i32
    return %c0_i32, %c0_i32_0, %arg1 : i32, i32, i32
  }
  func.func @transform_2(%arg0: i32, %arg1: i32, %arg2: i32) -> (i32, i32) {
    %c0_i32 = arith.constant 0 : i32
    %c0_i32_0 = arith.constant 0 : i32
    return %c0_i32, %arg1 : i32, i32
  }
  func.func @transform_3(%arg0: i32, %arg1: i32, %arg2: i32) -> (i32, i32) {
    %c0_i32 = arith.constant 0 : i32
    %c0_i32_0 = arith.constant 0 : i32
    return %c0_i32, %arg1 : i32, i32
  }
  func.func @transform_4(%arg0: i32, %arg1: i32, %arg2: i32) -> (i32, i32, i32) {
    %c0_i32 = arith.constant 0 : i32
    return %arg0, %arg2, %arg1 : i32, i32, i32
  }
}

module attributes {stable_mosaic.version = 11 : i64} {
  func.func @_conv3_proj_add_kernel(%arg0: i32, %arg1: i32, %arg2: memref<128x4xbf16, #tpu.memory_space<vmem>>, %arg3: memref<4x16xbf16, #tpu.memory_space<vmem>>, %arg4: memref<128x4xf32, #tpu.memory_space<vmem>>, %arg5: memref<4x16xbf16, #tpu.memory_space<vmem>>, %arg6: memref<128x16xf32, #tpu.memory_space<vmem>>) attributes {dimension_semantics = [#tpu.dimension_semantics<parallel>, #tpu.dimension_semantics<parallel>], iteration_bounds = array<i64: 1, 1>, scalar_prefetch = 0 : i64, scratch_operands = 0 : i64, tpu.core_type = #tpu.core_type<tc>, window_params = [{transform_indices = @transform_0, window_bounds = array<i64: 128, 4>}, {transform_indices = @transform_1, window_bounds = array<i64: 4, 16>}, {transform_indices = @transform_2, window_bounds = array<i64: 128, 4>}, {transform_indices = @transform_3, window_bounds = array<i64: 4, 16>}, {transform_indices = @transform_4, window_bounds = array<i64: 128, 16>}]} {
    %c0 = arith.constant 0 : index
    %c0_0 = arith.constant 0 : index
    %0 = vector.load %arg2[%c0, %c0_0] : memref<128x4xbf16, #tpu.memory_space<vmem>>, vector<128x4xbf16>
    %c0_1 = arith.constant 0 : index
    %c0_2 = arith.constant 0 : index
    %1 = vector.load %arg3[%c0_1, %c0_2] : memref<4x16xbf16, #tpu.memory_space<vmem>>, vector<4x16xbf16>
    %cst = arith.constant dense<0.000000e+00> : vector<128x16xf32>
    %2 = tpu.matmul %0, %1, %cst {dimension_numbers = #tpu.dot_dimension_numbers<[1], [0], [0], [1], [0, 0, 1, 1], [], []>} : vector<128x4xbf16>, vector<4x16xbf16>, vector<128x16xf32> -> vector<128x16xf32>
    %c0_3 = arith.constant 0 : index
    %c0_4 = arith.constant 0 : index
    %3 = vector.load %arg4[%c0_3, %c0_4] : memref<128x4xf32, #tpu.memory_space<vmem>>, vector<128x4xf32>
    %4 = arith.truncf %3 : vector<128x4xf32> to vector<128x4xbf16>
    %c0_5 = arith.constant 0 : index
    %c0_6 = arith.constant 0 : index
    %5 = vector.load %arg5[%c0_5, %c0_6] : memref<4x16xbf16, #tpu.memory_space<vmem>>, vector<4x16xbf16>
    %cst_7 = arith.constant dense<0.000000e+00> : vector<128x16xf32>
    %6 = tpu.matmul %4, %5, %cst_7 {dimension_numbers = #tpu.dot_dimension_numbers<[1], [0], [0], [1], [0, 0, 1, 1], [], []>} : vector<128x4xbf16>, vector<4x16xbf16>, vector<128x16xf32> -> vector<128x16xf32>
    %7 = arith.addf %2, %6 : vector<128x16xf32>
    %c0_8 = arith.constant 0 : index
    %c0_9 = arith.constant 0 : index
    %8 = vector.load %arg6[%c0_8, %c0_9] : memref<128x16xf32, #tpu.memory_space<vmem>>, vector<128x16xf32>
    tpu.vector_store %arg6[%c0_8, %c0_9], %7 {strides = array<i32>} : memref<128x16xf32, #tpu.memory_space<vmem>>, vector<128x16xf32>,
    return
  }
  func.func @transform_0(%arg0: i32, %arg1: i32) -> (i32, i32) {
    %c0_i32 = arith.constant 0 : i32
    %c0_i32_0 = arith.constant 0 : i32
    return %arg0, %c0_i32 : i32, i32
  }
  func.func @transform_1(%arg0: i32, %arg1: i32) -> (i32, i32) {
    %c0_i32 = arith.constant 0 : i32
    %c0_i32_0 = arith.constant 0 : i32
    return %c0_i32, %arg1 : i32, i32
  }
  func.func @transform_2(%arg0: i32, %arg1: i32) -> (i32, i32) {
    %c0_i32 = arith.constant 0 : i32
    %c0_i32_0 = arith.constant 0 : i32
    return %arg0, %c0_i32 : i32, i32
  }
  func.func @transform_3(%arg0: i32, %arg1: i32) -> (i32, i32) {
    %c0_i32 = arith.constant 0 : i32
    %c0_i32_0 = arith.constant 0 : i32
    return %c0_i32, %arg1 : i32, i32
  }
  func.func @transform_4(%arg0: i32, %arg1: i32) -> (i32, i32) {
    %c0_i32 = arith.constant 0 : i32
    return %arg0, %arg1 : i32, i32
  }
}

</mosaic_0001>

<llo_original>
// kernel: preact_bottleneck_forward.3
$region0: #{preact_bottleneck_forward.3}
  #allocation0 [shape = 'u32[]', space=smem, size = 0x4, offset = 0x4, fixed_abs, tag = 'smem constant byte address 0x4 - core index']
  #allocation1 [shape = 'u32[144,128]{1,0:T(1,128)}', space=vmem, size = 0x12000, scoped, tag = 'internal scratch']
  %s0 = inlined_call_operand.vmem [shape: f32[512,4], index: 0, kind: input, shape index: {}]
  %s1 = inlined_call_operand.vmem [shape: f32[1,4], index: 1, kind: input, shape index: {}]
  %s2 = inlined_call_operand.vmem [shape: f32[1,4], index: 2, kind: input, shape index: {}]
  %s3 = inlined_call_operand.vmem [shape: bf16[4,4], index: 3, kind: input, shape index: {}]
  %s4 = inlined_call_operand.vmem [shape: f32[1,4], index: 4, kind: input, shape index: {}]
  %s5 = inlined_call_operand.vmem [shape: f32[1,4], index: 5, kind: input, shape index: {}]
  %s6 = inlined_call_operand.vmem [shape: bf16[512,4], index: 6, kind: output, shape index: {}]
  %s7 = sld [smem:[#allocation0]]
  $region34: #{preact_bottleneck_forward.3} parent=0
    _
  %s9 = ssub.s32 1, %s7
  %s10 = scalar_select 0, %s9, %s7
  // Predicated region
  $region2: #{preact_bottleneck_forward.3} parent=0 // pred_check
    _
  $region3: #{preact_bottleneck_forward.3} parent=0 // pred_check_branch
    %12 = sbr.rel (0) target = $region5
  $region4: #{preact_bottleneck_forward.3} parent=0 // pred_region
    _
  $region5: #{preact_bottleneck_forward.3} parent=0 // pred_fallthru
    _
  // Predicated region
  $region6: #{preact_bottleneck_forward.3} parent=0 // pred_check
    _
  $region7: #{preact_bottleneck_forward.3} parent=0 // pred_check_branch
    %14 = sbr.rel (0) target = $region9
  $region8: #{preact_bottleneck_forward.3} parent=0 // pred_region
    _
  $region9: #{preact_bottleneck_forward.3} parent=0 // pred_fallthru
    _
  // Predicated region
  $region10: #{preact_bottleneck_forward.3} parent=0 // pred_check
    _
  $region11: #{preact_bottleneck_forward.3} parent=0 // pred_check_branch
    %16 = sbr.rel (0) target = $region13
  $region12: #{preact_bottleneck_forward.3} parent=0 // pred_region
    _
  $region13: #{preact_bottleneck_forward.3} parent=0 // pred_fallthru
    _
  // Predicated region
  $region14: #{preact_bottleneck_forward.3} parent=0 // pred_check
    _
  $region15: #{preact_bottleneck_forward.3} parent=0 // pred_check_branch
    %18 = sbr.rel (0) target = $region17
  $region16: #{preact_bottleneck_forward.3} parent=0 // pred_region
    _
  $region17: #{preact_bottleneck_forward.3} parent=0 // pred_fallthru
    _
  // Predicated region
  $region18: #{preact_bottleneck_forward.3} parent=0 // pred_check
    _
  $region19: #{preact_bottleneck_forward.3} parent=0 // pred_check_branch
    %20 = sbr.rel (0) target = $region21
  $region20: #{preact_bottleneck_forward.3} parent=0 // pred_region
    _
  $region21: #{preact_bottleneck_forward.3} parent=0 // pred_fallthru
    _
  // Predicated region
  $region22: #{preact_bottleneck_forward.3} parent=0 // pred_check
    _
  $region23: #{preact_bottleneck_forward.3} parent=0 // pred_check_branch
    %22 = sbr.rel (0) target = $region25
  $region24: #{preact_bottleneck_forward.3} parent=0 // pred_region
    _
  $region25: #{preact_bottleneck_forward.3} parent=0 // pred_fallthru
    _
  %v24 = vld [vmem:[%s0] sm:$0xff]
  %v25 = vld [vmem:[%s0 + $0x8] sm:$0xff]
  %v26 = vld [vmem:[%s0 + $0x10] sm:$0xff]
  %v27 = vld [vmem:[%s0 + $0x18] sm:$0xff]
  %v28 = vld [vmem:[%s0 + $0x20] sm:$0xff]
  %v29 = vld [vmem:[%s0 + $0x28] sm:$0xff]
  %v30 = vld [vmem:[%s0 + $0x30] sm:$0xff]
  %v31 = vld [vmem:[%s0 + $0x38] sm:$0xff]
  %v32 = vld [vmem:[%s0 + $0x40] sm:$0xff]
  %v33 = vld [vmem:[%s0 + $0x48] sm:$0xff]
  %v34 = vld [vmem:[%s0 + $0x50] sm:$0xff]
  %v35 = vld [vmem:[%s0 + $0x58] sm:$0xff]
  %v36 = vld [vmem:[%s0 + $0x60] sm:$0xff]
  %v37 = vld [vmem:[%s0 + $0x68] sm:$0xff]
  %v38 = vld [vmem:[%s0 + $0x70] sm:$0xff]
  %v39 = vld [vmem:[%s0 + $0x78] sm:$0xff]
  %v40 = vld [vmem:[%s0 + $0x80] sm:$0xff]
  %v41 = vld [vmem:[%s0 + $0x88] sm:$0xff]
  %v42 = vld [vmem:[%s0 + $0x90] sm:$0xff]
  %v43 = vld [vmem:[%s0 + $0x98] sm:$0xff]
  %v44 = vld [vmem:[%s0 + $0xa0] sm:$0xff]
  %v45 = vld [vmem:[%s0 + $0xa8] sm:$0xff]
  %v46 = vld [vmem:[%s0 + $0xb0] sm:$0xff]
  %v47 = vld [vmem:[%s0 + $0xb8] sm:$0xff]
  %v48 = vld [vmem:[%s0 + $0xc0] sm:$0xff]
  %v49 = vld [vmem:[%s0 + $0xc8] sm:$0xff]
  %v50 = vld [vmem:[%s0 + $0xd0] sm:$0xff]
  %v51 = vld [vmem:[%s0 + $0xd8] sm:$0xff]
  %v52 = vld [vmem:[%s0 + $0xe0] sm:$0xff]
  %v53 = vld [vmem:[%s0 + $0xe8] sm:$0xff]
  %v54 = vld [vmem:[%s0 + $0xf0] sm:$0xff]
  %v55 = vld [vmem:[%s0 + $0xf8] sm:$0xff]
  %v56 = vld [vmem:[%s0 + $0x100] sm:$0xff]
  %v57 = vld [vmem:[%s0 + $0x108] sm:$0xff]
  %v58 = vld [vmem:[%s0 + $0x110] sm:$0xff]
  %v59 = vld [vmem:[%s0 + $0x118] sm:$0xff]
  %v60 = vld [vmem:[%s0 + $0x120] sm:$0xff]
  %v61 = vld [vmem:[%s0 + $0x128] sm:$0xff]
  %v62 = vld [vmem:[%s0 + $0x130] sm:$0xff]
  %v63 = vld [vmem:[%s0 + $0x138] sm:$0xff]
  %v64 = vld [vmem:[%s0 + $0x140] sm:$0xff]
  %v65 = vld [vmem:[%s0 + $0x148] sm:$0xff]
  %v66 = vld [vmem:[%s0 + $0x150] sm:$0xff]
  %v67 = vld [vmem:[%s0 + $0x158] sm:$0xff]
  %v68 = vld [vmem:[%s0 + $0x160] sm:$0xff]
  %v69 = vld [vmem:[%s0 + $0x168] sm:$0xff]
  %v70 = vld [vmem:[%s0 + $0x170] sm:$0xff]
  %v71 = vld [vmem:[%s0 + $0x178] sm:$0xff]
  %v72 = vld [vmem:[%s0 + $0x180] sm:$0xff]
  %v73 = vld [vmem:[%s0 + $0x188] sm:$0xff]
  %v74 = vld [vmem:[%s0 + $0x190] sm:$0xff]
  %v75 = vld [vmem:[%s0 + $0x198] sm:$0xff]
  %v76 = vld [vmem:[%s0 + $0x1a0] sm:$0xff]
  %v77 = vld [vmem:[%s0 + $0x1a8] sm:$0xff]
  %v78 = vld [vmem:[%s0 + $0x1b0] sm:$0xff]
  %v79 = vld [vmem:[%s0 + $0x1b8] sm:$0xff]
  %v80 = vld [vmem:[%s0 + $0x1c0] sm:$0xff]
  %v81 = vld [vmem:[%s0 + $0x1c8] sm:$0xff]
  %v82 = vld [vmem:[%s0 + $0x1d0] sm:$0xff]
  %v83 = vld [vmem:[%s0 + $0x1d8] sm:$0xff]
  %v84 = vld [vmem:[%s0 + $0x1e0] sm:$0xff]
  %v85 = vld [vmem:[%s0 + $0x1e8] sm:$0xff]
  %v86 = vld [vmem:[%s0 + $0x1f0] sm:$0xff]
  %v87 = vld [vmem:[%s0 + $0x1f8] sm:$0xff]
  %v88 = vld [vmem:[%s1] sm:$0x1]
  %v90 = vlaneseq
  %v91 = vshrl.u32 %v90, 7
  %v92 = vsub.s32 0, %v91
  %v93 = vrot.slane %v88, %v92
  %v95 = vmul.f32 %v24, %v93
  %v96 = vmul.f32 %v25, %v93
  %v97 = vmul.f32 %v26, %v93
  %v98 = vmul.f32 %v27, %v93
  %v99 = vmul.f32 %v28, %v93
  %v100 = vmul.f32 %v29, %v93
  %v101 = vmul.f32 %v30, %v93
  %v102 = vmul.f32 %v31, %v93
  %v103 = vmul.f32 %v32, %v93
  %v104 = vmul.f32 %v33, %v93
  %v105 = vmul.f32 %v34, %v93
  %v106 = vmul.f32 %v35, %v93
  %v107 = vmul.f32 %v36, %v93
  %v108 = vmul.f32 %v37, %v93
  %v109 = vmul.f32 %v38, %v93
  %v110 = vmul.f32 %v39, %v93
  %v111 = vmul.f32 %v40, %v93
  %v112 = vmul.f32 %v41, %v93
  %v113 = vmul.f32 %v42, %v93
  %v114 = vmul.f32 %v43, %v93
  %v115 = vmul.f32 %v44, %v93
  %v116 = vmul.f32 %v45, %v93
  %v117 = vmul.f32 %v46, %v93
  %v118 = vmul.f32 %v47, %v93
  %v119 = vmul.f32 %v48, %v93
  %v120 = vmul.f32 %v49, %v93
  %v121 = vmul.f32 %v50, %v93
  %v122 = vmul.f32 %v51, %v93
  %v123 = vmul.f32 %v52, %v93
  %v124 = vmul.f32 %v53, %v93
  %v125 = vmul.f32 %v54, %v93
  %v126 = vmul.f32 %v55, %v93
  %v127 = vmul.f32 %v56, %v93
  %v128 = vmul.f32 %v57, %v93
  %v129 = vmul.f32 %v58, %v93
  %v130 = vmul.f32 %v59, %v93
  %v131 = vmul.f32 %v60, %v93
  %v132 = vmul.f32 %v61, %v93
  %v133 = vmul.f32 %v62, %v93
  %v134 = vmul.f32 %v63, %v93
  %v135 = vmul.f32 %v64, %v93
  %v136 = vmul.f32 %v65, %v93
  %v137 = vmul.f32 %v66, %v93
  %v138 = vmul.f32 %v67, %v93
  %v139 = vmul.f32 %v68, %v93
  %v140 = vmul.f32 %v69, %v93
  %v141 = vmul.f32 %v70, %v93
  %v142 = vmul.f32 %v71, %v93
  %v143 = vmul.f32 %v72, %v93
  %v144 = vmul.f32 %v73, %v93
  %v145 = vmul.f32 %v74, %v93
  %v146 = vmul.f32 %v75, %v93
  %v147 = vmul.f32 %v76, %v93
  %v148 = vmul.f32 %v77, %v93
  %v149 = vmul.f32 %v78, %v93
  %v150 = vmul.f32 %v79, %v93
  %v151 = vmul.f32 %v80, %v93
  %v152 = vmul.f32 %v81, %v93
  %v153 = vmul.f32 %v82, %v93
  %v154 = vmul.f32 %v83, %v93
  %v155 = vmul.f32 %v84, %v93
  %v156 = vmul.f32 %v85, %v93
  %v157 = vmul.f32 %v86, %v93
  %v158 = vmul.f32 %v87, %v93
  %v159 = vld [vmem:[%s2] sm:$0x1]
  %v161 = vlaneseq
  %v162 = vshrl.u32 %v161, 7
  %v163 = vsub.s32 0, %v162
  %v164 = vrot.slane %v159, %v163
  %v166 = vadd.f32 %v95, %v164
  %v167 = vadd.f32 %v96, %v164
  %v168 = vadd.f32 %v97, %v164
  %v169 = vadd.f32 %v98, %v164
  %v170 = vadd.f32 %v99, %v164
  %v171 = vadd.f32 %v100, %v164
  %v172 = vadd.f32 %v101, %v164
  %v173 = vadd.f32 %v102, %v164
  %v174 = vadd.f32 %v103, %v164
  %v175 = vadd.f32 %v104, %v164
  %v176 = vadd.f32 %v105, %v164
  %v177 = vadd.f32 %v106, %v164
  %v178 = vadd.f32 %v107, %v164
  %v179 = vadd.f32 %v108, %v164
  %v180 = vadd.f32 %v109, %v164
  %v181 = vadd.f32 %v110, %v164
  %v182 = vadd.f32 %v111, %v164
  %v183 = vadd.f32 %v112, %v164
  %v184 = vadd.f32 %v113, %v164
  %v185 = vadd.f32 %v114, %v164
  %v186 = vadd.f32 %v115, %v164
  %v187 = vadd.f32 %v116, %v164
  %v188 = vadd.f32 %v117, %v164
  %v189 = vadd.f32 %v118, %v164
  %v190 = vadd.f32 %v119, %v164
  %v191 = vadd.f32 %v120, %v164
  %v192 = vadd.f32 %v121, %v164
  %v193 = vadd.f32 %v122, %v164
  %v194 = vadd.f32 %v123, %v164
  %v195 = vadd.f32 %v124, %v164
  %v196 = vadd.f32 %v125, %v164
  %v197 = vadd.f32 %v126, %v164
  %v198 = vadd.f32 %v127, %v164
  %v199 = vadd.f32 %v128, %v164
  %v200 = vadd.f32 %v129, %v164
  %v201 = vadd.f32 %v130, %v164
  %v202 = vadd.f32 %v131, %v164
  %v203 = vadd.f32 %v132, %v164
  %v204 = vadd.f32 %v133, %v164
  %v205 = vadd.f32 %v134, %v164
  %v206 = vadd.f32 %v135, %v164
  %v207 = vadd.f32 %v136, %v164
  %v208 = vadd.f32 %v137, %v164
  %v209 = vadd.f32 %v138, %v164
  %v210 = vadd.f32 %v139, %v164
  %v211 = vadd.f32 %v140, %v164
  %v212 = vadd.f32 %v141, %v164
  %v213 = vadd.f32 %v142, %v164
  %v214 = vadd.f32 %v143, %v164
  %v215 = vadd.f32 %v144, %v164
  %v216 = vadd.f32 %v145, %v164
  %v217 = vadd.f32 %v146, %v164
  %v218 = vadd.f32 %v147, %v164
  %v219 = vadd.f32 %v148, %v164
  %v220 = vadd.f32 %v149, %v164
  %v221 = vadd.f32 %v150, %v164
  %v222 = vadd.f32 %v151, %v164
  %v223 = vadd.f32 %v152, %v164
  %v224 = vadd.f32 %v153, %v164
  %v225 = vadd.f32 %v154, %v164
  %v226 = vadd.f32 %v155, %v164
  %v227 = vadd.f32 %v156, %v164
  %v228 = vadd.f32 %v157, %v164
  %v229 = vadd.f32 %v158, %v164
  %v230 = vmax.f32 %v166, 0.0
  %v231 = vmax.f32 %v167, 0.0
  %v232 = vmax.f32 %v168, 0.0
  %v233 = vmax.f32 %v169, 0.0
  %v234 = vmax.f32 %v170, 0.0
  %v235 = vmax.f32 %v171, 0.0
  %v236 = vmax.f32 %v172, 0.0
  %v237 = vmax.f32 %v173, 0.0
  %v238 = vmax.f32 %v174, 0.0
  %v239 = vmax.f32 %v175, 0.0
  %v240 = vmax.f32 %v176, 0.0
  %v241 = vmax.f32 %v177, 0.0
  %v242 = vmax.f32 %v178, 0.0
  %v243 = vmax.f32 %v179, 0.0
  %v244 = vmax.f32 %v180, 0.0
  %v245 = vmax.f32 %v181, 0.0
  %v246 = vmax.f32 %v182, 0.0
  %v247 = vmax.f32 %v183, 0.0
  %v248 = vmax.f32 %v184, 0.0
  %v249 = vmax.f32 %v185, 0.0
  %v250 = vmax.f32 %v186, 0.0
  %v251 = vmax.f32 %v187, 0.0
  %v252 = vmax.f32 %v188, 0.0
  %v253 = vmax.f32 %v189, 0.0
  %v254 = vmax.f32 %v190, 0.0
  %v255 = vmax.f32 %v191, 0.0
  %v256 = vmax.f32 %v192, 0.0
  %v257 = vmax.f32 %v193, 0.0
  %v258 = vmax.f32 %v194, 0.0
  %v259 = vmax.f32 %v195, 0.0
  %v260 = vmax.f32 %v196, 0.0
  %v261 = vmax.f32 %v197, 0.0
  %v262 = vmax.f32 %v198, 0.0
  %v263 = vmax.f32 %v199, 0.0
  %v264 = vmax.f32 %v200, 0.0
  %v265 = vmax.f32 %v201, 0.0
  %v266 = vmax.f32 %v202, 0.0
  %v267 = vmax.f32 %v203, 0.0
  %v268 = vmax.f32 %v204, 0.0
  %v269 = vmax.f32 %v205, 0.0
  %v270 = vmax.f32 %v206, 0.0
  %v271 = vmax.f32 %v207, 0.0
  %v272 = vmax.f32 %v208, 0.0
  %v273 = vmax.f32 %v209, 0.0
  %v274 = vmax.f32 %v210, 0.0
  %v275 = vmax.f32 %v211, 0.0
  %v276 = vmax.f32 %v212, 0.0
  %v277 = vmax.f32 %v213, 0.0
  %v278 = vmax.f32 %v214, 0.0
  %v279 = vmax.f32 %v215, 0.0
  %v280 = vmax.f32 %v216, 0.0
  %v281 = vmax.f32 %v217, 0.0
  %v282 = vmax.f32 %v218, 0.0
  %v283 = vmax.f32 %v219, 0.0
  %v284 = vmax.f32 %v220, 0.0
  %v285 = vmax.f32 %v221, 0.0
  %v286 = vmax.f32 %v222, 0.0
  %v287 = vmax.f32 %v223, 0.0
  %v288 = vmax.f32 %v224, 0.0
  %v289 = vmax.f32 %v225, 0.0
  %v290 = vmax.f32 %v226, 0.0
  %v291 = vmax.f32 %v227, 0.0
  %v292 = vmax.f32 %v228, 0.0
  %v293 = vmax.f32 %v229, 0.0
  %v294 = vpack.c.bf16 %v231, %v230
  %v295 = vpack.c.bf16 %v233, %v232
  %v296 = vpack.c.bf16 %v235, %v234
  %v297 = vpack.c.bf16 %v237, %v236
  %v298 = vpack.c.bf16 %v239, %v238
  %v299 = vpack.c.bf16 %v241, %v240
  %v300 = vpack.c.bf16 %v243, %v242
  %v301 = vpack.c.bf16 %v245, %v244
  %v302 = vpack.c.bf16 %v247, %v246
  %v303 = vpack.c.bf16 %v249, %v248
  %v304 = vpack.c.bf16 %v251, %v250
  %v305 = vpack.c.bf16 %v253, %v252
  %v306 = vpack.c.bf16 %v255, %v254
  %v307 = vpack.c.bf16 %v257, %v256
  %v308 = vpack.c.bf16 %v259, %v258
  %v309 = vpack.c.bf16 %v261, %v260
  %v310 = vpack.c.bf16 %v263, %v262
  %v311 = vpack.c.bf16 %v265, %v264
  %v312 = vpack.c.bf16 %v267, %v266
  %v313 = vpack.c.bf16 %v269, %v268
  %v314 = vpack.c.bf16 %v271, %v270
  %v315 = vpack.c.bf16 %v273, %v272
  %v316 = vpack.c.bf16 %v275, %v274
  %v317 = vpack.c.bf16 %v277, %v276
  %v318 = vpack.c.bf16 %v279, %v278
  %v319 = vpack.c.bf16 %v281, %v280
  %v320 = vpack.c.bf16 %v283, %v282
  %v321 = vpack.c.bf16 %v285, %v284
  %v322 = vpack.c.bf16 %v287, %v286
  %v323 = vpack.c.bf16 %v289, %v288
  %v324 = vpack.c.bf16 %v291, %v290
  %v325 = vpack.c.bf16 %v293, %v292
  %v326 = vld [vmem:[%s3] sm:$0x3]
  %vm327 = vcmask 31744
  %v329 = vsel %vm327, %v294, 0
  %v332 = vsel %vm327, %v295, 0
  %v335 = vsel %vm327, %v296, 0
  %v338 = vsel %vm327, %v297, 0
  %v341 = vsel %vm327, %v298, 0
  %v344 = vsel %vm327, %v299, 0
  %v347 = vsel %vm327, %v300, 0
  %v350 = vsel %vm327, %v301, 0
  %v353 = vsel %vm327, %v302, 0
  %v356 = vsel %vm327, %v303, 0
  %v359 = vsel %vm327, %v304, 0
  %v362 = vsel %vm327, %v305, 0
  %v365 = vsel %vm327, %v306, 0
  %v368 = vsel %vm327, %v307, 0
  %v371 = vsel %vm327, %v308, 0
  %v374 = vsel %vm327, %v309, 0
  %v377 = vsel %vm327, %v310, 0
  %v380 = vsel %vm327, %v311, 0
  %v383 = vsel %vm327, %v312, 0
  %v386 = vsel %vm327, %v313, 0
  %v389 = vsel %vm327, %v314, 0
  %v392 = vsel %vm327, %v315, 0
  %v395 = vsel %vm327, %v316, 0
  %v398 = vsel %vm327, %v317, 0
  %v401 = vsel %vm327, %v318, 0
  %v404 = vsel %vm327, %v319, 0
  %v407 = vsel %vm327, %v320, 0
  %v410 = vsel %vm327, %v321, 0
  %v413 = vsel %vm327, %v322, 0
  %v416 = vsel %vm327, %v323, 0
  %v419 = vsel %vm327, %v324, 0
  %v422 = vsel %vm327, %v325, 0
  %vm424 = vcmask 1041408
  %v426 = vsel %vm424, %v326, 0
  %428 = vmatprep.subr.bf16.mxu0 0
  %429 = vmatpush1.bf16.msra.mxu0 %v426
  %430 = vmatprep.subr.bf16.mxu0 0
  %431 = vmatpush1.bf16.msra.mxu0 0
  %432 = vmatprep.subr.bf16.mxu0 0
  %433 = vmatpush1.bf16.msra.mxu0 0
  %434 = vmatprep.subr.bf16.mxu0 0
  %435 = vmatpush1.bf16.msra.mxu0 0
  %436 = vmatprep.subr.bf16.mxu0 0
  %437 = vmatpush1.bf16.msra.mxu0 0
  %438 = vmatprep.subr.bf16.mxu0 0
  %439 = vmatpush1.bf16.msra.mxu0 0
  %440 = vmatprep.subr.bf16.mxu0 0
  %441 = vmatpush1.bf16.msra.mxu0 0
  %442 = vmatprep.subr.bf16.mxu0 0
  %443 = vmatpush1.bf16.msra.mxu0 0
  %444 = vmatprep.subr.bf16.mxu0 0
  %445 = vmatpush1.bf16.msra.mxu0 0
  %446 = vmatprep.subr.bf16.mxu0 0
  %447 = vmatpush1.bf16.msra.mxu0 0
  %448 = vmatprep.subr.bf16.mxu0 0
  %449 = vmatpush1.bf16.msra.mxu0 0
  %450 = vmatprep.subr.bf16.mxu0 0
  %451 = vmatpush1.bf16.msra.mxu0 0
  %452 = vmatprep.subr.bf16.mxu0 0
  %453 = vmatpush1.bf16.msra.mxu0 0
  %454 = vmatprep.subr.bf16.mxu0 0
  %455 = vmatpush1.bf16.msra.mxu0 0
  %456 = vmatprep.subr.bf16.mxu0 0
  %457 = vmatpush1.bf16.msra.mxu0 0
  %458 = vmatprep.subr.bf16.mxu0 0
  %459 = vmatpush1.bf16.msra.mxu0 0
  %460 = vmatprep.mubr.bf16.mxu0 0
  %461 = vmatmul.mubr.bf16.gmra.mrb[0].mxu0 %v329
  %v462 = vpop.f32.mrb[0].mxu0
  %v463 = vadd.f32 0.0, %v462
  %v464 = vpop.f32.mrb[0].mxu0
  %v465 = vpop.f32.mrb[0].mxu0
  %v466 = vadd.f32 0.0, %v465
  %v467 = vpop.f32.mrb[0].mxu0
  %468 = vmatprep.mubr.bf16.mxu0 0
  %469 = vmatmul.mubr.bf16.gmra.mrb[0].mxu0 %v332
  %v470 = vpop.f32.mrb[0].mxu0
  %v471 = vadd.f32 0.0, %v470
  %v472 = vpop.f32.mrb[0].mxu0
  %v473 = vpop.f32.mrb[0].mxu0
  %v474 = vadd.f32 0.0, %v473
  %v475 = vpop.f32.mrb[0].mxu0
  %476 = vmatprep.mubr.bf16.mxu0 0
  %477 = vmatmul.mubr.bf16.gmra.mrb[0].mxu0 %v335
  %v478 = vpop.f32.mrb[0].mxu0
  %v479 = vadd.f32 0.0, %v478
  %v480 = vpop.f32.mrb[0].mxu0
  %v481 = vpop.f32.mrb[0].mxu0
  %v482 = vadd.f32 0.0, %v481
  %v483 = vpop.f32.mrb[0].mxu0
  %484 = vmatprep.mubr.bf16.mxu0 0
  %485 = vmatmul.mubr.bf16.gmra.mrb[0].mxu0 %v338
  %v486 = vpop.f32.mrb[0].mxu0
  %v487 = vadd.f32 0.0, %v486
  %v488 = vpop.f32.mrb[0].mxu0
  %v489 = vpop.f32.mrb[0].mxu0
  %v490 = vadd.f32 0.0, %v489
  %v491 = vpop.f32.mrb[0].mxu0
  %492 = vmatprep.mubr.bf16.mxu0 0
  %493 = vmatmul.mubr.bf16.gmra.mrb[0].mxu0 %v341
  %v494 = vpop.f32.mrb[0].mxu0
  %v495 = vadd.f32 0.0, %v494
  %v496 = vpop.f32.mrb[0].mxu0
  %v497 = vpop.f32.mrb[0].mxu0
  %v498 = vadd.f32 0.0, %v497
  %v499 = vpop.f32.mrb[0].mxu0
  %500 = vmatprep.mubr.bf16.mxu0 0
  %501 = vmatmul.mubr.bf16.gmra.mrb[0].mxu0 %v344
  %v502 = vpop.f32.mrb[0].mxu0
  %v503 = vadd.f32 0.0, %v502
  %v504 = vpop.f32.mrb[0].mxu0
  %v505 = vpop.f32.mrb[0].mxu0
  %v506 = vadd.f32 0.0, %v505
  %v507 = vpop.f32.mrb[0].mxu0
  %508 = vmatprep.mubr.bf16.mxu0 0
  %509 = vmatmul.mubr.bf16.gmra.mrb[0].mxu0 %v347
  %v510 = vpop.f32.mrb[0].mxu0
  %v511 = vadd.f32 0.0, %v510
  %v512 = vpop.f32.mrb[0].mxu0
  %v513 = vpop.f32.mrb[0].mxu0
  %v514 = vadd.f32 0.0, %v513
  %v515 = vpop.f32.mrb[0].mxu0
  %516 = vmatprep.mubr.bf16.mxu0 0
  %517 = vmatmul.mubr.bf16.gmra.mrb[0].mxu0 %v350
  %v518 = vpop.f32.mrb[0].mxu0
  %v519 = vadd.f32 0.0, %v518
  %v520 = vpop.f32.mrb[0].mxu0
  %v521 = vpop.f32.mrb[0].mxu0
  %v522 = vadd.f32 0.0, %v521
  %v523 = vpop.f32.mrb[0].mxu0
  %524 = vmatprep.mubr.bf16.mxu0 0
  %525 = vmatmul.mubr.bf16.gmra.mrb[0].mxu0 %v353
  %v526 = vpop.f32.mrb[0].mxu0
  %v527 = vadd.f32 0.0, %v526
  %v528 = vpop.f32.mrb[0].mxu0
  %v529 = vpop.f32.mrb[0].mxu0
  %v530 = vadd.f32 0.0, %v529
  %v531 = vpop.f32.mrb[0].mxu0
  %532 = vmatprep.mubr.bf16.mxu0 0
  %533 = vmatmul.mubr.bf16.gmra.mrb[0].mxu0 %v356
  %v534 = vpop.f32.mrb[0].mxu0
  %v535 = vadd.f32 0.0, %v534
  %v536 = vpop.f32.mrb[0].mxu0
  %v537 = vpop.f32.mrb[0].mxu0
  %v538 = vadd.f32 0.0, %v537
  %v539 = vpop.f32.mrb[0].mxu0
  %540 = vmatprep.mubr.bf16.mxu0 0
  %541 = vmatmul.mubr.bf16.gmra.mrb[0].mxu0 %v359
  %v542 = vpop.f32.mrb[0].mxu0
  %v543 = vadd.f32 0.0, %v542
  %v544 = vpop.f32.mrb[0].mxu0
  %v545 = vpop.f32.mrb[0].mxu0
  %v546 = vadd.f32 0.0, %v545
  %v547 = vpop.f32.mrb[0].mxu0
  %548 = vmatprep.mubr.bf16.mxu0 0
  %549 = vmatmul.mubr.bf16.gmra.mrb[0].mxu0 %v362
  %v550 = vpop.f32.mrb[0].mxu0
  %v551 = vadd.f32 0.0, %v550
  %v552 = vpop.f32.mrb[0].mxu0
  %v553 = vpop.f32.mrb[0].mxu0
  %v554 = vadd.f32 0.0, %v553
  %v555 = vpop.f32.mrb[0].mxu0
  %556 = vmatprep.mubr.bf16.mxu0 0
  %557 = vmatmul.mubr.bf16.gmra.mrb[0].mxu0 %v365
  %v558 = vpop.f32.mrb[0].mxu0
  %v559 = vadd.f32 0.0, %v558
  %v560 = vpop.f32.mrb[0].mxu0
  %v561 = vpop.f32.mrb[0].mxu0
  %v562 = vadd.f32 0.0, %v561
  %v563 = vpop.f32.mrb[0].mxu0
  %564 = vmatprep.mubr.bf16.mxu0 0
  %565 = vmatmul.mubr.bf16.gmra.mrb[0].mxu0 %v368
  %v566 = vpop.f32.mrb[0].mxu0
  %v567 = vadd.f32 0.0, %v566
  %v568 = vpop.f32.mrb[0].mxu0
  %v569 = vpop.f32.mrb[0].mxu0
  %v570 = vadd.f32 0.0, %v569
  %v571 = vpop.f32.mrb[0].mxu0
  %572 = vmatprep.mubr.bf16.mxu0 0
  %573 = vmatmul.mubr.bf16.gmra.mrb[0].mxu0 %v371
  %v574 = vpop.f32.mrb[0].mxu0
  %v575 = vadd.f32 0.0, %v574
  %v576 = vpop.f32.mrb[0].mxu0
  %v577 = vpop.f32.mrb[0].mxu0
  %v578 = vadd.f32 0.0, %v577
  %v579 = vpop.f32.mrb[0].mxu0
  %580 = vmatprep.mubr.bf16.mxu0 0
  %581 = vmatmul.mubr.bf16.gmra.mrb[0].mxu0 %v374
  %v582 = vpop.f32.mrb[0].mxu0
  %v583 = vadd.f32 0.0, %v582
  %v584 = vpop.f32.mrb[0].mxu0
  %v585 = vpop.f32.mrb[0].mxu0
  %v586 = vadd.f32 0.0, %v585
  %v587 = vpop.f32.mrb[0].mxu0
  %588 = vmatprep.mubr.bf16.mxu0 0
  %589 = vmatmul.mubr.bf16.gmra.mrb[0].mxu0 %v377
  %v590 = vpop.f32.mrb[0].mxu0
  %v591 = vadd.f32 0.0, %v590
  %v592 = vpop.f32.mrb[0].mxu0
  %v593 = vpop.f32.mrb[0].mxu0
  %v594 = vadd.f32 0.0, %v593
  %v595 = vpop.f32.mrb[0].mxu0
  %596 = vmatprep.mubr.bf16.mxu0 0
  %597 = vmatmul.mubr.bf16.gmra.mrb[0].mxu0 %v380
  %v598 = vpop.f32.mrb[0].mxu0
  %v599 = vadd.f32 0.0, %v598
  %v600 = vpop.f32.mrb[0].mxu0
  %v601 = vpop.f32.mrb[0].mxu0
  %v602 = vadd.f32 0.0, %v601
  %v603 = vpop.f32.mrb[0].mxu0
  %604 = vmatprep.mubr.bf16.mxu0 0
  %605 = vmatmul.mubr.bf16.gmra.mrb[0].mxu0 %v383
  %v606 = vpop.f32.mrb[0].mxu0
  %v607 = vadd.f32 0.0, %v606
  %v608 = vpop.f32.mrb[0].mxu0
  %v609 = vpop.f32.mrb[0].mxu0
  %v610 = vadd.f32 0.0, %v609
  %v611 = vpop.f32.mrb[0].mxu0
  %612 = vmatprep.mubr.bf16.mxu0 0
  %613 = vmatmul.mubr.bf16.gmra.mrb[0].mxu0 %v386
  %v614 = vpop.f32.mrb[0].mxu0
  %v615 = vadd.f32 0.0, %v614
  %v616 = vpop.f32.mrb[0].mxu0
  %v617 = vpop.f32.mrb[0].mxu0
  %v618 = vadd.f32 0.0, %v617
  %v619 = vpop.f32.mrb[0].mxu0
  %620 = vmatprep.mubr.bf16.mxu0 0
  %621 = vmatmul.mubr.bf16.gmra.mrb[0].mxu0 %v389
  %v622 = vpop.f32.mrb[0].mxu0
  %v623 = vadd.f32 0.0, %v622
  %v624 = vpop.f32.mrb[0].mxu0
  %v625 = vpop.f32.mrb[0].mxu0
  %v626 = vadd.f32 0.0, %v625
  %v627 = vpop.f32.mrb[0].mxu0
  %628 = vmatprep.mubr.bf16.mxu0 0
  %629 = vmatmul.mubr.bf16.gmra.mrb[0].mxu0 %v392
  %v630 = vpop.f32.mrb[0].mxu0
  %v631 = vadd.f32 0.0, %v630
  %v632 = vpop.f32.mrb[0].mxu0
  %v633 = vpop.f32.mrb[0].mxu0
  %v634 = vadd.f32 0.0, %v633
  %v635 = vpop.f32.mrb[0].mxu0
  %636 = vmatprep.mubr.bf16.mxu0 0
  %637 = vmatmul.mubr.bf16.gmra.mrb[0].mxu0 %v395
  %v638 = vpop.f32.mrb[0].mxu0
  %v639 = vadd.f32 0.0, %v638
  %v640 = vpop.f32.mrb[0].mxu0
  %v641 = vpop.f32.mrb[0].mxu0
  %v642 = vadd.f32 0.0, %v641
  %v643 = vpop.f32.mrb[0].mxu0
  %644 = vmatprep.mubr.bf16.mxu0 0
  %645 = vmatmul.mubr.bf16.gmra.mrb[0].mxu0 %v398
  %v646 = vpop.f32.mrb[0].mxu0
  %v647 = vadd.f32 0.0, %v646
  %v648 = vpop.f32.mrb[0].mxu0
  %v649 = vpop.f32.mrb[0].mxu0
  %v650 = vadd.f32 0.0, %v649
  %v651 = vpop.f32.mrb[0].mxu0
  %652 = vmatprep.mubr.bf16.mxu0 0
  %653 = vmatmul.mubr.bf16.gmra.mrb[0].mxu0 %v401
  %v654 = vpop.f32.mrb[0].mxu0
  %v655 = vadd.f32 0.0, %v654
  %v656 = vpop.f32.mrb[0].mxu0
  %v657 = vpop.f32.mrb[0].mxu0
  %v658 = vadd.f32 0.0, %v657
  %v659 = vpop.f32.mrb[0].mxu0
  %660 = vmatprep.mubr.bf16.mxu0 0
  %661 = vmatmul.mubr.bf16.gmra.mrb[0].mxu0 %v404
  %v662 = vpop.f32.mrb[0].mxu0
  %v663 = vadd.f32 0.0, %v662
  %v664 = vpop.f32.mrb[0].mxu0
  %v665 = vpop.f32.mrb[0].mxu0
  %v666 = vadd.f32 0.0, %v665
  %v667 = vpop.f32.mrb[0].mxu0
  %668 = vmatprep.mubr.bf16.mxu0 0
  %669 = vmatmul.mubr.bf16.gmra.mrb[0].mxu0 %v407
  %v670 = vpop.f32.mrb[0].mxu0
  %v671 = vadd.f32 0.0, %v670
  %v672 = vpop.f32.mrb[0].mxu0
  %v673 = vpop.f32.mrb[0].mxu0
  %v674 = vadd.f32 0.0, %v673
  %v675 = vpop.f32.mrb[0].mxu0
  %676 = vmatprep.mubr.bf16.mxu0 0
  %677 = vmatmul.mubr.bf16.gmra.mrb[0].mxu0 %v410
  %v678 = vpop.f32.mrb[0].mxu0
  %v679 = vadd.f32 0.0, %v678
  %v680 = vpop.f32.mrb[0].mxu0
  %v681 = vpop.f32.mrb[0].mxu0
  %v682 = vadd.f32 0.0, %v681
  %v683 = vpop.f32.mrb[0].mxu0
  %684 = vmatprep.mubr.bf16.mxu0 0
  %685 = vmatmul.mubr.bf16.gmra.mrb[0].mxu0 %v413
  %v686 = vpop.f32.mrb[0].mxu0
  %v687 = vadd.f32 0.0, %v686
  %v688 = vpop.f32.mrb[0].mxu0
  %v689 = vpop.f32.mrb[0].mxu0
  %v690 = vadd.f32 0.0, %v689
  %v691 = vpop.f32.mrb[0].mxu0
  %692 = vmatprep.mubr.bf16.mxu0 0
  %693 = vmatmul.mubr.bf16.gmra.mrb[0].mxu0 %v416
  %v694 = vpop.f32.mrb[0].mxu0
  %v695 = vadd.f32 0.0, %v694
  %v696 = vpop.f32.mrb[0].mxu0
  %v697 = vpop.f32.mrb[0].mxu0
  %v698 = vadd.f32 0.0, %v697
  %v699 = vpop.f32.mrb[0].mxu0
  %700 = vmatprep.mubr.bf16.mxu0 0
  %701 = vmatmul.mubr.bf16.gmra.mrb[0].mxu0 %v419
  %v702 = vpop.f32.mrb[0].mxu0
  %v703 = vadd.f32 0.0, %v702
  %v704 = vpop.f32.mrb[0].mxu0
  %v705 = vpop.f32.mrb[0].mxu0
  %v706 = vadd.f32 0.0, %v705
  %v707 = vpop.f32.mrb[0].mxu0
  %708 = vmatprep.mubr.bf16.mxu0 0
  %709 = vmatmul.mubr.bf16.gmra.mrb[0].mxu0 %v422
  %v710 = vpop.f32.mrb[0].mxu0
  %v711 = vadd.f32 0.0, %v710
  %v712 = vpop.f32.mrb[0].mxu0
  %v713 = vpop.f32.mrb[0].mxu0
  %v714 = vadd.f32 0.0, %v713
  %v715 = vpop.f32.mrb[0].mxu0
  %716 = vdwg.mxu0
  %v717 = vld [vmem:[%s4] sm:$0x1]
  %v719 = vlaneseq
  %v720 = vshrl.u32 %v719, 7
  %v721 = vsub.s32 0, %v720
  %v722 = vrot.slane %v717, %v721
  %v724 = vmul.f32 %v463, %v722
  %v725 = vmul.f32 %v466, %v722
  %v726 = vmul.f32 %v471, %v722
  %v727 = vmul.f32 %v474, %v722
  %v728 = vmul.f32 %v479, %v722
  %v729 = vmul.f32 %v482, %v722
  %v730 = vmul.f32 %v487, %v722
  %v731 = vmul.f32 %v490, %v722
  %v732 = vmul.f32 %v495, %v722
  %v733 = vmul.f32 %v498, %v722
  %v734 = vmul.f32 %v503, %v722
  %v735 = vmul.f32 %v506, %v722
  %v736 = vmul.f32 %v511, %v722
  %v737 = vmul.f32 %v514, %v722
  %v738 = vmul.f32 %v519, %v722
  %v739 = vmul.f32 %v522, %v722
  %v740 = vmul.f32 %v527, %v722
  %v741 = vmul.f32 %v530, %v722
  %v742 = vmul.f32 %v535, %v722
  %v743 = vmul.f32 %v538, %v722
  %v744 = vmul.f32 %v543, %v722
  %v745 = vmul.f32 %v546, %v722
  %v746 = vmul.f32 %v551, %v722
  %v747 = vmul.f32 %v554, %v722
  %v748 = vmul.f32 %v559, %v722
  %v749 = vmul.f32 %v562, %v722
  %v750 = vmul.f32 %v567, %v722
  %v751 = vmul.f32 %v570, %v722
  %v752 = vmul.f32 %v575, %v722
  %v753 = vmul.f32 %v578, %v722
  %v754 = vmul.f32 %v583, %v722
  %v755 = vmul.f32 %v586, %v722
  %v756 = vmul.f32 %v591, %v722
  %v757 = vmul.f32 %v594, %v722
  %v758 = vmul.f32 %v599, %v722
  %v759 = vmul.f32 %v602, %v722
  %v760 = vmul.f32 %v607, %v722
  %v761 = vmul.f32 %v610, %v722
  %v762 = vmul.f32 %v615, %v722
  %v763 = vmul.f32 %v618, %v722
  %v764 = vmul.f32 %v623, %v722
  %v765 = vmul.f32 %v626, %v722
  %v766 = vmul.f32 %v631, %v722
  %v767 = vmul.f32 %v634, %v722
  %v768 = vmul.f32 %v639, %v722
  %v769 = vmul.f32 %v642, %v722
  %v770 = vmul.f32 %v647, %v722
  %v771 = vmul.f32 %v650, %v722
  %v772 = vmul.f32 %v655, %v722
  %v773 = vmul.f32 %v658, %v722
  %v774 = vmul.f32 %v663, %v722
  %v775 = vmul.f32 %v666, %v722
  %v776 = vmul.f32 %v671, %v722
  %v777 = vmul.f32 %v674, %v722
  %v778 = vmul.f32 %v679, %v722
  %v779 = vmul.f32 %v682, %v722
  %v780 = vmul.f32 %v687, %v722
  %v781 = vmul.f32 %v690, %v722
  %v782 = vmul.f32 %v695, %v722
  %v783 = vmul.f32 %v698, %v722
  %v784 = vmul.f32 %v703, %v722
  %v785 = vmul.f32 %v706, %v722
  %v786 = vmul.f32 %v711, %v722
  %v787 = vmul.f32 %v714, %v722
  %v788 = vld [vmem:[%s5] sm:$0x1]
  %v790 = vlaneseq
  %v791 = vshrl.u32 %v790, 7
  %v792 = vsub.s32 0, %v791
  %v793 = vrot.slane %v788, %v792
  %v795 = vadd.f32 %v724, %v793
  %v796 = vadd.f32 %v725, %v793
  %v797 = vadd.f32 %v726, %v793
  %v798 = vadd.f32 %v727, %v793
  %v799 = vadd.f32 %v728, %v793
  %v800 = vadd.f32 %v729, %v793
  %v801 = vadd.f32 %v730, %v793
  %v802 = vadd.f32 %v731, %v793
  %v803 = vadd.f32 %v732, %v793
  %v804 = vadd.f32 %v733, %v793
  %v805 = vadd.f32 %v734, %v793
  %v806 = vadd.f32 %v735, %v793
  %v807 = vadd.f32 %v736, %v793
  %v808 = vadd.f32 %v737, %v793
  %v809 = vadd.f32 %v738, %v793
  %v810 = vadd.f32 %v739, %v793
  %v811 = vadd.f32 %v740, %v793
  %v812 = vadd.f32 %v741, %v793
  %v813 = vadd.f32 %v742, %v793
  %v814 = vadd.f32 %v743, %v793
  %v815 = vadd.f32 %v744, %v793
  %v816 = vadd.f32 %v745, %v793
  %v817 = vadd.f32 %v746, %v793
  %v818 = vadd.f32 %v747, %v793
  %v819 = vadd.f32 %v748, %v793
  %v820 = vadd.f32 %v749, %v793
  %v821 = vadd.f32 %v750, %v793
  %v822 = vadd.f32 %v751, %v793
  %v823 = vadd.f32 %v752, %v793
  %v824 = vadd.f32 %v753, %v793
  %v825 = vadd.f32 %v754, %v793
  %v826 = vadd.f32 %v755, %v793
  %v827 = vadd.f32 %v756, %v793
  %v828 = vadd.f32 %v757, %v793
  %v829 = vadd.f32 %v758, %v793
  %v830 = vadd.f32 %v759, %v793
  %v831 = vadd.f32 %v760, %v793
  %v832 = vadd.f32 %v761, %v793
  %v833 = vadd.f32 %v762, %v793
  %v834 = vadd.f32 %v763, %v793
  %v835 = vadd.f32 %v764, %v793
  %v836 = vadd.f32 %v765, %v793
  %v837 = vadd.f32 %v766, %v793
  %v838 = vadd.f32 %v767, %v793
  %v839 = vadd.f32 %v768, %v793
  %v840 = vadd.f32 %v769, %v793
  %v841 = vadd.f32 %v770, %v793
  %v842 = vadd.f32 %v771, %v793
  %v843 = vadd.f32 %v772, %v793
  %v844 = vadd.f32 %v773, %v793
  %v845 = vadd.f32 %v774, %v793
  %v846 = vadd.f32 %v775, %v793
  %v847 = vadd.f32 %v776, %v793
  %v848 = vadd.f32 %v777, %v793
  %v849 = vadd.f32 %v778, %v793
  %v850 = vadd.f32 %v779, %v793
  %v851 = vadd.f32 %v780, %v793
  %v852 = vadd.f32 %v781, %v793
  %v853 = vadd.f32 %v782, %v793
  %v854 = vadd.f32 %v783, %v793
  %v855 = vadd.f32 %v784, %v793
  %v856 = vadd.f32 %v785, %v793
  %v857 = vadd.f32 %v786, %v793
  %v858 = vadd.f32 %v787, %v793
  %v859 = vmax.f32 %v795, 0.0
  %v860 = vmax.f32 %v796, 0.0
  %v861 = vmax.f32 %v797, 0.0
  %v862 = vmax.f32 %v798, 0.0
  %v863 = vmax.f32 %v799, 0.0
  %v864 = vmax.f32 %v800, 0.0
  %v865 = vmax.f32 %v801, 0.0
  %v866 = vmax.f32 %v802, 0.0
  %v867 = vmax.f32 %v803, 0.0
  %v868 = vmax.f32 %v804, 0.0
  %v869 = vmax.f32 %v805, 0.0
  %v870 = vmax.f32 %v806, 0.0
  %v871 = vmax.f32 %v807, 0.0
  %v872 = vmax.f32 %v808, 0.0
  %v873 = vmax.f32 %v809, 0.0
  %v874 = vmax.f32 %v810, 0.0
  %v875 = vmax.f32 %v811, 0.0
  %v876 = vmax.f32 %v812, 0.0
  %v877 = vmax.f32 %v813, 0.0
  %v878 = vmax.f32 %v814, 0.0
  %v879 = vmax.f32 %v815, 0.0
  %v880 = vmax.f32 %v816, 0.0
  %v881 = vmax.f32 %v817, 0.0
  %v882 = vmax.f32 %v818, 0.0
  %v883 = vmax.f32 %v819, 0.0
  %v884 = vmax.f32 %v820, 0.0
  %v885 = vmax.f32 %v821, 0.0
  %v886 = vmax.f32 %v822, 0.0
  %v887 = vmax.f32 %v823, 0.0
  %v888 = vmax.f32 %v824, 0.0
  %v889 = vmax.f32 %v825, 0.0
  %v890 = vmax.f32 %v826, 0.0
  %v891 = vmax.f32 %v827, 0.0
  %v892 = vmax.f32 %v828, 0.0
  %v893 = vmax.f32 %v829, 0.0
  %v894 = vmax.f32 %v830, 0.0
  %v895 = vmax.f32 %v831, 0.0
  %v896 = vmax.f32 %v832, 0.0
  %v897 = vmax.f32 %v833, 0.0
  %v898 = vmax.f32 %v834, 0.0
  %v899 = vmax.f32 %v835, 0.0
  %v900 = vmax.f32 %v836, 0.0
  %v901 = vmax.f32 %v837, 0.0
  %v902 = vmax.f32 %v838, 0.0
  %v903 = vmax.f32 %v839, 0.0
  %v904 = vmax.f32 %v840, 0.0
  %v905 = vmax.f32 %v841, 0.0
  %v906 = vmax.f32 %v842, 0.0
  %v907 = vmax.f32 %v843, 0.0
  %v908 = vmax.f32 %v844, 0.0
  %v909 = vmax.f32 %v845, 0.0
  %v910 = vmax.f32 %v846, 0.0
  %v911 = vmax.f32 %v847, 0.0
  %v912 = vmax.f32 %v848, 0.0
  %v913 = vmax.f32 %v849, 0.0
  %v914 = vmax.f32 %v850, 0.0
  %v915 = vmax.f32 %v851, 0.0
  %v916 = vmax.f32 %v852, 0.0
  %v917 = vmax.f32 %v853, 0.0
  %v918 = vmax.f32 %v854, 0.0
  %v919 = vmax.f32 %v855, 0.0
  %v920 = vmax.f32 %v856, 0.0
  %v921 = vmax.f32 %v857, 0.0
  %v922 = vmax.f32 %v858, 0.0
  %v923 = vpack.c.bf16 %v860, %v859
  %v924 = vpack.c.bf16 %v862, %v861
  %v925 = vpack.c.bf16 %v864, %v863
  %v926 = vpack.c.bf16 %v866, %v865
  %v927 = vpack.c.bf16 %v868, %v867
  %v928 = vpack.c.bf16 %v870, %v869
  %v929 = vpack.c.bf16 %v872, %v871
  %v930 = vpack.c.bf16 %v874, %v873
  %v931 = vpack.c.bf16 %v876, %v875
  %v932 = vpack.c.bf16 %v878, %v877
  %v933 = vpack.c.bf16 %v880, %v879
  %v934 = vpack.c.bf16 %v882, %v881
  %v935 = vpack.c.bf16 %v884, %v883
  %v936 = vpack.c.bf16 %v886, %v885
  %v937 = vpack.c.bf16 %v888, %v887
  %v938 = vpack.c.bf16 %v890, %v889
  %v939 = vpack.c.bf16 %v892, %v891
  %v940 = vpack.c.bf16 %v894, %v893
  %v941 = vpack.c.bf16 %v896, %v895
  %v942 = vpack.c.bf16 %v898, %v897
  %v943 = vpack.c.bf16 %v900, %v899
  %v944 = vpack.c.bf16 %v902, %v901
  %v945 = vpack.c.bf16 %v904, %v903
  %v946 = vpack.c.bf16 %v906, %v905
  %v947 = vpack.c.bf16 %v908, %v907
  %v948 = vpack.c.bf16 %v910, %v909
  %v949 = vpack.c.bf16 %v912, %v911
  %v950 = vpack.c.bf16 %v914, %v913
  %v951 = vpack.c.bf16 %v916, %v915
  %v952 = vpack.c.bf16 %v918, %v917
  %v953 = vpack.c.bf16 %v920, %v919
  %v954 = vpack.c.bf16 %v922, %v921
  %v987 = vunpack.c.l.b16 %v923
  %v988 = vunpack.c.h.b16 %v923
  %v989 = vunpack.c.l.b16 %v924
  %v990 = vunpack.c.h.b16 %v924
  %v991 = vunpack.c.l.b16 %v925
  %v992 = vunpack.c.h.b16 %v925
  %v993 = vunpack.c.l.b16 %v926
  %v994 = vunpack.c.h.b16 %v926
  %v995 = vunpack.c.l.b16 %v927
  %v996 = vunpack.c.h.b16 %v927
  %v997 = vunpack.c.l.b16 %v928
  %v998 = vunpack.c.h.b16 %v928
  %v999 = vunpack.c.l.b16 %v929
  %v1000 = vunpack.c.h.b16 %v929
  %v1001 = vunpack.c.l.b16 %v930
  %v1002 = vunpack.c.h.b16 %v930
  %v1003 = vunpack.c.l.b16 %v931
  %v1004 = vunpack.c.h.b16 %v931
  %v1005 = vunpack.c.l.b16 %v932
  %v1006 = vunpack.c.h.b16 %v932
  %v1007 = vunpack.c.l.b16 %v933
  %v1008 = vunpack.c.h.b16 %v933
  %v1009 = vunpack.c.l.b16 %v934
  %v1010 = vunpack.c.h.b16 %v934
  %v1011 = vunpack.c.l.b16 %v935
  %v1012 = vunpack.c.h.b16 %v935
  %v1013 = vunpack.c.l.b16 %v936
  %v1014 = vunpack.c.h.b16 %v936
  %v1015 = vunpack.c.l.b16 %v937
  %v1016 = vunpack.c.h.b16 %v937
  %v1017 = vunpack.c.l.b16 %v938
  %v1018 = vunpack.c.h.b16 %v938
  %v1019 = vunpack.c.l.b16 %v939
  %v1020 = vunpack.c.h.b16 %v939
  %v1021 = vunpack.c.l.b16 %v940
  %v1022 = vunpack.c.h.b16 %v940
  %v1023 = vunpack.c.l.b16 %v941
  %v1024 = vunpack.c.h.b16 %v941
  %v1025 = vunpack.c.l.b16 %v942
  %v1026 = vunpack.c.h.b16 %v942
  %v1027 = vunpack.c.l.b16 %v943
  %v1028 = vunpack.c.h.b16 %v943
  %v1029 = vunpack.c.l.b16 %v944
  %v1030 = vunpack.c.h.b16 %v944
  %v1031 = vunpack.c.l.b16 %v945
  %v1032 = vunpack.c.h.b16 %v945
  %v1033 = vunpack.c.l.b16 %v946
  %v1034 = vunpack.c.h.b16 %v946
  %v1035 = vunpack.c.l.b16 %v947
  %v1036 = vunpack.c.h.b16 %v947
  %v1037 = vunpack.c.l.b16 %v948
  %v1038 = vunpack.c.h.b16 %v948
  %v1039 = vunpack.c.l.b16 %v949
  %v1040 = vunpack.c.h.b16 %v949
  %v1041 = vunpack.c.l.b16 %v950
  %v1042 = vunpack.c.h.b16 %v950
  %v1043 = vunpack.c.l.b16 %v951
  %v1044 = vunpack.c.h.b16 %v951
  %v1045 = vunpack.c.l.b16 %v952
  %v1046 = vunpack.c.h.b16 %v952
  %v1047 = vunpack.c.l.b16 %v953
  %v1048 = vunpack.c.h.b16 %v953
  %v1049 = vunpack.c.l.b16 %v954
  %v1050 = vunpack.c.h.b16 %v954
  %v1051 = vpack.c.b16 %v987, %v987
  %v1052 = vpack.c.b16 %v988, %v988
  %v1053 = vpack.c.b16 %v989, %v989
  %v1054 = vpack.c.b16 %v990, %v990
  %v1055 = vpack.c.b16 %v991, %v991
  %v1056 = vpack.c.b16 %v992, %v992
  %v1057 = vpack.c.b16 %v993, %v993
  %v1058 = vpack.c.b16 %v994, %v994
  %v1059 = vpack.c.b16 %v995, %v995
  %v1060 = vpack.c.b16 %v996, %v996
  %v1061 = vpack.c.b16 %v997, %v997
  %v1062 = vpack.c.b16 %v998, %v998
  %v1063 = vpack.c.b16 %v999, %v999
  %v1064 = vpack.c.b16 %v1000, %v1000
  %v1065 = vpack.c.b16 %v1001, %v1001
  %v1066 = vpack.c.b16 %v1002, %v1002
  %v1067 = vpack.c.b16 %v1003, %v1003
  %v1068 = vpack.c.b16 %v1004, %v1004
  %v1069 = vpack.c.b16 %v1005, %v1005
  %v1070 = vpack.c.b16 %v1006, %v1006
  %v1071 = vpack.c.b16 %v1007, %v1007
  %v1072 = vpack.c.b16 %v1008, %v1008
  %v1073 = vpack.c.b16 %v1009, %v1009
  %v1074 = vpack.c.b16 %v1010, %v1010
  %v1075 = vpack.c.b16 %v1011, %v1011
  %v1076 = vpack.c.b16 %v1012, %v1012
  %v1077 = vpack.c.b16 %v1013, %v1013
  %v1078 = vpack.c.b16 %v1014, %v1014
  %v1079 = vpack.c.b16 %v1015, %v1015
  %v1080 = vpack.c.b16 %v1016, %v1016
  %v1081 = vpack.c.b16 %v1017, %v1017
  %v1082 = vpack.c.b16 %v1018, %v1018
  %v1083 = vpack.c.b16 %v1019, %v1019
  %v1084 = vpack.c.b16 %v1020, %v1020
  %v1085 = vpack.c.b16 %v1021, %v1021
  %v1086 = vpack.c.b16 %v1022, %v1022
  %v1087 = vpack.c.b16 %v1023, %v1023
  %v1088 = vpack.c.b16 %v1024, %v1024
  %v1089 = vpack.c.b16 %v1025, %v1025
  %v1090 = vpack.c.b16 %v1026, %v1026
  %v1091 = vpack.c.b16 %v1027, %v1027
  %v1092 = vpack.c.b16 %v1028, %v1028
  %v1093 = vpack.c.b16 %v1029, %v1029
  %v1094 = vpack.c.b16 %v1030, %v1030
  %v1095 = vpack.c.b16 %v1031, %v1031
  %v1096 = vpack.c.b16 %v1032, %v1032
  %v1097 = vpack.c.b16 %v1033, %v1033
  %v1098 = vpack.c.b16 %v1034, %v1034
  %v1099 = vpack.c.b16 %v1035, %v1035
  %v1100 = vpack.c.b16 %v1036, %v1036
  %v1101 = vpack.c.b16 %v1037, %v1037
  %v1102 = vpack.c.b16 %v1038, %v1038
  %v1103 = vpack.c.b16 %v1039, %v1039
  %v1104 = vpack.c.b16 %v1040, %v1040
  %v1105 = vpack.c.b16 %v1041, %v1041
  %v1106 = vpack.c.b16 %v1042, %v1042
  %v1107 = vpack.c.b16 %v1043, %v1043
  %v1108 = vpack.c.b16 %v1044, %v1044
  %v1109 = vpack.c.b16 %v1045, %v1045
  %v1110 = vpack.c.b16 %v1046, %v1046
  %v1111 = vpack.c.b16 %v1047, %v1047
  %v1112 = vpack.c.b16 %v1048, %v1048
  %v1113 = vpack.c.b16 %v1049, %v1049
  %v1114 = vpack.c.b16 %v1050, %v1050
  %vm1179 = vcmask 27648
  %1180 = vst.msk [vmem:[%s6] sm:$0xf] %vm1179, %v1051
  %1181 = vst.msk [vmem:[%s6 + $0x4] sm:$0xf] %vm1179, %v1052
  %1182 = vst.msk [vmem:[%s6 + $0x8] sm:$0xf] %vm1179, %v1053
  %1183 = vst.msk [vmem:[%s6 + $0xc] sm:$0xf] %vm1179, %v1054
  %1184 = vst.msk [vmem:[%s6 + $0x10] sm:$0xf] %vm1179, %v1055
  %1185 = vst.msk [vmem:[%s6 + $0x14] sm:$0xf] %vm1179, %v1056
  %1186 = vst.msk [vmem:[%s6 + $0x18] sm:$0xf] %vm1179, %v1057
  %1187 = vst.msk [vmem:[%s6 + $0x1c] sm:$0xf] %vm1179, %v1058
  %1188 = vst.msk [vmem:[%s6 + $0x20] sm:$0xf] %vm1179, %v1059
  %1189 = vst.msk [vmem:[%s6 + $0x24] sm:$0xf] %vm1179, %v1060
  %1190 = vst.msk [vmem:[%s6 + $0x28] sm:$0xf] %vm1179, %v1061
  %1191 = vst.msk [vmem:[%s6 + $0x2c] sm:$0xf] %vm1179, %v1062
  %1192 = vst.msk [vmem:[%s6 + $0x30] sm:$0xf] %vm1179, %v1063
  %1193 = vst.msk [vmem:[%s6 + $0x34] sm:$0xf] %vm1179, %v1064
  %1194 = vst.msk [vmem:[%s6 + $0x38] sm:$0xf] %vm1179, %v1065
  %1195 = vst.msk [vmem:[%s6 + $0x3c] sm:$0xf] %vm1179, %v1066
  %1196 = vst.msk [vmem:[%s6 + $0x40] sm:$0xf] %vm1179, %v1067
  %1197 = vst.msk [vmem:[%s6 + $0x44] sm:$0xf] %vm1179, %v1068
  %1198 = vst.msk [vmem:[%s6 + $0x48] sm:$0xf] %vm1179, %v1069
  %1199 = vst.msk [vmem:[%s6 + $0x4c] sm:$0xf] %vm1179, %v1070
  %1200 = vst.msk [vmem:[%s6 + $0x50] sm:$0xf] %vm1179, %v1071
  %1201 = vst.msk [vmem:[%s6 + $0x54] sm:$0xf] %vm1179, %v1072
  %1202 = vst.msk [vmem:[%s6 + $0x58] sm:$0xf] %vm1179, %v1073
  %1203 = vst.msk [vmem:[%s6 + $0x5c] sm:$0xf] %vm1179, %v1074
  %1204 = vst.msk [vmem:[%s6 + $0x60] sm:$0xf] %vm1179, %v1075
  %1205 = vst.msk [vmem:[%s6 + $0x64] sm:$0xf] %vm1179, %v1076
  %1206 = vst.msk [vmem:[%s6 + $0x68] sm:$0xf] %vm1179, %v1077
  %1207 = vst.msk [vmem:[%s6 + $0x6c] sm:$0xf] %vm1179, %v1078
  %1208 = vst.msk [vmem:[%s6 + $0x70] sm:$0xf] %vm1179, %v1079
  %1209 = vst.msk [vmem:[%s6 + $0x74] sm:$0xf] %vm1179, %v1080
  %1210 = vst.msk [vmem:[%s6 + $0x78] sm:$0xf] %vm1179, %v1081
  %1211 = vst.msk [vmem:[%s6 + $0x7c] sm:$0xf] %vm1179, %v1082
  %1212 = vst.msk [vmem:[%s6 + $0x80] sm:$0xf] %vm1179, %v1083
  %1213 = vst.msk [vmem:[%s6 + $0x84] sm:$0xf] %vm1179, %v1084
  %1214 = vst.msk [vmem:[%s6 + $0x88] sm:$0xf] %vm1179, %v1085
  %1215 = vst.msk [vmem:[%s6 + $0x8c] sm:$0xf] %vm1179, %v1086
  %1216 = vst.msk [vmem:[%s6 + $0x90] sm:$0xf] %vm1179, %v1087
  %1217 = vst.msk [vmem:[%s6 + $0x94] sm:$0xf] %vm1179, %v1088
  %1218 = vst.msk [vmem:[%s6 + $0x98] sm:$0xf] %vm1179, %v1089
  %1219 = vst.msk [vmem:[%s6 + $0x9c] sm:$0xf] %vm1179, %v1090
  %1220 = vst.msk [vmem:[%s6 + $0xa0] sm:$0xf] %vm1179, %v1091
  %1221 = vst.msk [vmem:[%s6 + $0xa4] sm:$0xf] %vm1179, %v1092
  %1222 = vst.msk [vmem:[%s6 + $0xa8] sm:$0xf] %vm1179, %v1093
  %1223 = vst.msk [vmem:[%s6 + $0xac] sm:$0xf] %vm1179, %v1094
  %1224 = vst.msk [vmem:[%s6 + $0xb0] sm:$0xf] %vm1179, %v1095
  %1225 = vst.msk [vmem:[%s6 + $0xb4] sm:$0xf] %vm1179, %v1096
  %1226 = vst.msk [vmem:[%s6 + $0xb8] sm:$0xf] %vm1179, %v1097
  %1227 = vst.msk [vmem:[%s6 + $0xbc] sm:$0xf] %vm1179, %v1098
  %1228 = vst.msk [vmem:[%s6 + $0xc0] sm:$0xf] %vm1179, %v1099
  %1229 = vst.msk [vmem:[%s6 + $0xc4] sm:$0xf] %vm1179, %v1100
  %1230 = vst.msk [vmem:[%s6 + $0xc8] sm:$0xf] %vm1179, %v1101
  %1231 = vst.msk [vmem:[%s6 + $0xcc] sm:$0xf] %vm1179, %v1102
  %1232 = vst.msk [vmem:[%s6 + $0xd0] sm:$0xf] %vm1179, %v1103
  %1233 = vst.msk [vmem:[%s6 + $0xd4] sm:$0xf] %vm1179, %v1104
  %1234 = vst.msk [vmem:[%s6 + $0xd8] sm:$0xf] %vm1179, %v1105
  %1235 = vst.msk [vmem:[%s6 + $0xdc] sm:$0xf] %vm1179, %v1106
  %1236 = vst.msk [vmem:[%s6 + $0xe0] sm:$0xf] %vm1179, %v1107
  %1237 = vst.msk [vmem:[%s6 + $0xe4] sm:$0xf] %vm1179, %v1108
  %1238 = vst.msk [vmem:[%s6 + $0xe8] sm:$0xf] %vm1179, %v1109
  %1239 = vst.msk [vmem:[%s6 + $0xec] sm:$0xf] %vm1179, %v1110
  %1240 = vst.msk [vmem:[%s6 + $0xf0] sm:$0xf] %vm1179, %v1111
  %1241 = vst.msk [vmem:[%s6 + $0xf4] sm:$0xf] %vm1179, %v1112
  %1242 = vst.msk [vmem:[%s6 + $0xf8] sm:$0xf] %vm1179, %v1113
  %1243 = vst.msk [vmem:[%s6 + $0xfc] sm:$0xf] %vm1179, %v1114
  // Predicated region
  $region26: #{preact_bottleneck_forward.3} parent=0 // pred_check
    _
  $region27: #{preact_bottleneck_forward.3} parent=0 // pred_check_branch
    %1245 = sbr.rel (0) target = $region29
  $region28: #{preact_bottleneck_forward.3} parent=0 // pred_region
    _
  $region29: #{preact_bottleneck_forward.3} parent=0 // pred_fallthru
    _
  // Predicated region
  $region30: #{preact_bottleneck_forward.3} parent=0 // pred_check
    _
  $region31: #{preact_bottleneck_forward.3} parent=0 // pred_check_branch
    %1247 = sbr.rel (0) target = $region33
  $region32: #{preact_bottleneck_forward.3} parent=0 // pred_region
    _
  $region33: #{preact_bottleneck_forward.3} parent=0 // pred_fallthru
    _

// kernel: preact_bottleneck_forward.5
$region0: #{preact_bottleneck_forward.5}
  #allocation0 [shape = 'u32[]', space=smem, size = 0x4, offset = 0x4, fixed_abs, tag = 'smem constant byte address 0x4 - core index']
  #allocation1 [shape = 'u32[144,128]{1,0:T(1,128)}', space=vmem, size = 0x12000, scoped, tag = 'internal scratch']
  %s0 = inlined_call_operand.vmem [shape: bf16[128,4], index: 0, kind: input, shape index: {}]
  %s1 = inlined_call_operand.vmem [shape: bf16[4,16], index: 1, kind: input, shape index: {}]
  %s2 = inlined_call_operand.vmem [shape: f32[128,4], index: 2, kind: input, shape index: {}]
  %s3 = inlined_call_operand.vmem [shape: bf16[4,16], index: 3, kind: input, shape index: {}]
  %s4 = inlined_call_operand.hbm [shape: f32[128,16], index: 4, kind: output, shape index: {}]
  %s5 = sld [smem:[#allocation0]]
  $region26: #{preact_bottleneck_forward.5} parent=0
    _
  %s7 = ssub.s32 1, %s5
  %s8 = scalar_select 0, %s7, %s5
  $region1: #{preact_bottleneck_forward.5} parent=0
    #allocation2 [shape = 'u8[65536]{0}', space=vmem, size = 0x10000, scoped, tag = 'output window, operand 0, single buffered']
    #allocation3 [shape = 's32[1]{0}', space=sflag, size = 0x4, scoped, tag = 'scoped memory for preact_bottleneck_forward.5']
    %9 = vsyncpa [#allocation3], 0
    // Predicated region
    $region2: #{preact_bottleneck_forward.5} parent=1 // pred_check
      _
    $region3: #{preact_bottleneck_forward.5} parent=1 // pred_check_branch
      %11 = sbr.rel (0) target = $region5
    $region4: #{preact_bottleneck_forward.5} parent=1 // pred_region
      _
    $region5: #{preact_bottleneck_forward.5} parent=1 // pred_fallthru
      _
    // Predicated region
    $region6: #{preact_bottleneck_forward.5} parent=1 // pred_check
      _
    $region7: #{preact_bottleneck_forward.5} parent=1 // pred_check_branch
      %13 = sbr.rel (0) target = $region9
    $region8: #{preact_bottleneck_forward.5} parent=1 // pred_region
      _
    $region9: #{preact_bottleneck_forward.5} parent=1 // pred_fallthru
      _
    // Predicated region
    $region10: #{preact_bottleneck_forward.5} parent=1 // pred_check
      _
    $region11: #{preact_bottleneck_forward.5} parent=1 // pred_check_branch
      %15 = sbr.rel (0) target = $region13
    $region12: #{preact_bottleneck_forward.5} parent=1 // pred_region
      _
    $region13: #{preact_bottleneck_forward.5} parent=1 // pred_fallthru
      _
    // Predicated region
    $region14: #{preact_bottleneck_forward.5} parent=1 // pred_check
      _
    $region15: #{preact_bottleneck_forward.5} parent=1 // pred_check_branch
      %17 = sbr.rel (0) target = $region17
    $region16: #{preact_bottleneck_forward.5} parent=1 // pred_region
      _
    $region17: #{preact_bottleneck_forward.5} parent=1 // pred_fallthru
      _
    %v19 = vld [vmem:[%s0] sm:$0xf]
    %v20 = vld [vmem:[%s0 + $0x4] sm:$0xf]
    %v21 = vld [vmem:[%s0 + $0x8] sm:$0xf]
    %v22 = vld [vmem:[%s0 + $0xc] sm:$0xf]
    %v23 = vld [vmem:[%s0 + $0x10] sm:$0xf]
    %v24 = vld [vmem:[%s0 + $0x14] sm:$0xf]
    %v25 = vld [vmem:[%s0 + $0x18] sm:$0xf]
    %v26 = vld [vmem:[%s0 + $0x1c] sm:$0xf]
    %v27 = vld [vmem:[%s0 + $0x20] sm:$0xf]
    %v28 = vld [vmem:[%s0 + $0x24] sm:$0xf]
    %v29 = vld [vmem:[%s0 + $0x28] sm:$0xf]
    %v30 = vld [vmem:[%s0 + $0x2c] sm:$0xf]
    %v31 = vld [vmem:[%s0 + $0x30] sm:$0xf]
    %v32 = vld [vmem:[%s0 + $0x34] sm:$0xf]
    %v33 = vld [vmem:[%s0 + $0x38] sm:$0xf]
    %v34 = vld [vmem:[%s0 + $0x3c] sm:$0xf]
    %v35 = vld [vmem:[%s1] sm:$0x3]
    %v36 = vld [vmem:[%s2] sm:$0xff]
    %v37 = vld [vmem:[%s2 + $0x8] sm:$0xff]
    %v38 = vld [vmem:[%s2 + $0x10] sm:$0xff]
    %v39 = vld [vmem:[%s2 + $0x18] sm:$0xff]
    %v40 = vld [vmem:[%s2 + $0x20] sm:$0xff]
    %v41 = vld [vmem:[%s2 + $0x28] sm:$0xff]
    %v42 = vld [vmem:[%s2 + $0x30] sm:$0xff]
    %v43 = vld [vmem:[%s2 + $0x38] sm:$0xff]
    %v44 = vld [vmem:[%s2 + $0x40] sm:$0xff]
    %v45 = vld [vmem:[%s2 + $0x48] sm:$0xff]
    %v46 = vld [vmem:[%s2 + $0x50] sm:$0xff]
    %v47 = vld [vmem:[%s2 + $0x58] sm:$0xff]
    %v48 = vld [vmem:[%s2 + $0x60] sm:$0xff]
    %v49 = vld [vmem:[%s2 + $0x68] sm:$0xff]
    %v50 = vld [vmem:[%s2 + $0x70] sm:$0xff]
    %v51 = vld [vmem:[%s2 + $0x78] sm:$0xff]
    %v52 = vpack.c.bf16 %v37, %v36
    %v53 = vpack.c.bf16 %v39, %v38
    %v54 = vpack.c.bf16 %v41, %v40
    %v55 = vpack.c.bf16 %v43, %v42
    %v56 = vpack.c.bf16 %v45, %v44
    %v57 = vpack.c.bf16 %v47, %v46
    %v58 = vpack.c.bf16 %v49, %v48
    %v59 = vpack.c.bf16 %v51, %v50
    %v60 = vld [vmem:[%s3] sm:$0x3]
    %vm61 = vcmask 31744
    %v63 = vsel %vm61, %v52, 0
    %v66 = vsel %vm61, %v53, 0
    %v69 = vsel %vm61, %v54, 0
    %v72 = vsel %vm61, %v55, 0
    %v75 = vsel %vm61, %v56, 0
    %v78 = vsel %vm61, %v57, 0
    %v81 = vsel %vm61, %v58, 0
    %v84 = vsel %vm61, %v59, 0
    %vm86 = vcmask 1041408
    %v88 = vsel %vm86, %v60, 0
    %90 = vmatprep.subr.bf16.mxu0 0
    %91 = vmatpush1.bf16.msra.mxu0 %v88
    %92 = vmatprep.subr.bf16.mxu0 0
    %93 = vmatpush1.bf16.msra.mxu0 0
    %94 = vmatprep.subr.bf16.mxu0 0
    %95 = vmatpush1.bf16.msra.mxu0 0
    %96 = vmatprep.subr.bf16.mxu0 0
    %97 = vmatpush1.bf16.msra.mxu0 0
    %98 = vmatprep.subr.bf16.mxu0 0
    %99 = vmatpush1.bf16.msra.mxu0 0
    %100 = vmatprep.subr.bf16.mxu0 0
    %101 = vmatpush1.bf16.msra.mxu0 0
    %102 = vmatprep.subr.bf16.mxu0 0
    %103 = vmatpush1.bf16.msra.mxu0 0
    %104 = vmatprep.subr.bf16.mxu0 0
    %105 = vmatpush1.bf16.msra.mxu0 0
    %106 = vmatprep.subr.bf16.mxu0 0
    %107 = vmatpush1.bf16.msra.mxu0 0
    %108 = vmatprep.subr.bf16.mxu0 0
    %109 = vmatpush1.bf16.msra.mxu0 0
    %110 = vmatprep.subr.bf16.mxu0 0
    %111 = vmatpush1.bf16.msra.mxu0 0
    %112 = vmatprep.subr.bf16.mxu0 0
    %113 = vmatpush1.bf16.msra.mxu0 0
    %114 = vmatprep.subr.bf16.mxu0 0
    %115 = vmatpush1.bf16.msra.mxu0 0
    %116 = vmatprep.subr.bf16.mxu0 0
    %117 = vmatpush1.bf16.msra.mxu0 0
    %118 = vmatprep.subr.bf16.mxu0 0
    %119 = vmatpush1.bf16.msra.mxu0 0
    %120 = vmatprep.subr.bf16.mxu0 0
    %121 = vmatpush1.bf16.msra.mxu0 0
    %122 = vmatprep.mubr.bf16.mxu0 0
    %123 = vmatmul.mubr.bf16.gmra.mrb[0].mxu0 %v63
    %v124 = vpop.f32.mrb[0].mxu0
    %v125 = vadd.f32 0.0, %v124
    %v126 = vpop.f32.mrb[0].mxu0
    %v127 = vpop.f32.mrb[0].mxu0
    %v128 = vadd.f32 0.0, %v127
    %v129 = vpop.f32.mrb[0].mxu0
    %130 = vmatprep.mubr.bf16.mxu0 0
    %131 = vmatmul.mubr.bf16.gmra.mrb[0].mxu0 %v66
    %v132 = vpop.f32.mrb[0].mxu0
    %v133 = vadd.f32 0.0, %v132
    %v134 = vpop.f32.mrb[0].mxu0
    %v135 = vpop.f32.mrb[0].mxu0
    %v136 = vadd.f32 0.0, %v135
    %v137 = vpop.f32.mrb[0].mxu0
    %138 = vmatprep.mubr.bf16.mxu0 0
    %139 = vmatmul.mubr.bf16.gmra.mrb[0].mxu0 %v69
    %v140 = vpop.f32.mrb[0].mxu0
    %v141 = vadd.f32 0.0, %v140
    %v142 = vpop.f32.mrb[0].mxu0
    %v143 = vpop.f32.mrb[0].mxu0
    %v144 = vadd.f32 0.0, %v143
    %v145 = vpop.f32.mrb[0].mxu0
    %146 = vmatprep.mubr.bf16.mxu0 0
    %147 = vmatmul.mubr.bf16.gmra.mrb[0].mxu0 %v72
    %v148 = vpop.f32.mrb[0].mxu0
    %v149 = vadd.f32 0.0, %v148
    %v150 = vpop.f32.mrb[0].mxu0
    %v151 = vpop.f32.mrb[0].mxu0
    %v152 = vadd.f32 0.0, %v151
    %v153 = vpop.f32.mrb[0].mxu0
    %154 = vmatprep.mubr.bf16.mxu0 0
    %155 = vmatmul.mubr.bf16.gmra.mrb[0].mxu0 %v75
    %v156 = vpop.f32.mrb[0].mxu0
    %v157 = vadd.f32 0.0, %v156
    %v158 = vpop.f32.mrb[0].mxu0
    %v159 = vpop.f32.mrb[0].mxu0
    %v160 = vadd.f32 0.0, %v159
    %v161 = vpop.f32.mrb[0].mxu0
    %162 = vmatprep.mubr.bf16.mxu0 0
    %163 = vmatmul.mubr.bf16.gmra.mrb[0].mxu0 %v78
    %v164 = vpop.f32.mrb[0].mxu0
    %v165 = vadd.f32 0.0, %v164
    %v166 = vpop.f32.mrb[0].mxu0
    %v167 = vpop.f32.mrb[0].mxu0
    %v168 = vadd.f32 0.0, %v167
    %v169 = vpop.f32.mrb[0].mxu0
    %170 = vmatprep.mubr.bf16.mxu0 0
    %171 = vmatmul.mubr.bf16.gmra.mrb[0].mxu0 %v81
    %v172 = vpop.f32.mrb[0].mxu0
    %v173 = vadd.f32 0.0, %v172
    %v174 = vpop.f32.mrb[0].mxu0
    %v175 = vpop.f32.mrb[0].mxu0
    %v176 = vadd.f32 0.0, %v175
    %v177 = vpop.f32.mrb[0].mxu0
    %178 = vmatprep.mubr.bf16.mxu0 0
    %179 = vmatmul.mubr.bf16.gmra.mrb[0].mxu0 %v84
    %v180 = vpop.f32.mrb[0].mxu0
    %v181 = vadd.f32 0.0, %v180
    %v182 = vpop.f32.mrb[0].mxu0
    %v183 = vpop.f32.mrb[0].mxu0
    %v184 = vadd.f32 0.0, %v183
    %v185 = vpop.f32.mrb[0].mxu0
    %186 = vdwg.mxu0
    %v203 = vunpack.c.l.b16 %v19
    %v204 = vunpack.c.l.b16 %v20
    %v205 = vunpack.c.l.b16 %v21
    %v206 = vunpack.c.l.b16 %v22
    %v207 = vunpack.c.l.b16 %v23
    %v208 = vunpack.c.l.b16 %v24
    %v209 = vunpack.c.l.b16 %v25
    %v210 = vunpack.c.l.b16 %v26
    %v211 = vunpack.c.l.b16 %v27
    %v212 = vunpack.c.l.b16 %v28
    %v213 = vunpack.c.l.b16 %v29
    %v214 = vunpack.c.l.b16 %v30
    %v215 = vunpack.c.l.b16 %v31
    %v216 = vunpack.c.l.b16 %v32
    %v217 = vunpack.c.l.b16 %v33
    %v218 = vunpack.c.l.b16 %v34
    %v219 = vpack.c.b16 %v204, %v203
    %v220 = vpack.c.b16 %v206, %v205
    %v221 = vpack.c.b16 %v208, %v207
    %v222 = vpack.c.b16 %v210, %v209
    %v223 = vpack.c.b16 %v212, %v211
    %v224 = vpack.c.b16 %v214, %v213
    %v225 = vpack.c.b16 %v216, %v215
    %v226 = vpack.c.b16 %v218, %v217
    %v228 = vsel %vm61, %v219, 0
    %v231 = vsel %vm61, %v220, 0
    %v234 = vsel %vm61, %v221, 0
    %v237 = vsel %vm61, %v222, 0
    %v240 = vsel %vm61, %v223, 0
    %v243 = vsel %vm61, %v224, 0
    %v246 = vsel %vm61, %v225, 0
    %v249 = vsel %vm61, %v226, 0
    %v252 = vsel %vm86, %v35, 0
    %254 = vmatprep.subr.bf16.mxu0 0
    %255 = vmatpush1.bf16.msra.mxu0 %v252
    %256 = vmatprep.subr.bf16.mxu0 0
    %257 = vmatpush1.bf16.msra.mxu0 0
    %258 = vmatprep.subr.bf16.mxu0 0
    %259 = vmatpush1.bf16.msra.mxu0 0
    %260 = vmatprep.subr.bf16.mxu0 0
    %261 = vmatpush1.bf16.msra.mxu0 0
    %262 = vmatprep.subr.bf16.mxu0 0
    %263 = vmatpush1.bf16.msra.mxu0 0
    %264 = vmatprep.subr.bf16.mxu0 0
    %265 = vmatpush1.bf16.msra.mxu0 0
    %266 = vmatprep.subr.bf16.mxu0 0
    %267 = vmatpush1.bf16.msra.mxu0 0
    %268 = vmatprep.subr.bf16.mxu0 0
    %269 = vmatpush1.bf16.msra.mxu0 0
    %270 = vmatprep.subr.bf16.mxu0 0
    %271 = vmatpush1.bf16.msra.mxu0 0
    %272 = vmatprep.subr.bf16.mxu0 0
    %273 = vmatpush1.bf16.msra.mxu0 0
    %274 = vmatprep.subr.bf16.mxu0 0
    %275 = vmatpush1.bf16.msra.mxu0 0
    %276 = vmatprep.subr.bf16.mxu0 0
    %277 = vmatpush1.bf16.msra.mxu0 0
    %278 = vmatprep.subr.bf16.mxu0 0
    %279 = vmatpush1.bf16.msra.mxu0 0
    %280 = vmatprep.subr.bf16.mxu0 0
    %281 = vmatpush1.bf16.msra.mxu0 0
    %282 = vmatprep.subr.bf16.mxu0 0
    %283 = vmatpush1.bf16.msra.mxu0 0
    %284 = vmatprep.subr.bf16.mxu0 0
    %285 = vmatpush1.bf16.msra.mxu0 0
    %286 = vmatprep.mubr.bf16.mxu0 0
    %287 = vmatmul.mubr.bf16.gmra.mrb[0].mxu0 %v228
    %v288 = vpop.f32.mrb[0].mxu0
    %v289 = vadd.f32 %v125, %v288
    %v290 = vpop.f32.mrb[0].mxu0
    %v291 = vpop.f32.mrb[0].mxu0
    %v292 = vadd.f32 %v128, %v291
    %v293 = vpop.f32.mrb[0].mxu0
    %294 = vmatprep.mubr.bf16.mxu0 0
    %295 = vmatmul.mubr.bf16.gmra.mrb[0].mxu0 %v231
    %v296 = vpop.f32.mrb[0].mxu0
    %v297 = vadd.f32 %v133, %v296
    %v298 = vpop.f32.mrb[0].mxu0
    %v299 = vpop.f32.mrb[0].mxu0
    %v300 = vadd.f32 %v136, %v299
    %v301 = vpop.f32.mrb[0].mxu0
    %302 = vmatprep.mubr.bf16.mxu0 0
    %303 = vmatmul.mubr.bf16.gmra.mrb[0].mxu0 %v234
    %v304 = vpop.f32.mrb[0].mxu0
    %v305 = vadd.f32 %v141, %v304
    %v306 = vpop.f32.mrb[0].mxu0
    %v307 = vpop.f32.mrb[0].mxu0
    %v308 = vadd.f32 %v144, %v307
    %v309 = vpop.f32.mrb[0].mxu0
    %310 = vmatprep.mubr.bf16.mxu0 0
    %311 = vmatmul.mubr.bf16.gmra.mrb[0].mxu0 %v237
    %v312 = vpop.f32.mrb[0].mxu0
    %v313 = vadd.f32 %v149, %v312
    %v314 = vpop.f32.mrb[0].mxu0
    %v315 = vpop.f32.mrb[0].mxu0
    %v316 = vadd.f32 %v152, %v315
    %v317 = vpop.f32.mrb[0].mxu0
    %318 = vmatprep.mubr.bf16.mxu0 0
    %319 = vmatmul.mubr.bf16.gmra.mrb[0].mxu0 %v240
    %v320 = vpop.f32.mrb[0].mxu0
    %v321 = vadd.f32 %v157, %v320
    %v322 = vpop.f32.mrb[0].mxu0
    %v323 = vpop.f32.mrb[0].mxu0
    %v324 = vadd.f32 %v160, %v323
    %v325 = vpop.f32.mrb[0].mxu0
    %326 = vmatprep.mubr.bf16.mxu0 0
    %327 = vmatmul.mubr.bf16.gmra.mrb[0].mxu0 %v243
    %v328 = vpop.f32.mrb[0].mxu0
    %v329 = vadd.f32 %v165, %v328
    %v330 = vpop.f32.mrb[0].mxu0
    %v331 = vpop.f32.mrb[0].mxu0
    %v332 = vadd.f32 %v168, %v331
    %v333 = vpop.f32.mrb[0].mxu0
    %334 = vmatprep.mubr.bf16.mxu0 0
    %335 = vmatmul.mubr.bf16.gmra.mrb[0].mxu0 %v246
    %v336 = vpop.f32.mrb[0].mxu0
    %v337 = vadd.f32 %v173, %v336
    %v338 = vpop.f32.mrb[0].mxu0
    %v339 = vpop.f32.mrb[0].mxu0
    %v340 = vadd.f32 %v176, %v339
    %v341 = vpop.f32.mrb[0].mxu0
    %342 = vmatprep.mubr.bf16.mxu0 0
    %343 = vmatmul.mubr.bf16.gmra.mrb[0].mxu0 %v249
    %v344 = vpop.f32.mrb[0].mxu0
    %v345 = vadd.f32 %v181, %v344
    %v346 = vpop.f32.mrb[0].mxu0
    %v347 = vpop.f32.mrb[0].mxu0
    %v348 = vadd.f32 %v184, %v347
    %v349 = vpop.f32.mrb[0].mxu0
    %350 = vdwg.mxu0
    %vm351 = vcmask 130048
    %352 = vst.msk [vmem:[#allocation2] sm:$0xff] %vm351, %v289
    %353 = vst.msk [vmem:[#allocation2 + $0x8] sm:$0xff] %vm351, %v292
    %354 = vst.msk [vmem:[#allocation2 + $0x10] sm:$0xff] %vm351, %v297
    %355 = vst.msk [vmem:[#allocation2 + $0x18] sm:$0xff] %vm351, %v300
    %356 = vst.msk [vmem:[#allocation2 + $0x20] sm:$0xff] %vm351, %v305
    %357 = vst.msk [vmem:[#allocation2 + $0x28] sm:$0xff] %vm351, %v308
    %358 = vst.msk [vmem:[#allocation2 + $0x30] sm:$0xff] %vm351, %v313
    %359 = vst.msk [vmem:[#allocation2 + $0x38] sm:$0xff] %vm351, %v316
    %360 = vst.msk [vmem:[#allocation2 + $0x40] sm:$0xff] %vm351, %v321
    %361 = vst.msk [vmem:[#allocation2 + $0x48] sm:$0xff] %vm351, %v324
    %362 = vst.msk [vmem:[#allocation2 + $0x50] sm:$0xff] %vm351, %v329
    %363 = vst.msk [vmem:[#allocation2 + $0x58] sm:$0xff] %vm351, %v332
    %364 = vst.msk [vmem:[#allocation2 + $0x60] sm:$0xff] %vm351, %v337
    %365 = vst.msk [vmem:[#allocation2 + $0x68] sm:$0xff] %vm351, %v340
    %366 = vst.msk [vmem:[#allocation2 + $0x70] sm:$0xff] %vm351, %v345
    %367 = vst.msk [vmem:[#allocation2 + $0x78] sm:$0xff] %vm351, %v348
    // Predicated region
    $region18: #{preact_bottleneck_forward.5} parent=1 // pred_check
      _
    $region19: #{preact_bottleneck_forward.5} parent=1 // pred_check_branch
      %369 = sbr.rel (0) target = $region21
    $region20: #{preact_bottleneck_forward.5} parent=1 // pred_region
      %s371 = ssub.s32 2048, 2048
      %372 = vsyncadd [#allocation3], %s371
      %s373 = sshll.u32 [#allocation2], 4
      %s374 = int_to_ptr.vmem [resolvable:$true] %s373
      %379 = dma.vmem_to_hbm [thread:$0]  %s374, 2048, %s4, [#allocation3], 128, 128, 8
    $region21: #{preact_bottleneck_forward.5} parent=1 // pred_fallthru
      _
    // Predicated region
    $region22: #{preact_bottleneck_forward.5} parent=1 // pred_check
      _
    $region23: #{preact_bottleneck_forward.5} parent=1 // pred_check_branch
      %381 = sbr.rel (0) target = $region25
    $region24: #{preact_bottleneck_forward.5} parent=1 // pred_region
      %382 = dma.done [#allocation3], 2048
    $region25: #{preact_bottleneck_forward.5} parent=1 // pred_fallthru
      _
    %383 = vsyncpa [#allocation3], 1

// kernel: preact_bottleneck_forward.4
$region0: #{preact_bottleneck_forward.4}
  #allocation0 [shape = 'u32[]', space=smem, size = 0x4, offset = 0x4, fixed_abs, tag = 'smem constant byte address 0x4 - core index']
  #allocation1 [shape = 'u32[144,128]{1,0:T(1,128)}', space=vmem, size = 0x12000, scoped, tag = 'internal scratch']
  %s0 = inlined_call_operand.vmem [shape: bf16[2,2,2,9,9,4], index: 0, kind: input, shape index: {}]
  %s1 = inlined_call_operand.vmem [shape: bf16[9,4,4], index: 1, kind: input, shape index: {}]
  %s2 = inlined_call_operand.vmem [shape: f32[1,4], index: 2, kind: input, shape index: {}]
  %s3 = inlined_call_operand.vmem [shape: f32[1,4], index: 3, kind: input, shape index: {}]
  %s4 = inlined_call_operand.vmem [shape: bf16[2,64,4], index: 4, kind: output, shape index: {}]
  %s5 = sld [smem:[#allocation0]]
  $region49: #{preact_bottleneck_forward.4} parent=0
    _
  %s7 = ssub.s32 1, %s5
  %s8 = scalar_select 0, %s7, %s5
  loop: start=0, step=1, limit=4
  $region2: #{preact_bottleneck_forward.4} parent=0 // loop_pre_header
    _
  $region3: #{preact_bottleneck_forward.4} parent=0 // loop_header
    %s10 = sphi 0, %s14
    %p11 = scmp.ge.s32.totalorder %s10, 4
    %s17 = sphi 0, %s36
    %s18 = sphi 0, %s32
    %s19 = sphi 0, %s28
    %s20 = sphi 0, %s17
    %s21 = sphi 0, %s18
    %s22 = sphi 0, %s19
    %s23 = sphi 0, %s20
    %s24 = sphi 0, %s21
    %s25 = sphi 0, %s22
    %s39 = sphi 0, %s41
    %s42 = sphi 0, %s39
    %s43 = sphi 0, %s42
    %s59 = sphi 0, %s43
    %s65 = sphi 0, %s67
    %s68 = sphi 0, %s65
    %s69 = sphi 0, %s68
    %s85 = sphi 0, %s69
    %s91 = sphi 0, %s93
    %s94 = sphi 0, %s91
    %s95 = sphi 0, %s94
    %s111 = sphi 0, %s95
    %s117 = sphi 0, %s119
    %s120 = sphi 0, %s117
    %s121 = sphi 0, %s120
    %s137 = sphi 0, %s121
    %s147 = sphi 0, %s149
    %s150 = sphi 0, %s147
    %s151 = sphi 0, %s150
    %s167 = sphi 0, %s151
  $region4: #{preact_bottleneck_forward.4} parent=0 // loop_header_branch
    %13 = sbr.rel (%p11) target = $region8
  $region5: #{preact_bottleneck_forward.4} parent=0 // loop_body
    %s15 = ssub.s32 %s10, 1
    %s16 = ssub.s32 %s10, 2
    %s26 = sadd.s32 1, %s19
    %p27 = scmp.ge.s32.totalorder %s26, 1
    %s28 = scalar_select %p27, 0, %s26
    %s29 = sadd.s32 1, %s18
    %s30 = scalar_select %p27, %s29, %s18
    %p31 = scmp.ge.s32.totalorder %s30, 1
    %s32 = scalar_select %p31, 0, %s30
    %s33 = sadd.s32 1, %s17
    %s34 = scalar_select %p31, %s33, %s17
    %p35 = scmp.ge.s32.totalorder %s34, 2
    %s36 = scalar_select %p35, 0, %s34
    %s37 = ssub.s32 %s17, %s36
    %p38 = scmp.eq.s32.totalorder %s37, 0
    %s40 = sadd.s32 %s39, 1
    %s41 = scalar_select %p38, %s39, %s40
    %p44 = pneg %p38
    %p45 = scmp.eq.s32.totalorder %s10, 1
    %p46 = por %p44, %p45
    %p47 = scmp.ne.s32.totalorder %s39, %s42
    %p48 = scmp.eq.s32.totalorder %s10, 0
    %p49 = por %p47, %p48
    %p50 = scmp.ne.s32.totalorder %s39, %s42
    %p51 = scmp.eq.s32.totalorder %s15, 1
    %p52 = por %p50, %p51
    %p53 = scmp.ne.s32.totalorder %s42, %s43
    %p54 = scmp.eq.s32.totalorder %s15, 0
    %p55 = por %p53, %p54
    %p56 = scmp.ne.s32.totalorder %s42, %s43
    %p57 = scmp.eq.s32.totalorder %s16, 1
    %p58 = por %p56, %p57
    %p60 = scmp.ne.s32.totalorder %s43, %s59
    %p61 = scmp.eq.s32.totalorder %s16, 0
    %p62 = por %p60, %p61
    %s63 = ssub.s32 %s18, %s32
    %p64 = scmp.eq.s32.totalorder %s63, 0
    %s66 = sadd.s32 %s65, 1
    %s67 = scalar_select %p64, %s65, %s66
    %p70 = pneg %p64
    %p71 = scmp.eq.s32.totalorder %s10, 1
    %p72 = por %p70, %p71
    %p73 = scmp.ne.s32.totalorder %s65, %s68
    %p74 = scmp.eq.s32.totalorder %s10, 0
    %p75 = por %p73, %p74
    %p76 = scmp.ne.s32.totalorder %s65, %s68
    %p77 = scmp.eq.s32.totalorder %s15, 1
    %p78 = por %p76, %p77
    %p79 = scmp.ne.s32.totalorder %s68, %s69
    %p80 = scmp.eq.s32.totalorder %s15, 0
    %p81 = por %p79, %p80
    %p82 = scmp.ne.s32.totalorder %s68, %s69
    %p83 = scmp.eq.s32.totalorder %s16, 1
    %p84 = por %p82, %p83
    %p86 = scmp.ne.s32.totalorder %s69, %s85
    %p87 = scmp.eq.s32.totalorder %s16, 0
    %p88 = por %p86, %p87
    %s89 = ssub.s32 %s18, %s32
    %p90 = scmp.eq.s32.totalorder %s89, 0
    %s92 = sadd.s32 %s91, 1
    %s93 = scalar_select %p90, %s91, %s92
    %p96 = pneg %p90
    %p97 = scmp.eq.s32.totalorder %s10, 1
    %p98 = por %p96, %p97
    %p99 = scmp.ne.s32.totalorder %s91, %s94
    %p100 = scmp.eq.s32.totalorder %s10, 0
    %p101 = por %p99, %p100
    %p102 = scmp.ne.s32.totalorder %s91, %s94
    %p103 = scmp.eq.s32.totalorder %s15, 1
    %p104 = por %p102, %p103
    %p105 = scmp.ne.s32.totalorder %s94, %s95
    %p106 = scmp.eq.s32.totalorder %s15, 0
    %p107 = por %p105, %p106
    %p108 = scmp.ne.s32.totalorder %s94, %s95
    %p109 = scmp.eq.s32.totalorder %s16, 1
    %p110 = por %p108, %p109
    %p112 = scmp.ne.s32.totalorder %s95, %s111
    %p113 = scmp.eq.s32.totalorder %s16, 0
    %p114 = por %p112, %p113
    %s115 = ssub.s32 %s18, %s32
    %p116 = scmp.eq.s32.totalorder %s115, 0
    %s118 = sadd.s32 %s117, 1
    %s119 = scalar_select %p116, %s117, %s118
    %p122 = pneg %p116
    %p123 = scmp.eq.s32.totalorder %s10, 1
    %p124 = por %p122, %p123
    %p125 = scmp.ne.s32.totalorder %s117, %s120
    %p126 = scmp.eq.s32.totalorder %s10, 0
    %p127 = por %p125, %p126
    %p128 = scmp.ne.s32.totalorder %s117, %s120
    %p129 = scmp.eq.s32.totalorder %s15, 1
    %p130 = por %p128, %p129
    %p131 = scmp.ne.s32.totalorder %s120, %s121
    %p132 = scmp.eq.s32.totalorder %s15, 0
    %p133 = por %p131, %p132
    %p134 = scmp.ne.s32.totalorder %s120, %s121
    %p135 = scmp.eq.s32.totalorder %s16, 1
    %p136 = por %p134, %p135
    %p138 = scmp.ne.s32.totalorder %s121, %s137
    %p139 = scmp.eq.s32.totalorder %s16, 0
    %p140 = por %p138, %p139
    %s141 = ssub.s32 %s17, %s36
    %s142 = ssub.s32 %s19, %s28
    %s143 = sor.u32 %s141, %s142
    %s144 = ssub.s32 %s18, %s32
    %s145 = sor.u32 %s143, %s144
    %p146 = scmp.eq.s32.totalorder %s145, 0
    %s148 = sadd.s32 %s147, 1
    %s149 = scalar_select %p146, %s147, %s148
    %p152 = pneg %p146
    %p153 = scmp.eq.s32.totalorder %s10, 1
    %p154 = por %p152, %p153
    %p155 = scmp.ne.s32.totalorder %s147, %s150
    %p156 = scmp.eq.s32.totalorder %s10, 0
    %p157 = por %p155, %p156
    %p158 = scmp.ne.s32.totalorder %s147, %s150
    %p159 = scmp.eq.s32.totalorder %s15, 1
    %p160 = por %p158, %p159
    %p161 = scmp.ne.s32.totalorder %s150, %s151
    %p162 = scmp.eq.s32.totalorder %s15, 0
    %p163 = por %p161, %p162
    %p164 = scmp.ne.s32.totalorder %s150, %s151
    %p165 = scmp.eq.s32.totalorder %s16, 1
    %p166 = por %p164, %p165
    %p168 = scmp.ne.s32.totalorder %s151, %s167
    %p169 = scmp.eq.s32.totalorder %s16, 0
    %p170 = por %p168, %p169
    %p171 = scmp.le.s32.totalorder 1, %s10
    %p172 = scmp.lt.s32.totalorder %s10, 3
    %p173 = pnand %p171, %p172
    %p174 = pneg %p173
    // Predicated region
    $region9: #{preact_bottleneck_forward.4} parent=5 // pred_check
      _
    $region10: #{preact_bottleneck_forward.4} parent=5 // pred_check_branch
      %176 = sbr.rel (%p173) target = $region12
    $region11: #{preact_bottleneck_forward.4} parent=5 // pred_region
      %s177 = ssub.s32 %s10, 1
      // Predicated region
      $region13: #{preact_bottleneck_forward.4} parent=11 // pred_check
        %p178 = pneg %p81
      $region14: #{preact_bottleneck_forward.4} parent=11 // pred_check_branch
        %180 = sbr.rel (%p178) target = $region16
      $region15: #{preact_bottleneck_forward.4} parent=11 // pred_region
        %p181 = scmp.lt.s32.totalorder %s21, 0
        %s182 = scalar_select %p181, %s21, 0
        %s183 = smul.addr %s182, 2
        %s184 = scalar_lea.vmem %s1, %s183
      $region16: #{preact_bottleneck_forward.4} parent=11 // pred_fallthru
        _
      // Predicated region
      $region17: #{preact_bottleneck_forward.4} parent=11 // pred_check
        %p185 = pneg %p107
      $region18: #{preact_bottleneck_forward.4} parent=11 // pred_check_branch
        %187 = sbr.rel (%p185) target = $region20
      $region19: #{preact_bottleneck_forward.4} parent=11 // pred_region
        %p188 = scmp.lt.s32.totalorder %s21, 0
        %s189 = scalar_select %p188, %s21, 0
        %s190 = scalar_lea.vmem %s2, %s189
      $region20: #{preact_bottleneck_forward.4} parent=11 // pred_fallthru
        _
      // Predicated region
      $region21: #{preact_bottleneck_forward.4} parent=11 // pred_check
        %p191 = pneg %p133
      $region22: #{preact_bottleneck_forward.4} parent=11 // pred_check_branch
        %193 = sbr.rel (%p191) target = $region24
      $region23: #{preact_bottleneck_forward.4} parent=11 // pred_region
        %p194 = scmp.lt.s32.totalorder %s21, 0
        %s195 = scalar_select %p194, %s21, 0
        %s196 = scalar_lea.vmem %s3, %s195
      $region24: #{preact_bottleneck_forward.4} parent=11 // pred_fallthru
        _
    $region12: #{preact_bottleneck_forward.4} parent=5 // pred_fallthru
      _
    %p197 = scmp.lt.s32.totalorder %s10, 2
    // Predicated region
    $region25: #{preact_bottleneck_forward.4} parent=5 // pred_check
      %p198 = pneg %p197
    $region26: #{preact_bottleneck_forward.4} parent=5 // pred_check_branch
      %200 = sbr.rel (%p198) target = $region28
    $region27: #{preact_bottleneck_forward.4} parent=5 // pred_region
      // Predicated region
      $region29: #{preact_bottleneck_forward.4} parent=27 // pred_check
        %p201 = pneg %p49
      $region30: #{preact_bottleneck_forward.4} parent=27 // pred_check_branch
        %203 = sbr.rel (%p201) target = $region32
      $region31: #{preact_bottleneck_forward.4} parent=27 // pred_region
        %p204 = scmp.lt.s32.totalorder %s17, 1
        %s205 = scalar_select %p204, %s17, 1
        %s206 = smul.addr %s205, 72
        %s207 = smul.addr %s206, 4
        %s208 = scalar_lea.vmem %s0, %s207
      $region32: #{preact_bottleneck_forward.4} parent=27 // pred_fallthru
        _
    $region28: #{preact_bottleneck_forward.4} parent=5 // pred_fallthru
      _
    %p209 = scmp.le.s32.totalorder 1, %s10
    %p210 = scmp.lt.s32.totalorder %s10, 3
    %p211 = pnand %p209, %p210
    %p212 = pneg %p211
    // Predicated region
    $region33: #{preact_bottleneck_forward.4} parent=5 // pred_check
      _
    $region34: #{preact_bottleneck_forward.4} parent=5 // pred_check_branch
      %214 = sbr.rel (%p211) target = $region36
    $region35: #{preact_bottleneck_forward.4} parent=5 // pred_region
      %s215 = ssub.s32 %s10, 1
      %p216 = scmp.lt.s32.totalorder %s20, 1
      %s217 = scalar_select %p216, %s20, 1
      %s218 = smul.addr %s217, 72
      %s219 = smul.addr %s218, 4
      %s220 = scalar_lea.vmem %s0, %s219
      %p221 = pneg %p55
      %p222 = pneg %p52
      %p223 = scmp.lt.s32.totalorder %s21, 0
      %s224 = scalar_select %p223, %s21, 0
      %s225 = smul.addr %s224, 2
      %s226 = scalar_lea.vmem %s1, %s225
      %p227 = pneg %p81
      %p228 = pneg %p78
      %p229 = scmp.lt.s32.totalorder %s21, 0
      %s230 = scalar_select %p229, %s21, 0
      %s231 = scalar_lea.vmem %s2, %s230
      %p232 = pneg %p107
      %p233 = pneg %p104
      %p234 = scmp.lt.s32.totalorder %s21, 0
      %s235 = scalar_select %p234, %s21, 0
      %s236 = scalar_lea.vmem %s3, %s235
      %p237 = pneg %p133
      %p238 = pneg %p130
      %p239 = pneg %p163
      %p240 = pneg %p160
      %s241 = smul.u32 8, %s22
      %p242 = scmp.lt.s32.totalorder %s20, 1
      %s243 = scalar_select %p242, %s20, 1
      %p244 = scmp.lt.s32.totalorder %s241, 7
      %s245 = scalar_select %p244, %s241, 7
      %p246 = scmp.lt.s32.totalorder %s21, 0
      %s247 = scalar_select %p246, %s21, 0
      %s248 = sadd.s32 %s247, %s245
      %s249 = smul.addr %s243, 8
      %s250 = sadd.s32 %s248, %s249
      %s251 = smul.addr %s250, 4
      %s252 = scalar_lea.vmem %s4, %s251
      %p253 = scmp.lt.s32.totalorder %s20, 1
      %s254 = scalar_select %p253, %s20, 1
      %s255 = smul.addr %s254, 72
      %s256 = smul.addr %s255, 4
      %s257 = scalar_lea.vmem %s0, %s256
      %p258 = scmp.lt.s32.totalorder %s21, 0
      %s259 = scalar_select %p258, %s21, 0
      %s260 = smul.addr %s259, 2
      %s261 = scalar_lea.vmem %s1, %s260
      %p262 = scmp.lt.s32.totalorder %s21, 0
      %s263 = scalar_select %p262, %s21, 0
      %s264 = scalar_lea.vmem %s2, %s263
      %p265 = scmp.lt.s32.totalorder %s21, 0
      %s266 = scalar_select %p265, %s21, 0
      %s267 = scalar_lea.vmem %s3, %s266
      %s268 = smul.u32 8, %s22
      %p269 = scmp.lt.s32.totalorder %s20, 1
      %s270 = scalar_select %p269, %s20, 1
      %p271 = scmp.lt.s32.totalorder %s268, 7
      %s272 = scalar_select %p271, %s268, 7
      %p273 = scmp.lt.s32.totalorder %s21, 0
      %s274 = scalar_select %p273, %s21, 0
      %s275 = sadd.s32 %s274, %s272
      %s276 = smul.addr %s270, 8
      %s277 = sadd.s32 %s275, %s276
      %s278 = smul.addr %s277, 4
      %s279 = scalar_lea.vmem %s4, %s278
      %s280 = smul.u32 8, %s22
      %s282 = smul.u32 %s22, 8
      %s283 = smul.u32 %s282, 2
      %s284 = smul.addr %s283, 4
      %s285 = scalar_lea.vmem %s257, %s284
      %v286 = vld [vmem:[%s285] sm:$0xf]
      %v287 = vld [vmem:[%s285 + $0x8] sm:$0xf]
      %v288 = vld [vmem:[%s285 + $0x10] sm:$0xf]
      %v289 = vld [vmem:[%s285 + $0x18] sm:$0xf]
      %v290 = vld [vmem:[%s285 + $0x20] sm:$0xf]
      %v291 = vld [vmem:[%s285 + $0x28] sm:$0xf]
      %v292 = vld [vmem:[%s285 + $0x30] sm:$0xf]
      %v293 = vld [vmem:[%s285 + $0x38] sm:$0xf]
      %v294 = vld [vmem:[%s261] sm:$0x3]
      %s295 = sadd.s32 %s283, 18
      %s296 = smul.addr %s295, 4
      %s297 = scalar_lea.vmem %s257, %s296
      %v298 = vld [vmem:[%s297] sm:$0xf]
      %v299 = vld [vmem:[%s297 + $0x8] sm:$0xf]
      %v300 = vld [vmem:[%s297 + $0x10] sm:$0xf]
      %v301 = vld [vmem:[%s297 + $0x18] sm:$0xf]
      %v302 = vld [vmem:[%s297 + $0x20] sm:$0xf]
      %v303 = vld [vmem:[%s297 + $0x28] sm:$0xf]
      %v304 = vld [vmem:[%s297 + $0x30] sm:$0xf]
      %v305 = vld [vmem:[%s297 + $0x38] sm:$0xf]
      %s306 = scalar_lea.vmem %s261, 2
      %v307 = vld [vmem:[%s306] sm:$0x3]
      %v316 = vunpack.c.l.b16 %v298
      %v317 = vunpack.c.l.b16 %v299
      %v318 = vunpack.c.l.b16 %v300
      %v319 = vunpack.c.l.b16 %v301
      %v320 = vunpack.c.l.b16 %v302
      %v321 = vunpack.c.l.b16 %v303
      %v322 = vunpack.c.l.b16 %v304
      %v323 = vunpack.c.l.b16 %v305
      %v324 = vpack.c.b16 %v317, %v316
      %v325 = vpack.c.b16 %v319, %v318
      %v326 = vpack.c.b16 %v321, %v320
      %v327 = vpack.c.b16 %v323, %v322
      %vm328 = vcmask 31744
      %v330 = vsel %vm328, %v324, 0
      %v333 = vsel %vm328, %v325, 0
      %v336 = vsel %vm328, %v326, 0
      %v339 = vsel %vm328, %v327, 0
      %vm341 = vcmask 1041408
      %v343 = vsel %vm341, %v307, 0
      %345 = vmatprep.subr.bf16.mxu0 0
      %346 = vmatpush1.bf16.msra.mxu0 %v343
      %347 = vmatprep.subr.bf16.mxu0 0
      %348 = vmatpush1.bf16.msra.mxu0 0
      %349 = vmatprep.subr.bf16.mxu0 0
      %350 = vmatpush1.bf16.msra.mxu0 0
      %351 = vmatprep.subr.bf16.mxu0 0
      %352 = vmatpush1.bf16.msra.mxu0 0
      %353 = vmatprep.subr.bf16.mxu0 0
      %354 = vmatpush1.bf16.msra.mxu0 0
      %355 = vmatprep.subr.bf16.mxu0 0
      %356 = vmatpush1.bf16.msra.mxu0 0
      %357 = vmatprep.subr.bf16.mxu0 0
      %358 = vmatpush1.bf16.msra.mxu0 0
      %359 = vmatprep.subr.bf16.mxu0 0
      %360 = vmatpush1.bf16.msra.mxu0 0
      %361 = vmatprep.subr.bf16.mxu0 0
      %362 = vmatpush1.bf16.msra.mxu0 0
      %363 = vmatprep.subr.bf16.mxu0 0
      %364 = vmatpush1.bf16.msra.mxu0 0
      %365 = vmatprep.subr.bf16.mxu0 0
      %366 = vmatpush1.bf16.msra.mxu0 0
      %367 = vmatprep.subr.bf16.mxu0 0
      %368 = vmatpush1.bf16.msra.mxu0 0
      %369 = vmatprep.subr.bf16.mxu0 0
      %370 = vmatpush1.bf16.msra.mxu0 0
      %371 = vmatprep.subr.bf16.mxu0 0
      %372 = vmatpush1.bf16.msra.mxu0 0
      %373 = vmatprep.subr.bf16.mxu0 0
      %374 = vmatpush1.bf16.msra.mxu0 0
      %375 = vmatprep.subr.bf16.mxu0 0
      %376 = vmatpush1.bf16.msra.mxu0 0
      %377 = vmatprep.mubr.bf16.mxu0 0
      %378 = vmatmul.mubr.bf16.gmra.mrb[0].mxu0 %v330
      %v379 = vpop.f32.mrb[0].mxu0
      %v380 = vadd.f32 0.0, %v379
      %v381 = vpop.f32.mrb[0].mxu0
      %v382 = vpop.f32.mrb[0].mxu0
      %v383 = vadd.f32 0.0, %v382
      %v384 = vpop.f32.mrb[0].mxu0
      %385 = vmatprep.mubr.bf16.mxu0 0
      %386 = vmatmul.mubr.bf16.gmra.mrb[0].mxu0 %v333
      %v387 = vpop.f32.mrb[0].mxu0
      %v388 = vadd.f32 0.0, %v387
      %v389 = vpop.f32.mrb[0].mxu0
      %v390 = vpop.f32.mrb[0].mxu0
      %v391 = vadd.f32 0.0, %v390
      %v392 = vpop.f32.mrb[0].mxu0
      %393 = vmatprep.mubr.bf16.mxu0 0
      %394 = vmatmul.mubr.bf16.gmra.mrb[0].mxu0 %v336
      %v395 = vpop.f32.mrb[0].mxu0
      %v396 = vadd.f32 0.0, %v395
      %v397 = vpop.f32.mrb[0].mxu0
      %v398 = vpop.f32.mrb[0].mxu0
      %v399 = vadd.f32 0.0, %v398
      %v400 = vpop.f32.mrb[0].mxu0
      %401 = vmatprep.mubr.bf16.mxu0 0
      %402 = vmatmul.mubr.bf16.gmra.mrb[0].mxu0 %v339
      %v403 = vpop.f32.mrb[0].mxu0
      %v404 = vadd.f32 0.0, %v403
      %v405 = vpop.f32.mrb[0].mxu0
      %v406 = vpop.f32.mrb[0].mxu0
      %v407 = vadd.f32 0.0, %v406
      %v408 = vpop.f32.mrb[0].mxu0
      %409 = vdwg.mxu0
      %v418 = vunpack.c.l.b16 %v286
      %v419 = vunpack.c.l.b16 %v287
      %v420 = vunpack.c.l.b16 %v288
      %v421 = vunpack.c.l.b16 %v289
      %v422 = vunpack.c.l.b16 %v290
      %v423 = vunpack.c.l.b16 %v291
      %v424 = vunpack.c.l.b16 %v292
      %v425 = vunpack.c.l.b16 %v293
      %v426 = vpack.c.b16 %v419, %v418
      %v427 = vpack.c.b16 %v421, %v420
      %v428 = vpack.c.b16 %v423, %v422
      %v429 = vpack.c.b16 %v425, %v424
      %v431 = vsel %vm328, %v426, 0
      %v434 = vsel %vm328, %v427, 0
      %v437 = vsel %vm328, %v428, 0
      %v440 = vsel %vm328, %v429, 0
      %v443 = vsel %vm341, %v294, 0
      %445 = vmatprep.subr.bf16.mxu0 0
      %446 = vmatpush1.bf16.msra.mxu0 %v443
      %447 = vmatprep.subr.bf16.mxu0 0
      %448 = vmatpush1.bf16.msra.mxu0 0
      %449 = vmatprep.subr.bf16.mxu0 0
      %450 = vmatpush1.bf16.msra.mxu0 0
      %451 = vmatprep.subr.bf16.mxu0 0
      %452 = vmatpush1.bf16.msra.mxu0 0
      %453 = vmatprep.subr.bf16.mxu0 0
      %454 = vmatpush1.bf16.msra.mxu0 0
      %455 = vmatprep.subr.bf16.mxu0 0
      %456 = vmatpush1.bf16.msra.mxu0 0
      %457 = vmatprep.subr.bf16.mxu0 0
      %458 = vmatpush1.bf16.msra.mxu0 0
      %459 = vmatprep.subr.bf16.mxu0 0
      %460 = vmatpush1.bf16.msra.mxu0 0
      %461 = vmatprep.subr.bf16.mxu0 0
      %462 = vmatpush1.bf16.msra.mxu0 0
      %463 = vmatprep.subr.bf16.mxu0 0
      %464 = vmatpush1.bf16.msra.mxu0 0
      %465 = vmatprep.subr.bf16.mxu0 0
      %466 = vmatpush1.bf16.msra.mxu0 0
      %467 = vmatprep.subr.bf16.mxu0 0
      %468 = vmatpush1.bf16.msra.mxu0 0
      %469 = vmatprep.subr.bf16.mxu0 0
      %470 = vmatpush1.bf16.msra.mxu0 0
      %471 = vmatprep.subr.bf16.mxu0 0
      %472 = vmatpush1.bf16.msra.mxu0 0
      %473 = vmatprep.subr.bf16.mxu0 0
      %474 = vmatpush1.bf16.msra.mxu0 0
      %475 = vmatprep.subr.bf16.mxu0 0
      %476 = vmatpush1.bf16.msra.mxu0 0
      %477 = vmatprep.mubr.bf16.mxu0 0
      %478 = vmatmul.mubr.bf16.gmra.mrb[0].mxu0 %v431
      %v479 = vpop.f32.mrb[0].mxu0
      %v480 = vadd.f32 %v380, %v479
      %v481 = vpop.f32.mrb[0].mxu0
      %v482 = vpop.f32.mrb[0].mxu0
      %v483 = vadd.f32 %v383, %v482
      %v484 = vpop.f32.mrb[0].mxu0
      %485 = vmatprep.mubr.bf16.mxu0 0
      %486 = vmatmul.mubr.bf16.gmra.mrb[0].mxu0 %v434
      %v487 = vpop.f32.mrb[0].mxu0
      %v488 = vadd.f32 %v388, %v487
      %v489 = vpop.f32.mrb[0].mxu0
      %v490 = vpop.f32.mrb[0].mxu0
      %v491 = vadd.f32 %v391, %v490
      %v492 = vpop.f32.mrb[0].mxu0
      %493 = vmatprep.mubr.bf16.mxu0 0
      %494 = vmatmul.mubr.bf16.gmra.mrb[0].mxu0 %v437
      %v495 = vpop.f32.mrb[0].mxu0
      %v496 = vadd.f32 %v396, %v495
      %v497 = vpop.f32.mrb[0].mxu0
      %v498 = vpop.f32.mrb[0].mxu0
      %v499 = vadd.f32 %v399, %v498
      %v500 = vpop.f32.mrb[0].mxu0
      %501 = vmatprep.mubr.bf16.mxu0 0
      %502 = vmatmul.mubr.bf16.gmra.mrb[0].mxu0 %v440
      %v503 = vpop.f32.mrb[0].mxu0
      %v504 = vadd.f32 %v404, %v503
      %v505 = vpop.f32.mrb[0].mxu0
      %v506 = vpop.f32.mrb[0].mxu0
      %v507 = vadd.f32 %v407, %v506
      %v508 = vpop.f32.mrb[0].mxu0
      %509 = vdwg.mxu0
      %v510 = vld [vmem:[%s285] sm:$0xf]
      %v511 = vld [vmem:[%s285 + $0x4] sm:$0x1]
      %v512 = vld [vmem:[%s285 + $0x8] sm:$0xf]
      %v513 = vld [vmem:[%s285 + $0xc] sm:$0x1]
      %v514 = vld [vmem:[%s285 + $0x10] sm:$0xf]
      %v515 = vld [vmem:[%s285 + $0x14] sm:$0x1]
      %v516 = vld [vmem:[%s285 + $0x18] sm:$0xf]
      %v517 = vld [vmem:[%s285 + $0x1c] sm:$0x1]
      %v518 = vld [vmem:[%s285 + $0x20] sm:$0xf]
      %v519 = vld [vmem:[%s285 + $0x24] sm:$0x1]
      %v520 = vld [vmem:[%s285 + $0x28] sm:$0xf]
      %v521 = vld [vmem:[%s285 + $0x2c] sm:$0x1]
      %v522 = vld [vmem:[%s285 + $0x30] sm:$0xf]
      %v523 = vld [vmem:[%s285 + $0x34] sm:$0x1]
      %v524 = vld [vmem:[%s285 + $0x38] sm:$0xf]
      %v525 = vld [vmem:[%s285 + $0x3c] sm:$0x1]
      %vm526 = vsmask.f32 3328
      %vm527 = vsmask.f32 7440
      %vm528 = vmor %vm526, %vm527
      %v530 = vshrl.u32 %v510, 16
      %v532 = vrot.slane %v530, 4
      %v533 = vshll.u32 %v510, 16
      %v535 = vrot.slane %v533, 5
      %v536 = vor.u32 %v532, %v535
      %v537 = vrot.slane %v536, 4
      %v539 = vshll.u32 %v511, 16
      %v541 = vrot.slane %v539, 5
      %v542 = vsel %vm528, %v537, %v541
      %v544 = vshrl.u32 %v512, 16
      %v546 = vrot.slane %v544, 4
      %v547 = vshll.u32 %v512, 16
      %v549 = vrot.slane %v547, 5
      %v550 = vor.u32 %v546, %v549
      %v551 = vrot.slane %v550, 4
      %v553 = vshll.u32 %v513, 16
      %v555 = vrot.slane %v553, 5
      %v556 = vsel %vm528, %v551, %v555
      %v558 = vshrl.u32 %v514, 16
      %v560 = vrot.slane %v558, 4
      %v561 = vshll.u32 %v514, 16
      %v563 = vrot.slane %v561, 5
      %v564 = vor.u32 %v560, %v563
      %v565 = vrot.slane %v564, 4
      %v567 = vshll.u32 %v515, 16
      %v569 = vrot.slane %v567, 5
      %v570 = vsel %vm528, %v565, %v569
      %v572 = vshrl.u32 %v516, 16
      %v574 = vrot.slane %v572, 4
      %v575 = vshll.u32 %v516, 16
      %v577 = vrot.slane %v575, 5
      %v578 = vor.u32 %v574, %v577
      %v579 = vrot.slane %v578, 4
      %v581 = vshll.u32 %v517, 16
      %v583 = vrot.slane %v581, 5
      %v584 = vsel %vm528, %v579, %v583
      %v586 = vshrl.u32 %v518, 16
      %v588 = vrot.slane %v586, 4
      %v589 = vshll.u32 %v518, 16
      %v591 = vrot.slane %v589, 5
      %v592 = vor.u32 %v588, %v591
      %v593 = vrot.slane %v592, 4
      %v595 = vshll.u32 %v519, 16
      %v597 = vrot.slane %v595, 5
      %v598 = vsel %vm528, %v593, %v597
      %v600 = vshrl.u32 %v520, 16
      %v602 = vrot.slane %v600, 4
      %v603 = vshll.u32 %v520, 16
      %v605 = vrot.slane %v603, 5
      %v606 = vor.u32 %v602, %v605
      %v607 = vrot.slane %v606, 4
      %v609 = vshll.u32 %v521, 16
      %v611 = vrot.slane %v609, 5
      %v612 = vsel %vm528, %v607, %v611
      %v614 = vshrl.u32 %v522, 16
      %v616 = vrot.slane %v614, 4
      %v617 = vshll.u32 %v522, 16
      %v619 = vrot.slane %v617, 5
      %v620 = vor.u32 %v616, %v619
      %v621 = vrot.slane %v620, 4
      %v623 = vshll.u32 %v523, 16
      %v625 = vrot.slane %v623, 5
      %v626 = vsel %vm528, %v621, %v625
      %v628 = vshrl.u32 %v524, 16
      %v630 = vrot.slane %v628, 4
      %v631 = vshll.u32 %v524, 16
      %v633 = vrot.slane %v631, 5
      %v634 = vor.u32 %v630, %v633
      %v635 = vrot.slane %v634, 4
      %v637 = vshll.u32 %v525, 16
      %v639 = vrot.slane %v637, 5
      %v640 = vsel %vm528, %v635, %v639
      %s641 = scalar_lea.vmem %s261, 4
      %v642 = vld [vmem:[%s641] sm:$0x3]
      %v643 = vunpack.c.l.b16 %v542
      %v644 = vunpack.c.l.b16 %v556
      %v645 = vunpack.c.l.b16 %v570
      %v646 = vunpack.c.l.b16 %v584
      %v647 = vunpack.c.l.b16 %v598
      %v648 = vunpack.c.l.b16 %v612
      %v649 = vunpack.c.l.b16 %v626
      %v650 = vunpack.c.l.b16 %v640
      %v651 = vpack.c.b16 %v644, %v643
      %v652 = vpack.c.b16 %v646, %v645
      %v653 = vpack.c.b16 %v648, %v647
      %v654 = vpack.c.b16 %v650, %v649
      %v656 = vsel %vm328, %v651, 0
      %v659 = vsel %vm328, %v652, 0
      %v662 = vsel %vm328, %v653, 0
      %v665 = vsel %vm328, %v654, 0
      %v668 = vsel %vm341, %v642, 0
      %670 = vmatprep.subr.bf16.mxu0 0
      %671 = vmatpush1.bf16.msra.mxu0 %v668
      %672 = vmatprep.subr.bf16.mxu0 0
      %673 = vmatpush1.bf16.msra.mxu0 0
      %674 = vmatprep.subr.bf16.mxu0 0
      %675 = vmatpush1.bf16.msra.mxu0 0
      %676 = vmatprep.subr.bf16.mxu0 0
      %677 = vmatpush1.bf16.msra.mxu0 0
      %678 = vmatprep.subr.bf16.mxu0 0
      %679 = vmatpush1.bf16.msra.mxu0 0
      %680 = vmatprep.subr.bf16.mxu0 0
      %681 = vmatpush1.bf16.msra.mxu0 0
      %682 = vmatprep.subr.bf16.mxu0 0
      %683 = vmatpush1.bf16.msra.mxu0 0
      %684 = vmatprep.subr.bf16.mxu0 0
      %685 = vmatpush1.bf16.msra.mxu0 0
      %686 = vmatprep.subr.bf16.mxu0 0
      %687 = vmatpush1.bf16.msra.mxu0 0
      %688 = vmatprep.subr.bf16.mxu0 0
      %689 = vmatpush1.bf16.msra.mxu0 0
      %690 = vmatprep.subr.bf16.mxu0 0
      %691 = vmatpush1.bf16.msra.mxu0 0
      %692 = vmatprep.subr.bf16.mxu0 0
      %693 = vmatpush1.bf16.msra.mxu0 0
      %694 = vmatprep.subr.bf16.mxu0 0
      %695 = vmatpush1.bf16.msra.mxu0 0
      %696 = vmatprep.subr.bf16.mxu0 0
      %697 = vmatpush1.bf16.msra.mxu0 0
      %698 = vmatprep.subr.bf16.mxu0 0
      %699 = vmatpush1.bf16.msra.mxu0 0
      %700 = vmatprep.subr.bf16.mxu0 0
      %701 = vmatpush1.bf16.msra.mxu0 0
      %702 = vmatprep.mubr.bf16.mxu0 0
      %703 = vmatmul.mubr.bf16.gmra.mrb[0].mxu0 %v656
      %v704 = vpop.f32.mrb[0].mxu0
      %v705 = vadd.f32 0.0, %v704
      %v706 = vpop.f32.mrb[0].mxu0
      %v707 = vpop.f32.mrb[0].mxu0
      %v708 = vadd.f32 0.0, %v707
      %v709 = vpop.f32.mrb[0].mxu0
      %710 = vmatprep.mubr.bf16.mxu0 0
      %711 = vmatmul.mubr.bf16.gmra.mrb[0].mxu0 %v659
      %v712 = vpop.f32.mrb[0].mxu0
      %v713 = vadd.f32 0.0, %v712
      %v714 = vpop.f32.mrb[0].mxu0
      %v715 = vpop.f32.mrb[0].mxu0
      %v716 = vadd.f32 0.0, %v715
      %v717 = vpop.f32.mrb[0].mxu0
      %718 = vmatprep.mubr.bf16.mxu0 0
      %719 = vmatmul.mubr.bf16.gmra.mrb[0].mxu0 %v662
      %v720 = vpop.f32.mrb[0].mxu0
      %v721 = vadd.f32 0.0, %v720
      %v722 = vpop.f32.mrb[0].mxu0
      %v723 = vpop.f32.mrb[0].mxu0
      %v724 = vadd.f32 0.0, %v723
      %v725 = vpop.f32.mrb[0].mxu0
      %726 = vmatprep.mubr.bf16.mxu0 0
      %727 = vmatmul.mubr.bf16.gmra.mrb[0].mxu0 %v665
      %v728 = vpop.f32.mrb[0].mxu0
      %v729 = vadd.f32 0.0, %v728
      %v730 = vpop.f32.mrb[0].mxu0
      %v731 = vpop.f32.mrb[0].mxu0
      %v732 = vadd.f32 0.0, %v731
      %v733 = vpop.f32.mrb[0].mxu0
      %734 = vdwg.mxu0
      %v735 = vadd.f32 %v480, %v705
      %v736 = vadd.f32 %v483, %v708
      %v737 = vadd.f32 %v488, %v713
      %v738 = vadd.f32 %v491, %v716
      %v739 = vadd.f32 %v496, %v721
      %v740 = vadd.f32 %v499, %v724
      %v741 = vadd.f32 %v504, %v729
      %v742 = vadd.f32 %v507, %v732
      %s743 = sadd.s32 %s283, 36
      %s744 = smul.addr %s743, 4
      %s745 = scalar_lea.vmem %s257, %s744
      %v746 = vld [vmem:[%s745] sm:$0xf]
      %v747 = vld [vmem:[%s745 + $0x8] sm:$0xf]
      %v748 = vld [vmem:[%s745 + $0x10] sm:$0xf]
      %v749 = vld [vmem:[%s745 + $0x18] sm:$0xf]
      %v750 = vld [vmem:[%s745 + $0x20] sm:$0xf]
      %v751 = vld [vmem:[%s745 + $0x28] sm:$0xf]
      %v752 = vld [vmem:[%s745 + $0x30] sm:$0xf]
      %v753 = vld [vmem:[%s745 + $0x38] sm:$0xf]
      %s754 = scalar_lea.vmem %s261, 6
      %v755 = vld [vmem:[%s754] sm:$0x3]
      %v764 = vunpack.c.l.b16 %v746
      %v765 = vunpack.c.l.b16 %v747
      %v766 = vunpack.c.l.b16 %v748
      %v767 = vunpack.c.l.b16 %v749
      %v768 = vunpack.c.l.b16 %v750
      %v769 = vunpack.c.l.b16 %v751
      %v770 = vunpack.c.l.b16 %v752
      %v771 = vunpack.c.l.b16 %v753
      %v772 = vpack.c.b16 %v765, %v764
      %v773 = vpack.c.b16 %v767, %v766
      %v774 = vpack.c.b16 %v769, %v768
      %v775 = vpack.c.b16 %v771, %v770
      %v777 = vsel %vm328, %v772, 0
      %v780 = vsel %vm328, %v773, 0
      %v783 = vsel %vm328, %v774, 0
      %v786 = vsel %vm328, %v775, 0
      %v789 = vsel %vm341, %v755, 0
      %791 = vmatprep.subr.bf16.mxu0 0
      %792 = vmatpush1.bf16.msra.mxu0 %v789
      %793 = vmatprep.subr.bf16.mxu0 0
      %794 = vmatpush1.bf16.msra.mxu0 0
      %795 = vmatprep.subr.bf16.mxu0 0
      %796 = vmatpush1.bf16.msra.mxu0 0
      %797 = vmatprep.subr.bf16.mxu0 0
      %798 = vmatpush1.bf16.msra.mxu0 0
      %799 = vmatprep.subr.bf16.mxu0 0
      %800 = vmatpush1.bf16.msra.mxu0 0
      %801 = vmatprep.subr.bf16.mxu0 0
      %802 = vmatpush1.bf16.msra.mxu0 0
      %803 = vmatprep.subr.bf16.mxu0 0
      %804 = vmatpush1.bf16.msra.mxu0 0
      %805 = vmatprep.subr.bf16.mxu0 0
      %806 = vmatpush1.bf16.msra.mxu0 0
      %807 = vmatprep.subr.bf16.mxu0 0
      %808 = vmatpush1.bf16.msra.mxu0 0
      %809 = vmatprep.subr.bf16.mxu0 0
      %810 = vmatpush1.bf16.msra.mxu0 0
      %811 = vmatprep.subr.bf16.mxu0 0
      %812 = vmatpush1.bf16.msra.mxu0 0
      %813 = vmatprep.subr.bf16.mxu0 0
      %814 = vmatpush1.bf16.msra.mxu0 0
      %815 = vmatprep.subr.bf16.mxu0 0
      %816 = vmatpush1.bf16.msra.mxu0 0
      %817 = vmatprep.subr.bf16.mxu0 0
      %818 = vmatpush1.bf16.msra.mxu0 0
      %819 = vmatprep.subr.bf16.mxu0 0
      %820 = vmatpush1.bf16.msra.mxu0 0
      %821 = vmatprep.subr.bf16.mxu0 0
      %822 = vmatpush1.bf16.msra.mxu0 0
      %823 = vmatprep.mubr.bf16.mxu0 0
      %824 = vmatmul.mubr.bf16.gmra.mrb[0].mxu0 %v777
      %v825 = vpop.f32.mrb[0].mxu0
      %v826 = vadd.f32 0.0, %v825
      %v827 = vpop.f32.mrb[0].mxu0
      %v828 = vpop.f32.mrb[0].mxu0
      %v829 = vadd.f32 0.0, %v828
      %v830 = vpop.f32.mrb[0].mxu0
      %831 = vmatprep.mubr.bf16.mxu0 0
      %832 = vmatmul.mubr.bf16.gmra.mrb[0].mxu0 %v780
      %v833 = vpop.f32.mrb[0].mxu0
      %v834 = vadd.f32 0.0, %v833
      %v835 = vpop.f32.mrb[0].mxu0
      %v836 = vpop.f32.mrb[0].mxu0
      %v837 = vadd.f32 0.0, %v836
      %v838 = vpop.f32.mrb[0].mxu0
      %839 = vmatprep.mubr.bf16.mxu0 0
      %840 = vmatmul.mubr.bf16.gmra.mrb[0].mxu0 %v783
      %v841 = vpop.f32.mrb[0].mxu0
      %v842 = vadd.f32 0.0, %v841
      %v843 = vpop.f32.mrb[0].mxu0
      %v844 = vpop.f32.mrb[0].mxu0
      %v845 = vadd.f32 0.0, %v844
      %v846 = vpop.f32.mrb[0].mxu0
      %847 = vmatprep.mubr.bf16.mxu0 0
      %848 = vmatmul.mubr.bf16.gmra.mrb[0].mxu0 %v786
      %v849 = vpop.f32.mrb[0].mxu0
      %v850 = vadd.f32 0.0, %v849
      %v851 = vpop.f32.mrb[0].mxu0
      %v852 = vpop.f32.mrb[0].mxu0
      %v853 = vadd.f32 0.0, %v852
      %v854 = vpop.f32.mrb[0].mxu0
      %855 = vdwg.mxu0
      %v856 = vadd.f32 %v735, %v826
      %v857 = vadd.f32 %v736, %v829
      %v858 = vadd.f32 %v737, %v834
      %v859 = vadd.f32 %v738, %v837
      %v860 = vadd.f32 %v739, %v842
      %v861 = vadd.f32 %v740, %v845
      %v862 = vadd.f32 %v741, %v850
      %v863 = vadd.f32 %v742, %v853
      %s864 = sadd.s32 %s295, 36
      %s865 = smul.addr %s864, 4
      %s866 = scalar_lea.vmem %s257, %s865
      %v867 = vld [vmem:[%s866] sm:$0xf]
      %v868 = vld [vmem:[%s866 + $0x8] sm:$0xf]
      %v869 = vld [vmem:[%s866 + $0x10] sm:$0xf]
      %v870 = vld [vmem:[%s866 + $0x18] sm:$0xf]
      %v871 = vld [vmem:[%s866 + $0x20] sm:$0xf]
      %v872 = vld [vmem:[%s866 + $0x28] sm:$0xf]
      %v873 = vld [vmem:[%s866 + $0x30] sm:$0xf]
      %v874 = vld [vmem:[%s866 + $0x38] sm:$0xf]
      %s875 = scalar_lea.vmem %s261, 8
      %v876 = vld [vmem:[%s875] sm:$0x3]
      %v885 = vunpack.c.l.b16 %v867
      %v886 = vunpack.c.l.b16 %v868
      %v887 = vunpack.c.l.b16 %v869
      %v888 = vunpack.c.l.b16 %v870
      %v889 = vunpack.c.l.b16 %v871
      %v890 = vunpack.c.l.b16 %v872
      %v891 = vunpack.c.l.b16 %v873
      %v892 = vunpack.c.l.b16 %v874
      %v893 = vpack.c.b16 %v886, %v885
      %v894 = vpack.c.b16 %v888, %v887
      %v895 = vpack.c.b16 %v890, %v889
      %v896 = vpack.c.b16 %v892, %v891
      %v898 = vsel %vm328, %v893, 0
      %v901 = vsel %vm328, %v894, 0
      %v904 = vsel %vm328, %v895, 0
      %v907 = vsel %vm328, %v896, 0
      %v910 = vsel %vm341, %v876, 0
      %912 = vmatprep.subr.bf16.mxu0 0
      %913 = vmatpush1.bf16.msra.mxu0 %v910
      %914 = vmatprep.subr.bf16.mxu0 0
      %915 = vmatpush1.bf16.msra.mxu0 0
      %916 = vmatprep.subr.bf16.mxu0 0
      %917 = vmatpush1.bf16.msra.mxu0 0
      %918 = vmatprep.subr.bf16.mxu0 0
      %919 = vmatpush1.bf16.msra.mxu0 0
      %920 = vmatprep.subr.bf16.mxu0 0
      %921 = vmatpush1.bf16.msra.mxu0 0
      %922 = vmatprep.subr.bf16.mxu0 0
      %923 = vmatpush1.bf16.msra.mxu0 0
      %924 = vmatprep.subr.bf16.mxu0 0
      %925 = vmatpush1.bf16.msra.mxu0 0
      %926 = vmatprep.subr.bf16.mxu0 0
      %927 = vmatpush1.bf16.msra.mxu0 0
      %928 = vmatprep.subr.bf16.mxu0 0
      %929 = vmatpush1.bf16.msra.mxu0 0
      %930 = vmatprep.subr.bf16.mxu0 0
      %931 = vmatpush1.bf16.msra.mxu0 0
      %932 = vmatprep.subr.bf16.mxu0 0
      %933 = vmatpush1.bf16.msra.mxu0 0
      %934 = vmatprep.subr.bf16.mxu0 0
      %935 = vmatpush1.bf16.msra.mxu0 0
      %936 = vmatprep.subr.bf16.mxu0 0
      %937 = vmatpush1.bf16.msra.mxu0 0
      %938 = vmatprep.subr.bf16.mxu0 0
      %939 = vmatpush1.bf16.msra.mxu0 0
      %940 = vmatprep.subr.bf16.mxu0 0
      %941 = vmatpush1.bf16.msra.mxu0 0
      %942 = vmatprep.subr.bf16.mxu0 0
      %943 = vmatpush1.bf16.msra.mxu0 0
      %944 = vmatprep.mubr.bf16.mxu0 0
      %945 = vmatmul.mubr.bf16.gmra.mrb[0].mxu0 %v898
      %v946 = vpop.f32.mrb[0].mxu0
      %v947 = vadd.f32 0.0, %v946
      %v948 = vpop.f32.mrb[0].mxu0
      %v949 = vpop.f32.mrb[0].mxu0
      %v950 = vadd.f32 0.0, %v949
      %v951 = vpop.f32.mrb[0].mxu0
      %952 = vmatprep.mubr.bf16.mxu0 0
      %953 = vmatmul.mubr.bf16.gmra.mrb[0].mxu0 %v901
      %v954 = vpop.f32.mrb[0].mxu0
      %v955 = vadd.f32 0.0, %v954
      %v956 = vpop.f32.mrb[0].mxu0
      %v957 = vpop.f32.mrb[0].mxu0
      %v958 = vadd.f32 0.0, %v957
      %v959 = vpop.f32.mrb[0].mxu0
      %960 = vmatprep.mubr.bf16.mxu0 0
      %961 = vmatmul.mubr.bf16.gmra.mrb[0].mxu0 %v904
      %v962 = vpop.f32.mrb[0].mxu0
      %v963 = vadd.f32 0.0, %v962
      %v964 = vpop.f32.mrb[0].mxu0
      %v965 = vpop.f32.mrb[0].mxu0
      %v966 = vadd.f32 0.0, %v965
      %v967 = vpop.f32.mrb[0].mxu0
      %968 = vmatprep.mubr.bf16.mxu0 0
      %969 = vmatmul.mubr.bf16.gmra.mrb[0].mxu0 %v907
      %v970 = vpop.f32.mrb[0].mxu0
      %v971 = vadd.f32 0.0, %v970
      %v972 = vpop.f32.mrb[0].mxu0
      %v973 = vpop.f32.mrb[0].mxu0
      %v974 = vadd.f32 0.0, %v973
      %v975 = vpop.f32.mrb[0].mxu0
      %976 = vdwg.mxu0
      %v977 = vadd.f32 %v856, %v947
      %v978 = vadd.f32 %v857, %v950
      %v979 = vadd.f32 %v858, %v955
      %v980 = vadd.f32 %v859, %v958
      %v981 = vadd.f32 %v860, %v963
      %v982 = vadd.f32 %v861, %v966
      %v983 = vadd.f32 %v862, %v971
      %v984 = vadd.f32 %v863, %v974
      %v985 = vld [vmem:[%s745] sm:$0xf]
      %v986 = vld [vmem:[%s745 + $0x4] sm:$0x1]
      %v987 = vld [vmem:[%s745 + $0x8] sm:$0xf]
      %v988 = vld [vmem:[%s745 + $0xc] sm:$0x1]
      %v989 = vld [vmem:[%s745 + $0x10] sm:$0xf]
      %v990 = vld [vmem:[%s745 + $0x14] sm:$0x1]
      %v991 = vld [vmem:[%s745 + $0x18] sm:$0xf]
      %v992 = vld [vmem:[%s745 + $0x1c] sm:$0x1]
      %v993 = vld [vmem:[%s745 + $0x20] sm:$0xf]
      %v994 = vld [vmem:[%s745 + $0x24] sm:$0x1]
      %v995 = vld [vmem:[%s745 + $0x28] sm:$0xf]
      %v996 = vld [vmem:[%s745 + $0x2c] sm:$0x1]
      %v997 = vld [vmem:[%s745 + $0x30] sm:$0xf]
      %v998 = vld [vmem:[%s745 + $0x34] sm:$0x1]
      %v999 = vld [vmem:[%s745 + $0x38] sm:$0xf]
      %v1000 = vld [vmem:[%s745 + $0x3c] sm:$0x1]
      %v1002 = vshrl.u32 %v985, 16
      %v1004 = vrot.slane %v1002, 4
      %v1005 = vshll.u32 %v985, 16
      %v1007 = vrot.slane %v1005, 5
      %v1008 = vor.u32 %v1004, %v1007
      %v1009 = vrot.slane %v1008, 4
      %v1011 = vshll.u32 %v986, 16
      %v1013 = vrot.slane %v1011, 5
      %v1014 = vsel %vm528, %v1009, %v1013
      %v1016 = vshrl.u32 %v987, 16
      %v1018 = vrot.slane %v1016, 4
      %v1019 = vshll.u32 %v987, 16
      %v1021 = vrot.slane %v1019, 5
      %v1022 = vor.u32 %v1018, %v1021
      %v1023 = vrot.slane %v1022, 4
      %v1025 = vshll.u32 %v988, 16
      %v1027 = vrot.slane %v1025, 5
      %v1028 = vsel %vm528, %v1023, %v1027
      %v1030 = vshrl.u32 %v989, 16
      %v1032 = vrot.slane %v1030, 4
      %v1033 = vshll.u32 %v989, 16
      %v1035 = vrot.slane %v1033, 5
      %v1036 = vor.u32 %v1032, %v1035
      %v1037 = vrot.slane %v1036, 4
      %v1039 = vshll.u32 %v990, 16
      %v1041 = vrot.slane %v1039, 5
      %v1042 = vsel %vm528, %v1037, %v1041
      %v1044 = vshrl.u32 %v991, 16
      %v1046 = vrot.slane %v1044, 4
      %v1047 = vshll.u32 %v991, 16
      %v1049 = vrot.slane %v1047, 5
      %v1050 = vor.u32 %v1046, %v1049
      %v1051 = vrot.slane %v1050, 4
      %v1053 = vshll.u32 %v992, 16
      %v1055 = vrot.slane %v1053, 5
      %v1056 = vsel %vm528, %v1051, %v1055
      %v1058 = vshrl.u32 %v993, 16
      %v1060 = vrot.slane %v1058, 4
      %v1061 = vshll.u32 %v993, 16
      %v1063 = vrot.slane %v1061, 5
      %v1064 = vor.u32 %v1060, %v1063
      %v1065 = vrot.slane %v1064, 4
      %v1067 = vshll.u32 %v994, 16
      %v1069 = vrot.slane %v1067, 5
      %v1070 = vsel %vm528, %v1065, %v1069
      %v1072 = vshrl.u32 %v995, 16
      %v1074 = vrot.slane %v1072, 4
      %v1075 = vshll.u32 %v995, 16
      %v1077 = vrot.slane %v1075, 5
      %v1078 = vor.u32 %v1074, %v1077
      %v1079 = vrot.slane %v1078, 4
      %v1081 = vshll.u32 %v996, 16
      %v1083 = vrot.slane %v1081, 5
      %v1084 = vsel %vm528, %v1079, %v1083
      %v1086 = vshrl.u32 %v997, 16
      %v1088 = vrot.slane %v1086, 4
      %v1089 = vshll.u32 %v997, 16
      %v1091 = vrot.slane %v1089, 5
      %v1092 = vor.u32 %v1088, %v1091
      %v1093 = vrot.slane %v1092, 4
      %v1095 = vshll.u32 %v998, 16
      %v1097 = vrot.slane %v1095, 5
      %v1098 = vsel %vm528, %v1093, %v1097
      %v1100 = vshrl.u32 %v999, 16
      %v1102 = vrot.slane %v1100, 4
      %v1103 = vshll.u32 %v999, 16
      %v1105 = vrot.slane %v1103, 5
      %v1106 = vor.u32 %v1102, %v1105
      %v1107 = vrot.slane %v1106, 4
      %v1109 = vshll.u32 %v1000, 16
      %v1111 = vrot.slane %v1109, 5
      %v1112 = vsel %vm528, %v1107, %v1111
      %s1113 = scalar_lea.vmem %s261, 10
      %v1114 = vld [vmem:[%s1113] sm:$0x3]
      %v1115 = vunpack.c.l.b16 %v1014
      %v1116 = vunpack.c.l.b16 %v1028
      %v1117 = vunpack.c.l.b16 %v1042
      %v1118 = vunpack.c.l.b16 %v1056
      %v1119 = vunpack.c.l.b16 %v1070
      %v1120 = vunpack.c.l.b16 %v1084
      %v1121 = vunpack.c.l.b16 %v1098
      %v1122 = vunpack.c.l.b16 %v1112
      %v1123 = vpack.c.b16 %v1116, %v1115
      %v1124 = vpack.c.b16 %v1118, %v1117
      %v1125 = vpack.c.b16 %v1120, %v1119
      %v1126 = vpack.c.b16 %v1122, %v1121
      %v1128 = vsel %vm328, %v1123, 0
      %v1131 = vsel %vm328, %v1124, 0
      %v1134 = vsel %vm328, %v1125, 0
      %v1137 = vsel %vm328, %v1126, 0
      %v1140 = vsel %vm341, %v1114, 0
      %1142 = vmatprep.subr.bf16.mxu0 0
      %1143 = vmatpush1.bf16.msra.mxu0 %v1140
      %1144 = vmatprep.subr.bf16.mxu0 0
      %1145 = vmatpush1.bf16.msra.mxu0 0
      %1146 = vmatprep.subr.bf16.mxu0 0
      %1147 = vmatpush1.bf16.msra.mxu0 0
      %1148 = vmatprep.subr.bf16.mxu0 0
      %1149 = vmatpush1.bf16.msra.mxu0 0
      %1150 = vmatprep.subr.bf16.mxu0 0
      %1151 = vmatpush1.bf16.msra.mxu0 0
      %1152 = vmatprep.subr.bf16.mxu0 0
      %1153 = vmatpush1.bf16.msra.mxu0 0
      %1154 = vmatprep.subr.bf16.mxu0 0
      %1155 = vmatpush1.bf16.msra.mxu0 0
      %1156 = vmatprep.subr.bf16.mxu0 0
      %1157 = vmatpush1.bf16.msra.mxu0 0
      %1158 = vmatprep.subr.bf16.mxu0 0
      %1159 = vmatpush1.bf16.msra.mxu0 0
      %1160 = vmatprep.subr.bf16.mxu0 0
      %1161 = vmatpush1.bf16.msra.mxu0 0
      %1162 = vmatprep.subr.bf16.mxu0 0
      %1163 = vmatpush1.bf16.msra.mxu0 0
      %1164 = vmatprep.subr.bf16.mxu0 0
      %1165 = vmatpush1.bf16.msra.mxu0 0
      %1166 = vmatprep.subr.bf16.mxu0 0
      %1167 = vmatpush1.bf16.msra.mxu0 0
      %1168 = vmatprep.subr.bf16.mxu0 0
      %1169 = vmatpush1.bf16.msra.mxu0 0
      %1170 = vmatprep.subr.bf16.mxu0 0
      %1171 = vmatpush1.bf16.msra.mxu0 0
      %1172 = vmatprep.subr.bf16.mxu0 0
      %1173 = vmatpush1.bf16.msra.mxu0 0
      %1174 = vmatprep.mubr.bf16.mxu0 0
      %1175 = vmatmul.mubr.bf16.gmra.mrb[0].mxu0 %v1128
      %v1176 = vpop.f32.mrb[0].mxu0
      %v1177 = vadd.f32 0.0, %v1176
      %v1178 = vpop.f32.mrb[0].mxu0
      %v1179 = vpop.f32.mrb[0].mxu0
      %v1180 = vadd.f32 0.0, %v1179
      %v1181 = vpop.f32.mrb[0].mxu0
      %1182 = vmatprep.mubr.bf16.mxu0 0
      %1183 = vmatmul.mubr.bf16.gmra.mrb[0].mxu0 %v1131
      %v1184 = vpop.f32.mrb[0].mxu0
      %v1185 = vadd.f32 0.0, %v1184
      %v1186 = vpop.f32.mrb[0].mxu0
      %v1187 = vpop.f32.mrb[0].mxu0
      %v1188 = vadd.f32 0.0, %v1187
      %v1189 = vpop.f32.mrb[0].mxu0
      %1190 = vmatprep.mubr.bf16.mxu0 0
      %1191 = vmatmul.mubr.bf16.gmra.mrb[0].mxu0 %v1134
      %v1192 = vpop.f32.mrb[0].mxu0
      %v1193 = vadd.f32 0.0, %v1192
      %v1194 = vpop.f32.mrb[0].mxu0
      %v1195 = vpop.f32.mrb[0].mxu0
      %v1196 = vadd.f32 0.0, %v1195
      %v1197 = vpop.f32.mrb[0].mxu0
      %1198 = vmatprep.mubr.bf16.mxu0 0
      %1199 = vmatmul.mubr.bf16.gmra.mrb[0].mxu0 %v1137
      %v1200 = vpop.f32.mrb[0].mxu0
      %v1201 = vadd.f32 0.0, %v1200
      %v1202 = vpop.f32.mrb[0].mxu0
      %v1203 = vpop.f32.mrb[0].mxu0
      %v1204 = vadd.f32 0.0, %v1203
      %v1205 = vpop.f32.mrb[0].mxu0
      %1206 = vdwg.mxu0
      %v1207 = vadd.f32 %v977, %v1177
      %v1208 = vadd.f32 %v978, %v1180
      %v1209 = vadd.f32 %v979, %v1185
      %v1210 = vadd.f32 %v980, %v1188
      %v1211 = vadd.f32 %v981, %v1193
      %v1212 = vadd.f32 %v982, %v1196
      %v1213 = vadd.f32 %v983, %v1201
      %v1214 = vadd.f32 %v984, %v1204
      %s1215 = sadd.s32 %s282, 1
      %s1216 = smul.u32 %s1215, 2
      %s1217 = smul.addr %s1216, 4
      %s1218 = scalar_lea.vmem %s257, %s1217
      %v1219 = vld [vmem:[%s1218] sm:$0xf]
      %v1220 = vld [vmem:[%s1218 + $0x8] sm:$0xf]
      %v1221 = vld [vmem:[%s1218 + $0x10] sm:$0xf]
      %v1222 = vld [vmem:[%s1218 + $0x18] sm:$0xf]
      %v1223 = vld [vmem:[%s1218 + $0x20] sm:$0xf]
      %v1224 = vld [vmem:[%s1218 + $0x28] sm:$0xf]
      %v1225 = vld [vmem:[%s1218 + $0x30] sm:$0xf]
      %v1226 = vld [vmem:[%s1218 + $0x38] sm:$0xf]
      %s1227 = scalar_lea.vmem %s261, 12
      %v1228 = vld [vmem:[%s1227] sm:$0x3]
      %v1237 = vunpack.c.l.b16 %v1219
      %v1238 = vunpack.c.l.b16 %v1220
      %v1239 = vunpack.c.l.b16 %v1221
      %v1240 = vunpack.c.l.b16 %v1222
      %v1241 = vunpack.c.l.b16 %v1223
      %v1242 = vunpack.c.l.b16 %v1224
      %v1243 = vunpack.c.l.b16 %v1225
      %v1244 = vunpack.c.l.b16 %v1226
      %v1245 = vpack.c.b16 %v1238, %v1237
      %v1246 = vpack.c.b16 %v1240, %v1239
      %v1247 = vpack.c.b16 %v1242, %v1241
      %v1248 = vpack.c.b16 %v1244, %v1243
      %v1250 = vsel %vm328, %v1245, 0
      %v1253 = vsel %vm328, %v1246, 0
      %v1256 = vsel %vm328, %v1247, 0
      %v1259 = vsel %vm328, %v1248, 0
      %v1262 = vsel %vm341, %v1228, 0
      %1264 = vmatprep.subr.bf16.mxu0 0
      %1265 = vmatpush1.bf16.msra.mxu0 %v1262
      %1266 = vmatprep.subr.bf16.mxu0 0
      %1267 = vmatpush1.bf16.msra.mxu0 0
      %1268 = vmatprep.subr.bf16.mxu0 0
      %1269 = vmatpush1.bf16.msra.mxu0 0
      %1270 = vmatprep.subr.bf16.mxu0 0
      %1271 = vmatpush1.bf16.msra.mxu0 0
      %1272 = vmatprep.subr.bf16.mxu0 0
      %1273 = vmatpush1.bf16.msra.mxu0 0
      %1274 = vmatprep.subr.bf16.mxu0 0
      %1275 = vmatpush1.bf16.msra.mxu0 0
      %1276 = vmatprep.subr.bf16.mxu0 0
      %1277 = vmatpush1.bf16.msra.mxu0 0
      %1278 = vmatprep.subr.bf16.mxu0 0
      %1279 = vmatpush1.bf16.msra.mxu0 0
      %1280 = vmatprep.subr.bf16.mxu0 0
      %1281 = vmatpush1.bf16.msra.mxu0 0
      %1282 = vmatprep.subr.bf16.mxu0 0
      %1283 = vmatpush1.bf16.msra.mxu0 0
      %1284 = vmatprep.subr.bf16.mxu0 0
      %1285 = vmatpush1.bf16.msra.mxu0 0
      %1286 = vmatprep.subr.bf16.mxu0 0
      %1287 = vmatpush1.bf16.msra.mxu0 0
      %1288 = vmatprep.subr.bf16.mxu0 0
      %1289 = vmatpush1.bf16.msra.mxu0 0
      %1290 = vmatprep.subr.bf16.mxu0 0
      %1291 = vmatpush1.bf16.msra.mxu0 0
      %1292 = vmatprep.subr.bf16.mxu0 0
      %1293 = vmatpush1.bf16.msra.mxu0 0
      %1294 = vmatprep.subr.bf16.mxu0 0
      %1295 = vmatpush1.bf16.msra.mxu0 0
      %1296 = vmatprep.mubr.bf16.mxu0 0
      %1297 = vmatmul.mubr.bf16.gmra.mrb[0].mxu0 %v1250
      %v1298 = vpop.f32.mrb[0].mxu0
      %v1299 = vadd.f32 0.0, %v1298
      %v1300 = vpop.f32.mrb[0].mxu0
      %v1301 = vpop.f32.mrb[0].mxu0
      %v1302 = vadd.f32 0.0, %v1301
      %v1303 = vpop.f32.mrb[0].mxu0
      %1304 = vmatprep.mubr.bf16.mxu0 0
      %1305 = vmatmul.mubr.bf16.gmra.mrb[0].mxu0 %v1253
      %v1306 = vpop.f32.mrb[0].mxu0
      %v1307 = vadd.f32 0.0, %v1306
      %v1308 = vpop.f32.mrb[0].mxu0
      %v1309 = vpop.f32.mrb[0].mxu0
      %v1310 = vadd.f32 0.0, %v1309
      %v1311 = vpop.f32.mrb[0].mxu0
      %1312 = vmatprep.mubr.bf16.mxu0 0
      %1313 = vmatmul.mubr.bf16.gmra.mrb[0].mxu0 %v1256
      %v1314 = vpop.f32.mrb[0].mxu0
      %v1315 = vadd.f32 0.0, %v1314
      %v1316 = vpop.f32.mrb[0].mxu0
      %v1317 = vpop.f32.mrb[0].mxu0
      %v1318 = vadd.f32 0.0, %v1317
      %v1319 = vpop.f32.mrb[0].mxu0
      %1320 = vmatprep.mubr.bf16.mxu0 0
      %1321 = vmatmul.mubr.bf16.gmra.mrb[0].mxu0 %v1259
      %v1322 = vpop.f32.mrb[0].mxu0
      %v1323 = vadd.f32 0.0, %v1322
      %v1324 = vpop.f32.mrb[0].mxu0
      %v1325 = vpop.f32.mrb[0].mxu0
      %v1326 = vadd.f32 0.0, %v1325
      %v1327 = vpop.f32.mrb[0].mxu0
      %1328 = vdwg.mxu0
      %v1329 = vadd.f32 %v1207, %v1299
      %v1330 = vadd.f32 %v1208, %v1302
      %v1331 = vadd.f32 %v1209, %v1307
      %v1332 = vadd.f32 %v1210, %v1310
      %v1333 = vadd.f32 %v1211, %v1315
      %v1334 = vadd.f32 %v1212, %v1318
      %v1335 = vadd.f32 %v1213, %v1323
      %v1336 = vadd.f32 %v1214, %v1326
      %s1337 = sadd.s32 %s1216, 18
      %s1338 = smul.addr %s1337, 4
      %s1339 = scalar_lea.vmem %s257, %s1338
      %v1340 = vld [vmem:[%s1339] sm:$0xf]
      %v1341 = vld [vmem:[%s1339 + $0x8] sm:$0xf]
      %v1342 = vld [vmem:[%s1339 + $0x10] sm:$0xf]
      %v1343 = vld [vmem:[%s1339 + $0x18] sm:$0xf]
      %v1344 = vld [vmem:[%s1339 + $0x20] sm:$0xf]
      %v1345 = vld [vmem:[%s1339 + $0x28] sm:$0xf]
      %v1346 = vld [vmem:[%s1339 + $0x30] sm:$0xf]
      %v1347 = vld [vmem:[%s1339 + $0x38] sm:$0xf]
      %s1348 = scalar_lea.vmem %s261, 14
      %v1349 = vld [vmem:[%s1348] sm:$0x3]
      %v1358 = vunpack.c.l.b16 %v1340
      %v1359 = vunpack.c.l.b16 %v1341
      %v1360 = vunpack.c.l.b16 %v1342
      %v1361 = vunpack.c.l.b16 %v1343
      %v1362 = vunpack.c.l.b16 %v1344
      %v1363 = vunpack.c.l.b16 %v1345
      %v1364 = vunpack.c.l.b16 %v1346
      %v1365 = vunpack.c.l.b16 %v1347
      %v1366 = vpack.c.b16 %v1359, %v1358
      %v1367 = vpack.c.b16 %v1361, %v1360
      %v1368 = vpack.c.b16 %v1363, %v1362
      %v1369 = vpack.c.b16 %v1365, %v1364
      %v1371 = vsel %vm328, %v1366, 0
      %v1374 = vsel %vm328, %v1367, 0
      %v1377 = vsel %vm328, %v1368, 0
      %v1380 = vsel %vm328, %v1369, 0
      %v1383 = vsel %vm341, %v1349, 0
      %1385 = vmatprep.subr.bf16.mxu0 0
      %1386 = vmatpush1.bf16.msra.mxu0 %v1383
      %1387 = vmatprep.subr.bf16.mxu0 0
      %1388 = vmatpush1.bf16.msra.mxu0 0
      %1389 = vmatprep.subr.bf16.mxu0 0
      %1390 = vmatpush1.bf16.msra.mxu0 0
      %1391 = vmatprep.subr.bf16.mxu0 0
      %1392 = vmatpush1.bf16.msra.mxu0 0
      %1393 = vmatprep.subr.bf16.mxu0 0
      %1394 = vmatpush1.bf16.msra.mxu0 0
      %1395 = vmatprep.subr.bf16.mxu0 0
      %1396 = vmatpush1.bf16.msra.mxu0 0
      %1397 = vmatprep.subr.bf16.mxu0 0
      %1398 = vmatpush1.bf16.msra.mxu0 0
      %1399 = vmatprep.subr.bf16.mxu0 0
      %1400 = vmatpush1.bf16.msra.mxu0 0
      %1401 = vmatprep.subr.bf16.mxu0 0
      %1402 = vmatpush1.bf16.msra.mxu0 0
      %1403 = vmatprep.subr.bf16.mxu0 0
      %1404 = vmatpush1.bf16.msra.mxu0 0
      %1405 = vmatprep.subr.bf16.mxu0 0
      %1406 = vmatpush1.bf16.msra.mxu0 0
      %1407 = vmatprep.subr.bf16.mxu0 0
      %1408 = vmatpush1.bf16.msra.mxu0 0
      %1409 = vmatprep.subr.bf16.mxu0 0
      %1410 = vmatpush1.bf16.msra.mxu0 0
      %1411 = vmatprep.subr.bf16.mxu0 0
      %1412 = vmatpush1.bf16.msra.mxu0 0
      %1413 = vmatprep.subr.bf16.mxu0 0
      %1414 = vmatpush1.bf16.msra.mxu0 0
      %1415 = vmatprep.subr.bf16.mxu0 0
      %1416 = vmatpush1.bf16.msra.mxu0 0
      %1417 = vmatprep.mubr.bf16.mxu0 0
      %1418 = vmatmul.mubr.bf16.gmra.mrb[0].mxu0 %v1371
      %v1419 = vpop.f32.mrb[0].mxu0
      %v1420 = vadd.f32 0.0, %v1419
      %v1421 = vpop.f32.mrb[0].mxu0
      %v1422 = vpop.f32.mrb[0].mxu0
      %v1423 = vadd.f32 0.0, %v1422
      %v1424 = vpop.f32.mrb[0].mxu0
      %1425 = vmatprep.mubr.bf16.mxu0 0
      %1426 = vmatmul.mubr.bf16.gmra.mrb[0].mxu0 %v1374
      %v1427 = vpop.f32.mrb[0].mxu0
      %v1428 = vadd.f32 0.0, %v1427
      %v1429 = vpop.f32.mrb[0].mxu0
      %v1430 = vpop.f32.mrb[0].mxu0
      %v1431 = vadd.f32 0.0, %v1430
      %v1432 = vpop.f32.mrb[0].mxu0
      %1433 = vmatprep.mubr.bf16.mxu0 0
      %1434 = vmatmul.mubr.bf16.gmra.mrb[0].mxu0 %v1377
      %v1435 = vpop.f32.mrb[0].mxu0
      %v1436 = vadd.f32 0.0, %v1435
      %v1437 = vpop.f32.mrb[0].mxu0
      %v1438 = vpop.f32.mrb[0].mxu0
      %v1439 = vadd.f32 0.0, %v1438
      %v1440 = vpop.f32.mrb[0].mxu0
      %1441 = vmatprep.mubr.bf16.mxu0 0
      %1442 = vmatmul.mubr.bf16.gmra.mrb[0].mxu0 %v1380
      %v1443 = vpop.f32.mrb[0].mxu0
      %v1444 = vadd.f32 0.0, %v1443
      %v1445 = vpop.f32.mrb[0].mxu0
      %v1446 = vpop.f32.mrb[0].mxu0
      %v1447 = vadd.f32 0.0, %v1446
      %v1448 = vpop.f32.mrb[0].mxu0
      %1449 = vdwg.mxu0
      %v1450 = vadd.f32 %v1329, %v1420
      %v1451 = vadd.f32 %v1330, %v1423
      %v1452 = vadd.f32 %v1331, %v1428
      %v1453 = vadd.f32 %v1332, %v1431
      %v1454 = vadd.f32 %v1333, %v1436
      %v1455 = vadd.f32 %v1334, %v1439
      %v1456 = vadd.f32 %v1335, %v1444
      %v1457 = vadd.f32 %v1336, %v1447
      %v1458 = vld [vmem:[%s1218] sm:$0xf]
      %v1459 = vld [vmem:[%s1218 + $0x4] sm:$0x1]
      %v1460 = vld [vmem:[%s1218 + $0x8] sm:$0xf]
      %v1461 = vld [vmem:[%s1218 + $0xc] sm:$0x1]
      %v1462 = vld [vmem:[%s1218 + $0x10] sm:$0xf]
      %v1463 = vld [vmem:[%s1218 + $0x14] sm:$0x1]
      %v1464 = vld [vmem:[%s1218 + $0x18] sm:$0xf]
      %v1465 = vld [vmem:[%s1218 + $0x1c] sm:$0x1]
      %v1466 = vld [vmem:[%s1218 + $0x20] sm:$0xf]
      %v1467 = vld [vmem:[%s1218 + $0x24] sm:$0x1]
      %v1468 = vld [vmem:[%s1218 + $0x28] sm:$0xf]
      %v1469 = vld [vmem:[%s1218 + $0x2c] sm:$0x1]
      %v1470 = vld [vmem:[%s1218 + $0x30] sm:$0xf]
      %v1471 = vld [vmem:[%s1218 + $0x34] sm:$0x1]
      %v1472 = vld [vmem:[%s1218 + $0x38] sm:$0xf]
      %v1473 = vld [vmem:[%s1218 + $0x3c] sm:$0x1]
      %v1475 = vshrl.u32 %v1458, 16
      %v1477 = vrot.slane %v1475, 4
      %v1478 = vshll.u32 %v1458, 16
      %v1480 = vrot.slane %v1478, 5
      %v1481 = vor.u32 %v1477, %v1480
      %v1482 = vrot.slane %v1481, 4
      %v1484 = vshll.u32 %v1459, 16
      %v1486 = vrot.slane %v1484, 5
      %v1487 = vsel %vm528, %v1482, %v1486
      %v1489 = vshrl.u32 %v1460, 16
      %v1491 = vrot.slane %v1489, 4
      %v1492 = vshll.u32 %v1460, 16
      %v1494 = vrot.slane %v1492, 5
      %v1495 = vor.u32 %v1491, %v1494
      %v1496 = vrot.slane %v1495, 4
      %v1498 = vshll.u32 %v1461, 16
      %v1500 = vrot.slane %v1498, 5
      %v1501 = vsel %vm528, %v1496, %v1500
      %v1503 = vshrl.u32 %v1462, 16
      %v1505 = vrot.slane %v1503, 4
      %v1506 = vshll.u32 %v1462, 16
      %v1508 = vrot.slane %v1506, 5
      %v1509 = vor.u32 %v1505, %v1508
      %v1510 = vrot.slane %v1509, 4
      %v1512 = vshll.u32 %v1463, 16
      %v1514 = vrot.slane %v1512, 5
      %v1515 = vsel %vm528, %v1510, %v1514
      %v1517 = vshrl.u32 %v1464, 16
      %v1519 = vrot.slane %v1517, 4
      %v1520 = vshll.u32 %v1464, 16
      %v1522 = vrot.slane %v1520, 5
      %v1523 = vor.u32 %v1519, %v1522
      %v1524 = vrot.slane %v1523, 4
      %v1526 = vshll.u32 %v1465, 16
      %v1528 = vrot.slane %v1526, 5
      %v1529 = vsel %vm528, %v1524, %v1528
      %v1531 = vshrl.u32 %v1466, 16
      %v1533 = vrot.slane %v1531, 4
      %v1534 = vshll.u32 %v1466, 16
      %v1536 = vrot.slane %v1534, 5
      %v1537 = vor.u32 %v1533, %v1536
      %v1538 = vrot.slane %v1537, 4
      %v1540 = vshll.u32 %v1467, 16
      %v1542 = vrot.slane %v1540, 5
      %v1543 = vsel %vm528, %v1538, %v1542
      %v1545 = vshrl.u32 %v1468, 16
      %v1547 = vrot.slane %v1545, 4
      %v1548 = vshll.u32 %v1468, 16
      %v1550 = vrot.slane %v1548, 5
      %v1551 = vor.u32 %v1547, %v1550
      %v1552 = vrot.slane %v1551, 4
      %v1554 = vshll.u32 %v1469, 16
      %v1556 = vrot.slane %v1554, 5
      %v1557 = vsel %vm528, %v1552, %v1556
      %v1559 = vshrl.u32 %v1470, 16
      %v1561 = vrot.slane %v1559, 4
      %v1562 = vshll.u32 %v1470, 16
      %v1564 = vrot.slane %v1562, 5
      %v1565 = vor.u32 %v1561, %v1564
      %v1566 = vrot.slane %v1565, 4
      %v1568 = vshll.u32 %v1471, 16
      %v1570 = vrot.slane %v1568, 5
      %v1571 = vsel %vm528, %v1566, %v1570
      %v1573 = vshrl.u32 %v1472, 16
      %v1575 = vrot.slane %v1573, 4
      %v1576 = vshll.u32 %v1472, 16
      %v1578 = vrot.slane %v1576, 5
      %v1579 = vor.u32 %v1575, %v1578
      %v1580 = vrot.slane %v1579, 4
      %v1582 = vshll.u32 %v1473, 16
      %v1584 = vrot.slane %v1582, 5
      %v1585 = vsel %vm528, %v1580, %v1584
      %s1586 = scalar_lea.vmem %s261, 16
      %v1587 = vld [vmem:[%s1586] sm:$0x3]
      %v1588 = vunpack.c.l.b16 %v1487
      %v1589 = vunpack.c.l.b16 %v1501
      %v1590 = vunpack.c.l.b16 %v1515
      %v1591 = vunpack.c.l.b16 %v1529
      %v1592 = vunpack.c.l.b16 %v1543
      %v1593 = vunpack.c.l.b16 %v1557
      %v1594 = vunpack.c.l.b16 %v1571
      %v1595 = vunpack.c.l.b16 %v1585
      %v1596 = vpack.c.b16 %v1589, %v1588
      %v1597 = vpack.c.b16 %v1591, %v1590
      %v1598 = vpack.c.b16 %v1593, %v1592
      %v1599 = vpack.c.b16 %v1595, %v1594
      %v1601 = vsel %vm328, %v1596, 0
      %v1604 = vsel %vm328, %v1597, 0
      %v1607 = vsel %vm328, %v1598, 0
      %v1610 = vsel %vm328, %v1599, 0
      %v1613 = vsel %vm341, %v1587, 0
      %1615 = vmatprep.subr.bf16.mxu0 0
      %1616 = vmatpush1.bf16.msra.mxu0 %v1613
      %1617 = vmatprep.subr.bf16.mxu0 0
      %1618 = vmatpush1.bf16.msra.mxu0 0
      %1619 = vmatprep.subr.bf16.mxu0 0
      %1620 = vmatpush1.bf16.msra.mxu0 0
      %1621 = vmatprep.subr.bf16.mxu0 0
      %1622 = vmatpush1.bf16.msra.mxu0 0
      %1623 = vmatprep.subr.bf16.mxu0 0
      %1624 = vmatpush1.bf16.msra.mxu0 0
      %1625 = vmatprep.subr.bf16.mxu0 0
      %1626 = vmatpush1.bf16.msra.mxu0 0
      %1627 = vmatprep.subr.bf16.mxu0 0
      %1628 = vmatpush1.bf16.msra.mxu0 0
      %1629 = vmatprep.subr.bf16.mxu0 0
      %1630 = vmatpush1.bf16.msra.mxu0 0
      %1631 = vmatprep.subr.bf16.mxu0 0
      %1632 = vmatpush1.bf16.msra.mxu0 0
      %1633 = vmatprep.subr.bf16.mxu0 0
      %1634 = vmatpush1.bf16.msra.mxu0 0
      %1635 = vmatprep.subr.bf16.mxu0 0
      %1636 = vmatpush1.bf16.msra.mxu0 0
      %1637 = vmatprep.subr.bf16.mxu0 0
      %1638 = vmatpush1.bf16.msra.mxu0 0
      %1639 = vmatprep.subr.bf16.mxu0 0
      %1640 = vmatpush1.bf16.msra.mxu0 0
      %1641 = vmatprep.subr.bf16.mxu0 0
      %1642 = vmatpush1.bf16.msra.mxu0 0
      %1643 = vmatprep.subr.bf16.mxu0 0
      %1644 = vmatpush1.bf16.msra.mxu0 0
      %1645 = vmatprep.subr.bf16.mxu0 0
      %1646 = vmatpush1.bf16.msra.mxu0 0
      %1647 = vmatprep.mubr.bf16.mxu0 0
      %1648 = vmatmul.mubr.bf16.gmra.mrb[0].mxu0 %v1601
      %v1649 = vpop.f32.mrb[0].mxu0
      %v1650 = vadd.f32 0.0, %v1649
      %v1651 = vpop.f32.mrb[0].mxu0
      %v1652 = vpop.f32.mrb[0].mxu0
      %v1653 = vadd.f32 0.0, %v1652
      %v1654 = vpop.f32.mrb[0].mxu0
      %1655 = vmatprep.mubr.bf16.mxu0 0
      %1656 = vmatmul.mubr.bf16.gmra.mrb[0].mxu0 %v1604
      %v1657 = vpop.f32.mrb[0].mxu0
      %v1658 = vadd.f32 0.0, %v1657
      %v1659 = vpop.f32.mrb[0].mxu0
      %v1660 = vpop.f32.mrb[0].mxu0
      %v1661 = vadd.f32 0.0, %v1660
      %v1662 = vpop.f32.mrb[0].mxu0
      %1663 = vmatprep.mubr.bf16.mxu0 0
      %1664 = vmatmul.mubr.bf16.gmra.mrb[0].mxu0 %v1607
      %v1665 = vpop.f32.mrb[0].mxu0
      %v1666 = vadd.f32 0.0, %v1665
      %v1667 = vpop.f32.mrb[0].mxu0
      %v1668 = vpop.f32.mrb[0].mxu0
      %v1669 = vadd.f32 0.0, %v1668
      %v1670 = vpop.f32.mrb[0].mxu0
      %1671 = vmatprep.mubr.bf16.mxu0 0
      %1672 = vmatmul.mubr.bf16.gmra.mrb[0].mxu0 %v1610
      %v1673 = vpop.f32.mrb[0].mxu0
      %v1674 = vadd.f32 0.0, %v1673
      %v1675 = vpop.f32.mrb[0].mxu0
      %v1676 = vpop.f32.mrb[0].mxu0
      %v1677 = vadd.f32 0.0, %v1676
      %v1678 = vpop.f32.mrb[0].mxu0
      %1679 = vdwg.mxu0
      %v1680 = vadd.f32 %v1450, %v1650
      %v1681 = vadd.f32 %v1451, %v1653
      %v1682 = vadd.f32 %v1452, %v1658
      %v1683 = vadd.f32 %v1453, %v1661
      %v1684 = vadd.f32 %v1454, %v1666
      %v1685 = vadd.f32 %v1455, %v1669
      %v1686 = vadd.f32 %v1456, %v1674
      %v1687 = vadd.f32 %v1457, %v1677
      %v1688 = vld [vmem:[%s264] sm:$0x1]
      %v1690 = vlaneseq
      %v1691 = vshrl.u32 %v1690, 7
      %v1692 = vsub.s32 0, %v1691
      %v1693 = vrot.slane %v1688, %v1692
      %v1695 = vmul.f32 %v1680, %v1693
      %v1696 = vmul.f32 %v1681, %v1693
      %v1697 = vmul.f32 %v1682, %v1693
      %v1698 = vmul.f32 %v1683, %v1693
      %v1699 = vmul.f32 %v1684, %v1693
      %v1700 = vmul.f32 %v1685, %v1693
      %v1701 = vmul.f32 %v1686, %v1693
      %v1702 = vmul.f32 %v1687, %v1693
      %v1703 = vld [vmem:[%s267] sm:$0x1]
      %v1705 = vlaneseq
      %v1706 = vshrl.u32 %v1705, 7
      %v1707 = vsub.s32 0, %v1706
      %v1708 = vrot.slane %v1703, %v1707
      %v1710 = vadd.f32 %v1695, %v1708
      %v1711 = vadd.f32 %v1696, %v1708
      %v1712 = vadd.f32 %v1697, %v1708
      %v1713 = vadd.f32 %v1698, %v1708
      %v1714 = vadd.f32 %v1699, %v1708
      %v1715 = vadd.f32 %v1700, %v1708
      %v1716 = vadd.f32 %v1701, %v1708
      %v1717 = vadd.f32 %v1702, %v1708
      %v1718 = vmax.f32 %v1710, 0.0
      %v1719 = vmax.f32 %v1711, 0.0
      %v1720 = vmax.f32 %v1712, 0.0
      %v1721 = vmax.f32 %v1713, 0.0
      %v1722 = vmax.f32 %v1714, 0.0
      %v1723 = vmax.f32 %v1715, 0.0
      %v1724 = vmax.f32 %v1716, 0.0
      %v1725 = vmax.f32 %v1717, 0.0
      %v1726 = vpack.c.bf16 %v1719, %v1718
      %v1727 = vpack.c.bf16 %v1721, %v1720
      %v1728 = vpack.c.bf16 %v1723, %v1722
      %v1729 = vpack.c.bf16 %v1725, %v1724
      %v1734 = vunpack.c.l.b16 %v1726
      %v1735 = vunpack.c.h.b16 %v1726
      %v1736 = vunpack.c.l.b16 %v1727
      %v1737 = vunpack.c.h.b16 %v1727
      %v1738 = vunpack.c.l.b16 %v1728
      %v1739 = vunpack.c.h.b16 %v1728
      %v1740 = vunpack.c.l.b16 %v1729
      %v1741 = vunpack.c.h.b16 %v1729
      %v1742 = vpack.c.b16 %v1734, %v1734
      %v1743 = vpack.c.b16 %v1735, %v1735
      %v1744 = vpack.c.b16 %v1736, %v1736
      %v1745 = vpack.c.b16 %v1737, %v1737
      %v1746 = vpack.c.b16 %v1738, %v1738
      %v1747 = vpack.c.b16 %v1739, %v1739
      %v1748 = vpack.c.b16 %v1740, %v1740
      %v1749 = vpack.c.b16 %v1741, %v1741
      %vm1758 = vcmask 27648
      %1759 = vst.msk [vmem:[%s279] sm:$0xf] %vm1758, %v1742
      %1760 = vst.msk [vmem:[%s279 + $0x4] sm:$0xf] %vm1758, %v1743
      %1761 = vst.msk [vmem:[%s279 + $0x8] sm:$0xf] %vm1758, %v1744
      %1762 = vst.msk [vmem:[%s279 + $0xc] sm:$0xf] %vm1758, %v1745
      %1763 = vst.msk [vmem:[%s279 + $0x10] sm:$0xf] %vm1758, %v1746
      %1764 = vst.msk [vmem:[%s279 + $0x14] sm:$0xf] %vm1758, %v1747
      %1765 = vst.msk [vmem:[%s279 + $0x18] sm:$0xf] %vm1758, %v1748
      %1766 = vst.msk [vmem:[%s279 + $0x1c] sm:$0xf] %vm1758, %v1749
      %s1767 = smul.u32 8, %s22
      %p1768 = scmp.lt.s32.totalorder %s20, 1
      %s1769 = scalar_select %p1768, %s20, 1
      %p1770 = scmp.lt.s32.totalorder %s1767, 7
      %s1771 = scalar_select %p1770, %s1767, 7
      %p1772 = scmp.lt.s32.totalorder %s21, 0
      %s1773 = scalar_select %p1772, %s21, 0
      %s1774 = sadd.s32 %s1773, %s1771
      %s1775 = smul.addr %s1769, 8
      %s1776 = sadd.s32 %s1774, %s1775
      %s1777 = smul.addr %s1776, 4
      %s1778 = scalar_lea.vmem %s4, %s1777
      // Predicated region
      $region37: #{preact_bottleneck_forward.4} parent=35 // pred_check
        %p1779 = pneg %p160
      $region38: #{preact_bottleneck_forward.4} parent=35 // pred_check_branch
        %1781 = sbr.rel (%p1779) target = $region40
      $region39: #{preact_bottleneck_forward.4} parent=35 // pred_region
        %s1782 = smul.u32 8, %s22
      $region40: #{preact_bottleneck_forward.4} parent=35 // pred_fallthru
        _
    $region36: #{preact_bottleneck_forward.4} parent=5 // pred_fallthru
      _
    %p1783 = scmp.le.s32.totalorder 2, %s10
    // Predicated region
    $region41: #{preact_bottleneck_forward.4} parent=5 // pred_check
      %p1784 = pneg %p1783
    $region42: #{preact_bottleneck_forward.4} parent=5 // pred_check_branch
      %1786 = sbr.rel (%p1784) target = $region44
    $region43: #{preact_bottleneck_forward.4} parent=5 // pred_region
      %s1787 = ssub.s32 %s10, 2
      // Predicated region
      $region45: #{preact_bottleneck_forward.4} parent=43 // pred_check
        %p1788 = pneg %p166
      $region46: #{preact_bottleneck_forward.4} parent=43 // pred_check_branch
        %1790 = sbr.rel (%p1788) target = $region48
      $region47: #{preact_bottleneck_forward.4} parent=43 // pred_region
        %s1791 = smul.u32 8, %s25
        %p1792 = scmp.lt.s32.totalorder %s23, 1
        %s1793 = scalar_select %p1792, %s23, 1
        %p1794 = scmp.lt.s32.totalorder %s1791, 7
        %s1795 = scalar_select %p1794, %s1791, 7
        %p1796 = scmp.lt.s32.totalorder %s24, 0
        %s1797 = scalar_select %p1796, %s24, 0
        %s1798 = sadd.s32 %s1797, %s1795
        %s1799 = smul.addr %s1793, 8
        %s1800 = sadd.s32 %s1798, %s1799
        %s1801 = smul.addr %s1800, 4
        %s1802 = scalar_lea.vmem %s4, %s1801
      $region48: #{preact_bottleneck_forward.4} parent=43 // pred_fallthru
        _
    $region44: #{preact_bottleneck_forward.4} parent=5 // pred_fallthru
      _
  $region6: #{preact_bottleneck_forward.4} parent=0 // loop_footer
    %s14 = sadd.s32 1, %s10
  $region7: #{preact_bottleneck_forward.4} parent=0 // loop_footer_branch
    %9 = sbr.rel target = $region3
  $region8: #{preact_bottleneck_forward.4} parent=0 // loop_exit
    _

</llo_original>
